<compile_context>
chip_gen: v5e
topology: v5e:2x2
jax: 0.10.0
libtpu: 0.0.40
codegen_flags: <defaults>
</compile_context>

<pallas_src>
import numpy as np

import jax
import jax.numpy as jnp
from jax import lax
from jax.experimental import pallas as pl
from jax.experimental.pallas import tpu as pltpu


# ----------------------------- fused Pallas kernel --------------------------

def _mycnn_kernel(win_ref, w1_ref, b1_ref, w2_ref, b2_ref, w3_ref, b3_ref,
                  o_ref, se_ref, so_ref):
    """Whole MyCnn forward for BT images (grid axis = batch blocks).

    win_ref : (14*BT, 192) bf16  layer-1 row-window im2col, row = p*BT + b where
                                 p=0..6 -> pooled row i=2p, p=7..13 -> i=2p-13;
                                 lanes = r*32 + u (r = row-in-window 0..5).
    w1_ref  : (192, 512) bf16    layer-1 banded weights, 4 pooling phases x 128 lanes.
    b1_ref  : (1, 128) f32       layer-1 bias per lane j*8+c (lanes 112..127 zero).
    w2_ref  : (6, 128, 512) bf16 layer-2 banded weights per row-tap s2=di+kh.
    b2_ref  : (1, 128) f32       layer-2 bias per lane j2*16+o.
    w3_ref  : (7, 128, 128) f32  Linear weights per pooled row i2 (cols 10..127 zero).
    b3_ref  : (1, 128) f32
    o_ref   : (BT, 128) f32      logits (first 10 lanes) for this batch block.
    se_ref / so_ref : (9*BT, 128) bf16 scratch: zero-padded even/odd-row slabs of p1.
    """
    f32 = jnp.float32
    bf16 = jnp.bfloat16
    bt = o_ref.shape[0]                                   # images per grid step

    # ---- layer 1: conv(1->8,5x5,pad2) + ReLU + maxpool2, all folded into ONE dot.
    # acc1[:, phase*128 + j*8 + c] holds conv1[2i+di, 2j+dj, c] for phase=2*di+dj.
    acc1 = jnp.dot(win_ref[...], w1_ref[...], preferred_element_type=f32)   # (14*bt,512)
    m1 = jnp.maximum(jnp.maximum(acc1[:, 0:128], acc1[:, 128:256]),
                     jnp.maximum(acc1[:, 256:384], acc1[:, 384:512]))
    p1 = jnp.maximum(m1 + b1_ref[...], 0.0)               # (14*bt,128): pooled 14x14x8

    # ---- zero-padded parity slabs of p1 for layer 2 (p1pad rows 0..17):
    # slab_e group g = p1pad row 2g, slab_o group g = p1pad row 2g+1.
    zrow = jnp.zeros((bt, 128), bf16)
    se_ref[0:bt, :] = zrow
    se_ref[8 * bt:9 * bt, :] = zrow
    se_ref[bt:8 * bt, :] = p1[:7 * bt, :].astype(bf16)    # even pooled rows 0,2,...,12
    so_ref[0:bt, :] = zrow
    so_ref[8 * bt:9 * bt, :] = zrow
    so_ref[bt:8 * bt, :] = p1[7 * bt:, :].astype(bf16)    # odd pooled rows 1,3,...,13

    # ---- layer 2: conv(8->16,5x5,pad2) + ReLU + maxpool2 as 6 banded dots
    # (row tap s2 = di+kh), 4 pooling phases side by side in lanes.
    acc2 = jnp.zeros((7 * bt, 512), f32)
    for s2 in range(6):
        src = se_ref if s2 % 2 == 0 else so_ref
        a2 = s2 // 2
        lhs = src[a2 * bt:(a2 + 7) * bt, :]               # p1pad rows 2*i2 + s2
        acc2 = acc2 + jnp.dot(lhs, w2_ref[s2], preferred_element_type=f32)
    m2 = jnp.maximum(jnp.maximum(acc2[:, 0:128], acc2[:, 128:256]),
                     jnp.maximum(acc2[:, 256:384], acc2[:, 384:512]))
    p2 = jnp.maximum(m2 + b2_ref[...], 0.0)               # (7*bt,128): [i2*bt+b, j2*16+o]

    # ---- output Linear(784 -> 10); torch's CHW flatten order is folded into w3.
    acc3 = jnp.zeros((bt, 128), f32)
    for i2 in range(7):
        acc3 = acc3 + jnp.dot(p2[i2 * bt:(i2 + 1) * bt, :], w3_ref[i2],
                              preferred_element_type=f32)
    o_ref[...] = acc3 + b3_ref[...]


# ------------------------------ wrapper --------------------------------------

def my_cnn_forward(x_nchw, packed_params, *, block_batch=None):
    """x_nchw: (B, 1, 28, 28) f32 -> logits (B, 10)."""
    w1k, b1p, w2k, b2p, w3p, b3p = packed_params
    B = x_nchw.shape[0]
    bt = block_batch or (16 if B >= 32 else 8)            # images per grid step
    assert bt % 8 == 0
    nb = pl.cdiv(B, bt)
    Bp = nb * bt

    x = x_nchw.reshape(B, 28, 28).astype(jnp.float32)
    if Bp != B:
        x = jnp.pad(x, ((0, Bp - B), (0, 0), (0, 0)))
    xpad = jnp.pad(x, ((0, 0), (2, 2), (2, 2)))           # (Bp, 32, 32)

    # Layer-1 row-window im2col: for pooled row i the kernel needs padded rows
    # 2i..2i+5.  Rows are ordered even-i then odd-i so layer 2's parity split is
    # a pair of contiguous slices inside the kernel.
    order = list(range(0, 14, 2)) + list(range(1, 14, 2))
    win = jnp.stack([xpad[:, 2 * i:2 * i + 6, :] for i in order], axis=1)   # (Bp,14,6,32)
    win = win.reshape(Bp, 14, 192)
    win = (win.reshape(nb, bt, 14, 192)
              .transpose(0, 2, 1, 3)
              .reshape(nb * 14 * bt, 192)
              .astype(jnp.bfloat16))

    out = pl.pallas_call(
        _mycnn_kernel,
        out_shape=jax.ShapeDtypeStruct((Bp, 128), jnp.float32),
        grid=(nb,),
        in_specs=[
            pl.BlockSpec((14 * bt, 192), lambda i: (i, 0)),       # im2col input block
            pl.BlockSpec((192, 512), lambda i: (0, 0)),           # w1 (fetched once)
            pl.BlockSpec((1, 128), lambda i: (0, 0)),             # b1
            pl.BlockSpec((6, 128, 512), lambda i: (0, 0, 0)),     # w2 (fetched once)
            pl.BlockSpec((1, 128), lambda i: (0, 0)),             # b2
            pl.BlockSpec((7, 128, 128), lambda i: (0, 0, 0)),     # w3 (fetched once)
            pl.BlockSpec((1, 128), lambda i: (0, 0)),             # b3
        ],
        out_specs=pl.BlockSpec((bt, 128), lambda i: (i, 0)),
        scratch_shapes=[pltpu.VMEM((9 * bt, 128), jnp.bfloat16),
                        pltpu.VMEM((9 * bt, 128), jnp.bfloat16)],
        compiler_params=pltpu.CompilerParams(
            dimension_semantics=("parallel",),        # batch blocks across TCs (v7x)
            vmem_limit_bytes=32 * 1024 * 1024),
    )(win, w1k, b1p, w2k, b2p, w3p, b3p)
    return out[:B, :10]


# --------------------------- parameter packing --------------------------------

def init_torch_params(key):
    """Deterministic synthetic parameters in PyTorch-native layouts."""
    k1, k2, k3, k4, k5, k6 = jax.random.split(key, 6)
    w1 = jax.random.normal(k1, (8, 1, 5, 5), jnp.float32) * 0.1       # Conv2d(1, 8, 5)
    b1 = jax.random.normal(k2, (8,), jnp.float32) * 0.1
    w2 = jax.random.normal(k3, (16, 8, 5, 5), jnp.float32) * 0.05     # Conv2d(8, 16, 5)
    b2 = jax.random.normal(k4, (16,), jnp.float32) * 0.1
    w3 = jax.random.normal(k5, (10, 16 * 7 * 7), jnp.float32) * 0.02  # Linear(784, 10)
    b3 = jax.random.normal(k6, (10,), jnp.float32) * 0.1
    return w1, b1, w2, b2, w3, b3


def pack_params(w1, b1, w2, b2, w3, b3):
    """Fold kh/kw taps, output channels, all four 2x2 pooling phases, layer-2
    spatial padding and torch's CHW flatten order into constant matrices for the
    fused kernel.  Runs once, host side (numpy)."""
    w1 = np.asarray(w1, np.float32); b1 = np.asarray(b1, np.float32)
    w2 = np.asarray(w2, np.float32); b2 = np.asarray(b2, np.float32)
    w3 = np.asarray(w3, np.float32); b3 = np.asarray(b3, np.float32)

    # layer 1: w1k[r*32+u, phase*128 + j*8 + c] = w1[c,0,kh,kw] with r = di+kh,
    # u = 2j+dj+kw, phase = 2*di+dj.  Lanes 112..127 of every phase stay zero.
    w1k = np.zeros((192, 512), np.float32)
    b1p = np.zeros((1, 128), np.float32)
    for j in range(14):
        b1p[0, j * 8:(j + 1) * 8] = b1
    for di in range(2):
        for dj in range(2):
            ph = 2 * di + dj
            for kh in range(5):
                r = di + kh
                for kw in range(5):
                    for j in range(14):
                        u = 2 * j + dj + kw
                        w1k[r * 32 + u,
                            ph * 128 + j * 8: ph * 128 + (j + 1) * 8] = w1[:, 0, kh, kw]

    # layer 2: w2k[s2, j*8+cin, phase*128 + j2*16 + o] = w2[o,cin,kh,kw] with
    # s2 = di+kh, j = 2*j2+dj+kw-2 (bands hitting the zero width-padding dropped).
    w2k = np.zeros((6, 128, 512), np.float32)
    b2p = np.zeros((1, 128), np.float32)
    for j2 in range(7):
        b2p[0, j2 * 16:(j2 + 1) * 16] = b2
    for di in range(2):
        for dj in range(2):
            ph = 2 * di + dj
            for kh in range(5):
                s2 = di + kh
                for kw in range(5):
                    for j2 in range(7):
                        j = 2 * j2 + dj + kw - 2
                        if 0 <= j <= 13:
                            w2k[s2, j * 8:(j + 1) * 8,
                                ph * 128 + j2 * 16: ph * 128 + (j2 + 1) * 16] = \
                                w2[:, :, kh, kw].T

    # Linear: torch flattens NCHW -> feature f = o*49 + i2*7 + j2; the kernel's
    # pooled activation row for i2 has lane j2*16 + o.  Logit lanes padded to 128.
    w3p = np.zeros((7, 128, 128), np.float32)
    b3p = np.zeros((1, 128), np.float32)
    b3p[0, :10] = b3
    for i2 in range(7):
        for j2 in range(7):
            for o in range(16):
                w3p[i2, j2 * 16 + o, :10] = w3[:, o * 49 + i2 * 7 + j2]

    return (jnp.asarray(w1k, dtype=jnp.bfloat16), jnp.asarray(b1p),
            jnp.asarray(w2k, dtype=jnp.bfloat16), jnp.asarray(b2p),
            jnp.asarray(w3p), jnp.asarray(b3p))


# ------------------------------ pure-JAX reference ----------------------------

def reference_forward(x, w1, b1, w2, b2, w3, b3):
    dn1 = lax.conv_dimension_numbers(x.shape, w1.shape, ('NCHW', 'OIHW', 'NCHW'))
    y = lax.conv_general_dilated(x, w1, (1, 1), [(2, 2), (2, 2)],
                                 dimension_numbers=dn1,
                                 precision=lax.Precision.HIGHEST)
    y = jnp.maximum(y + b1[None, :, None, None], 0.0)
    y = lax.reduce_window(y, -jnp.inf, lax.max, (1, 1, 2, 2), (1, 1, 2, 2), 'VALID')
    dn2 = lax.conv_dimension_numbers(y.shape, w2.shape, ('NCHW', 'OIHW', 'NCHW'))
    z = lax.conv_general_dilated(y, w2, (1, 1), [(2, 2), (2, 2)],
                                 dimension_numbers=dn2,
                                 precision=lax.Precision.HIGHEST)
    z = jnp.maximum(z + b2[None, :, None, None], 0.0)
    z = lax.reduce_window(z, -jnp.inf, lax.max, (1, 1, 2, 2), (1, 1, 2, 2), 'VALID')
    feat = z.reshape(z.shape[0], -1)
    return jnp.dot(feat, w3.T, precision=lax.Precision.HIGHEST) + b3


if __name__ == "__main__":
    key = jax.random.PRNGKey(0)
    pkey, xkey = jax.random.split(key)
    raw = init_torch_params(pkey)
    packed = pack_params(*raw)
    # Spatial size 28 is implied by Linear(16*7*7, 10); batch 16 -> 2 batch blocks
    # of 8 images (even grid for the two v7x TensorCores).
    x = jax.random.normal(xkey, (16, 1, 28, 28), jnp.float32)
    out = jax.jit(my_cnn_forward)(x, packed)
    jax.block_until_ready(out)
    assert out.shape == (16, 10) and out.dtype == jnp.float32
    ref = reference_forward(x, *raw)
    err = float(jnp.max(jnp.abs(out - ref)))
    assert err < 3e-2, f"kernel vs reference max abs err {err}"
    print("KERNEL_OK")
</pallas_src>

<mosaic_0001>
module attributes {stable_mosaic.version = 11 : i64} {
  func.func @_mycnn_kernel(%arg0: i32, %arg1: memref<112x192xbf16, #tpu.memory_space<vmem>>, %arg2: memref<192x512xbf16, #tpu.memory_space<vmem>>, %arg3: memref<1x128xf32, #tpu.memory_space<vmem>>, %arg4: memref<6x128x512xbf16, #tpu.memory_space<vmem>>, %arg5: memref<1x128xf32, #tpu.memory_space<vmem>>, %arg6: memref<7x128x128xf32, #tpu.memory_space<vmem>>, %arg7: memref<1x128xf32, #tpu.memory_space<vmem>>, %arg8: memref<8x128xf32, #tpu.memory_space<vmem>>, %arg9: memref<72x128xbf16, #tpu.memory_space<vmem>>, %arg10: memref<72x128xbf16, #tpu.memory_space<vmem>>) attributes {dimension_semantics = [#tpu.dimension_semantics<parallel>], iteration_bounds = array<i64: 2>, scalar_prefetch = 0 : i64, scratch_operands = 2 : i64, tpu.core_type = #tpu.core_type<tc>, window_params = [{transform_indices = @transform_0, window_bounds = array<i64: 112, 192>}, {pipeline_mode = #tpu.pipeline_mode<synchronous>, transform_indices = @transform_1, window_bounds = array<i64: 192, 512>}, {pipeline_mode = #tpu.pipeline_mode<synchronous>, transform_indices = @transform_2, window_bounds = array<i64: 1, 128>}, {pipeline_mode = #tpu.pipeline_mode<synchronous>, transform_indices = @transform_3, window_bounds = array<i64: 6, 128, 512>}, {pipeline_mode = #tpu.pipeline_mode<synchronous>, transform_indices = @transform_4, window_bounds = array<i64: 1, 128>}, {pipeline_mode = #tpu.pipeline_mode<synchronous>, transform_indices = @transform_5, window_bounds = array<i64: 7, 128, 128>}, {pipeline_mode = #tpu.pipeline_mode<synchronous>, transform_indices = @transform_6, window_bounds = array<i64: 1, 128>}, {transform_indices = @transform_7, window_bounds = array<i64: 8, 128>}]} {
    %c0 = arith.constant 0 : index
    %c0_0 = arith.constant 0 : index
    %0 = vector.load %arg1[%c0, %c0_0] : memref<112x192xbf16, #tpu.memory_space<vmem>>, vector<112x192xbf16>
    %c0_1 = arith.constant 0 : index
    %c0_2 = arith.constant 0 : index
    %1 = vector.load %arg2[%c0_1, %c0_2] : memref<192x512xbf16, #tpu.memory_space<vmem>>, vector<192x512xbf16>
    %cst = arith.constant dense<0.000000e+00> : vector<112x512xf32>
    %2 = tpu.matmul %0, %1, %cst {dimension_numbers = #tpu.dot_dimension_numbers<[1], [0], [0], [1], [0, 0, 1, 1], [], []>} : vector<112x192xbf16>, vector<192x512xbf16>, vector<112x512xf32> -> vector<112x512xf32>
    %3 = vector.extract_strided_slice %2 {offsets = [0, 0], sizes = [112, 128], strides = [1, 1]} : vector<112x512xf32> to vector<112x128xf32>
    %4 = vector.extract_strided_slice %2 {offsets = [0, 128], sizes = [112, 128], strides = [1, 1]} : vector<112x512xf32> to vector<112x128xf32>
    %5 = arith.maximumf %3, %4 : vector<112x128xf32>
    %6 = vector.extract_strided_slice %2 {offsets = [0, 256], sizes = [112, 128], strides = [1, 1]} : vector<112x512xf32> to vector<112x128xf32>
    %7 = vector.extract_strided_slice %2 {offsets = [0, 384], sizes = [112, 128], strides = [1, 1]} : vector<112x512xf32> to vector<112x128xf32>
    %8 = arith.maximumf %6, %7 : vector<112x128xf32>
    %9 = arith.maximumf %5, %8 : vector<112x128xf32>
    %c0_3 = arith.constant 0 : index
    %c0_4 = arith.constant 0 : index
    %10 = vector.load %arg3[%c0_3, %c0_4] : memref<1x128xf32, #tpu.memory_space<vmem>>, vector<1x128xf32>
    %11 = vector.broadcast %10 : vector<1x128xf32> to vector<112x128xf32>
    %12 = arith.addf %9, %11 : vector<112x128xf32>
    %cst_5 = arith.constant 0.000000e+00 : f32
    %13 = vector.broadcast %cst_5 : f32 to vector<112x128xf32>
    %14 = arith.maximumf %12, %13 : vector<112x128xf32>
    %cst_6 = arith.constant 0.000000e+00 : bf16
    %15 = vector.broadcast %cst_6 : bf16 to vector<8x128xbf16>
    %c0_7 = arith.constant 0 : index
    %c0_8 = arith.constant 0 : index
    %16 = vector.load %arg9[%c0_7, %c0_8] : memref<72x128xbf16, #tpu.memory_space<vmem>>, vector<8x128xbf16>
    tpu.vector_store %arg9[%c0_7, %c0_8], %15 {strides = array<i32>} : memref<72x128xbf16, #tpu.memory_space<vmem>>, vector<8x128xbf16>,
    %c64 = arith.constant 64 : index
    %c0_9 = arith.constant 0 : index
    %17 = vector.load %arg9[%c64, %c0_9] : memref<72x128xbf16, #tpu.memory_space<vmem>>, vector<8x128xbf16>
    tpu.vector_store %arg9[%c64, %c0_9], %15 {strides = array<i32>} : memref<72x128xbf16, #tpu.memory_space<vmem>>, vector<8x128xbf16>,
    %18 = vector.extract_strided_slice %14 {offsets = [0, 0], sizes = [56, 128], strides = [1, 1]} : vector<112x128xf32> to vector<56x128xf32>
    %19 = arith.truncf %18 : vector<56x128xf32> to vector<56x128xbf16>
    %c8 = arith.constant 8 : index
    %c0_10 = arith.constant 0 : index
    %20 = vector.load %arg9[%c8, %c0_10] : memref<72x128xbf16, #tpu.memory_space<vmem>>, vector<56x128xbf16>
    tpu.vector_store %arg9[%c8, %c0_10], %19 {strides = array<i32>} : memref<72x128xbf16, #tpu.memory_space<vmem>>, vector<56x128xbf16>,
    %c0_11 = arith.constant 0 : index
    %c0_12 = arith.constant 0 : index
    %21 = vector.load %arg10[%c0_11, %c0_12] : memref<72x128xbf16, #tpu.memory_space<vmem>>, vector<8x128xbf16>
    tpu.vector_store %arg10[%c0_11, %c0_12], %15 {strides = array<i32>} : memref<72x128xbf16, #tpu.memory_space<vmem>>, vector<8x128xbf16>,
    %c64_13 = arith.constant 64 : index
    %c0_14 = arith.constant 0 : index
    %22 = vector.load %arg10[%c64_13, %c0_14] : memref<72x128xbf16, #tpu.memory_space<vmem>>, vector<8x128xbf16>
    tpu.vector_store %arg10[%c64_13, %c0_14], %15 {strides = array<i32>} : memref<72x128xbf16, #tpu.memory_space<vmem>>, vector<8x128xbf16>,
    %23 = vector.extract_strided_slice %14 {offsets = [56, 0], sizes = [56, 128], strides = [1, 1]} : vector<112x128xf32> to vector<56x128xf32>
    %24 = arith.truncf %23 : vector<56x128xf32> to vector<56x128xbf16>
    %c8_15 = arith.constant 8 : index
    %c0_16 = arith.constant 0 : index
    %25 = vector.load %arg10[%c8_15, %c0_16] : memref<72x128xbf16, #tpu.memory_space<vmem>>, vector<56x128xbf16>
    tpu.vector_store %arg10[%c8_15, %c0_16], %24 {strides = array<i32>} : memref<72x128xbf16, #tpu.memory_space<vmem>>, vector<56x128xbf16>,
    %cst_17 = arith.constant 0.000000e+00 : f32
    %26 = vector.broadcast %cst_17 : f32 to vector<56x512xf32>
    %c0_18 = arith.constant 0 : index
    %c0_19 = arith.constant 0 : index
    %27 = vector.load %arg9[%c0_18, %c0_19] : memref<72x128xbf16, #tpu.memory_space<vmem>>, vector<56x128xbf16>
    %c0_20 = arith.constant 0 : index
    %c0_21 = arith.constant 0 : index
    %c0_22 = arith.constant 0 : index
    %28 = vector.load %arg4[%c0_20, %c0_21, %c0_22] : memref<6x128x512xbf16, #tpu.memory_space<vmem>>, vector<1x128x512xbf16>
    %29 = vector.shape_cast %28 : vector<1x128x512xbf16> to vector<128x512xbf16>
    %cst_23 = arith.constant dense<0.000000e+00> : vector<56x512xf32>
    %30 = tpu.matmul %27, %29, %cst_23 {dimension_numbers = #tpu.dot_dimension_numbers<[1], [0], [0], [1], [0, 0, 1, 1], [], []>} : vector<56x128xbf16>, vector<128x512xbf16>, vector<56x512xf32> -> vector<56x512xf32>
    %31 = arith.addf %26, %30 : vector<56x512xf32>
    %c0_24 = arith.constant 0 : index
    %c0_25 = arith.constant 0 : index
    %32 = vector.load %arg10[%c0_24, %c0_25] : memref<72x128xbf16, #tpu.memory_space<vmem>>, vector<56x128xbf16>
    %c1 = arith.constant 1 : index
    %c0_26 = arith.constant 0 : index
    %c0_27 = arith.constant 0 : index
    %33 = vector.load %arg4[%c1, %c0_26, %c0_27] : memref<6x128x512xbf16, #tpu.memory_space<vmem>>, vector<1x128x512xbf16>
    %34 = vector.shape_cast %33 : vector<1x128x512xbf16> to vector<128x512xbf16>
    %cst_28 = arith.constant dense<0.000000e+00> : vector<56x512xf32>
    %35 = tpu.matmul %32, %34, %cst_28 {dimension_numbers = #tpu.dot_dimension_numbers<[1], [0], [0], [1], [0, 0, 1, 1], [], []>} : vector<56x128xbf16>, vector<128x512xbf16>, vector<56x512xf32> -> vector<56x512xf32>
    %36 = arith.addf %31, %35 : vector<56x512xf32>
    %c8_29 = arith.constant 8 : index
    %c0_30 = arith.constant 0 : index
    %37 = vector.load %arg9[%c8_29, %c0_30] : memref<72x128xbf16, #tpu.memory_space<vmem>>, vector<56x128xbf16>
    %c2 = arith.constant 2 : index
    %c0_31 = arith.constant 0 : index
    %c0_32 = arith.constant 0 : index
    %38 = vector.load %arg4[%c2, %c0_31, %c0_32] : memref<6x128x512xbf16, #tpu.memory_space<vmem>>, vector<1x128x512xbf16>
    %39 = vector.shape_cast %38 : vector<1x128x512xbf16> to vector<128x512xbf16>
    %cst_33 = arith.constant dense<0.000000e+00> : vector<56x512xf32>
    %40 = tpu.matmul %37, %39, %cst_33 {dimension_numbers = #tpu.dot_dimension_numbers<[1], [0], [0], [1], [0, 0, 1, 1], [], []>} : vector<56x128xbf16>, vector<128x512xbf16>, vector<56x512xf32> -> vector<56x512xf32>
    %41 = arith.addf %36, %40 : vector<56x512xf32>
    %c8_34 = arith.constant 8 : index
    %c0_35 = arith.constant 0 : index
    %42 = vector.load %arg10[%c8_34, %c0_35] : memref<72x128xbf16, #tpu.memory_space<vmem>>, vector<56x128xbf16>
    %c3 = arith.constant 3 : index
    %c0_36 = arith.constant 0 : index
    %c0_37 = arith.constant 0 : index
    %43 = vector.load %arg4[%c3, %c0_36, %c0_37] : memref<6x128x512xbf16, #tpu.memory_space<vmem>>, vector<1x128x512xbf16>
    %44 = vector.shape_cast %43 : vector<1x128x512xbf16> to vector<128x512xbf16>
    %cst_38 = arith.constant dense<0.000000e+00> : vector<56x512xf32>
    %45 = tpu.matmul %42, %44, %cst_38 {dimension_numbers = #tpu.dot_dimension_numbers<[1], [0], [0], [1], [0, 0, 1, 1], [], []>} : vector<56x128xbf16>, vector<128x512xbf16>, vector<56x512xf32> -> vector<56x512xf32>
    %46 = arith.addf %41, %45 : vector<56x512xf32>
    %c16 = arith.constant 16 : index
    %c0_39 = arith.constant 0 : index
    %47 = vector.load %arg9[%c16, %c0_39] : memref<72x128xbf16, #tpu.memory_space<vmem>>, vector<56x128xbf16>
    %c4 = arith.constant 4 : index
    %c0_40 = arith.constant 0 : index
    %c0_41 = arith.constant 0 : index
    %48 = vector.load %arg4[%c4, %c0_40, %c0_41] : memref<6x128x512xbf16, #tpu.memory_space<vmem>>, vector<1x128x512xbf16>
    %49 = vector.shape_cast %48 : vector<1x128x512xbf16> to vector<128x512xbf16>
    %cst_42 = arith.constant dense<0.000000e+00> : vector<56x512xf32>
    %50 = tpu.matmul %47, %49, %cst_42 {dimension_numbers = #tpu.dot_dimension_numbers<[1], [0], [0], [1], [0, 0, 1, 1], [], []>} : vector<56x128xbf16>, vector<128x512xbf16>, vector<56x512xf32> -> vector<56x512xf32>
    %51 = arith.addf %46, %50 : vector<56x512xf32>
    %c16_43 = arith.constant 16 : index
    %c0_44 = arith.constant 0 : index
    %52 = vector.load %arg10[%c16_43, %c0_44] : memref<72x128xbf16, #tpu.memory_space<vmem>>, vector<56x128xbf16>
    %c5 = arith.constant 5 : index
    %c0_45 = arith.constant 0 : index
    %c0_46 = arith.constant 0 : index
    %53 = vector.load %arg4[%c5, %c0_45, %c0_46] : memref<6x128x512xbf16, #tpu.memory_space<vmem>>, vector<1x128x512xbf16>
    %54 = vector.shape_cast %53 : vector<1x128x512xbf16> to vector<128x512xbf16>
    %cst_47 = arith.constant dense<0.000000e+00> : vector<56x512xf32>
    %55 = tpu.matmul %52, %54, %cst_47 {dimension_numbers = #tpu.dot_dimension_numbers<[1], [0], [0], [1], [0, 0, 1, 1], [], []>} : vector<56x128xbf16>, vector<128x512xbf16>, vector<56x512xf32> -> vector<56x512xf32>
    %56 = arith.addf %51, %55 : vector<56x512xf32>
    %57 = vector.extract_strided_slice %56 {offsets = [0, 0], sizes = [56, 128], strides = [1, 1]} : vector<56x512xf32> to vector<56x128xf32>
    %58 = vector.extract_strided_slice %56 {offsets = [0, 128], sizes = [56, 128], strides = [1, 1]} : vector<56x512xf32> to vector<56x128xf32>
    %59 = arith.maximumf %57, %58 : vector<56x128xf32>
    %60 = vector.extract_strided_slice %56 {offsets = [0, 256], sizes = [56, 128], strides = [1, 1]} : vector<56x512xf32> to vector<56x128xf32>
    %61 = vector.extract_strided_slice %56 {offsets = [0, 384], sizes = [56, 128], strides = [1, 1]} : vector<56x512xf32> to vector<56x128xf32>
    %62 = arith.maximumf %60, %61 : vector<56x128xf32>
    %63 = arith.maximumf %59, %62 : vector<56x128xf32>
    %c0_48 = arith.constant 0 : index
    %c0_49 = arith.constant 0 : index
    %64 = vector.load %arg5[%c0_48, %c0_49] : memref<1x128xf32, #tpu.memory_space<vmem>>, vector<1x128xf32>
    %65 = vector.broadcast %64 : vector<1x128xf32> to vector<56x128xf32>
    %66 = arith.addf %63, %65 : vector<56x128xf32>
    %cst_50 = arith.constant 0.000000e+00 : f32
    %67 = vector.broadcast %cst_50 : f32 to vector<56x128xf32>
    %68 = arith.maximumf %66, %67 : vector<56x128xf32>
    %cst_51 = arith.constant 0.000000e+00 : f32
    %69 = vector.broadcast %cst_51 : f32 to vector<8x128xf32>
    %70 = vector.extract_strided_slice %68 {offsets = [0, 0], sizes = [8, 128], strides = [1, 1]} : vector<56x128xf32> to vector<8x128xf32>
    %c0_52 = arith.constant 0 : index
    %c0_53 = arith.constant 0 : index
    %c0_54 = arith.constant 0 : index
    %71 = vector.load %arg6[%c0_52, %c0_53, %c0_54] : memref<7x128x128xf32, #tpu.memory_space<vmem>>, vector<1x128x128xf32>
    %72 = vector.shape_cast %71 : vector<1x128x128xf32> to vector<128x128xf32>
    %cst_55 = arith.constant dense<0.000000e+00> : vector<8x128xf32>
    %73 = tpu.matmul %70, %72, %cst_55 {dimension_numbers = #tpu.dot_dimension_numbers<[1], [0], [0], [1], [0, 0, 1, 1], [], []>} : vector<8x128xf32>, vector<128x128xf32>, vector<8x128xf32> -> vector<8x128xf32>
    %74 = arith.addf %69, %73 : vector<8x128xf32>
    %75 = vector.extract_strided_slice %68 {offsets = [8, 0], sizes = [8, 128], strides = [1, 1]} : vector<56x128xf32> to vector<8x128xf32>
    %c1_56 = arith.constant 1 : index
    %c0_57 = arith.constant 0 : index
    %c0_58 = arith.constant 0 : index
    %76 = vector.load %arg6[%c1_56, %c0_57, %c0_58] : memref<7x128x128xf32, #tpu.memory_space<vmem>>, vector<1x128x128xf32>
    %77 = vector.shape_cast %76 : vector<1x128x128xf32> to vector<128x128xf32>
    %cst_59 = arith.constant dense<0.000000e+00> : vector<8x128xf32>
    %78 = tpu.matmul %75, %77, %cst_59 {dimension_numbers = #tpu.dot_dimension_numbers<[1], [0], [0], [1], [0, 0, 1, 1], [], []>} : vector<8x128xf32>, vector<128x128xf32>, vector<8x128xf32> -> vector<8x128xf32>
    %79 = arith.addf %74, %78 : vector<8x128xf32>
    %80 = vector.extract_strided_slice %68 {offsets = [16, 0], sizes = [8, 128], strides = [1, 1]} : vector<56x128xf32> to vector<8x128xf32>
    %c2_60 = arith.constant 2 : index
    %c0_61 = arith.constant 0 : index
    %c0_62 = arith.constant 0 : index
    %81 = vector.load %arg6[%c2_60, %c0_61, %c0_62] : memref<7x128x128xf32, #tpu.memory_space<vmem>>, vector<1x128x128xf32>
    %82 = vector.shape_cast %81 : vector<1x128x128xf32> to vector<128x128xf32>
    %cst_63 = arith.constant dense<0.000000e+00> : vector<8x128xf32>
    %83 = tpu.matmul %80, %82, %cst_63 {dimension_numbers = #tpu.dot_dimension_numbers<[1], [0], [0], [1], [0, 0, 1, 1], [], []>} : vector<8x128xf32>, vector<128x128xf32>, vector<8x128xf32> -> vector<8x128xf32>
    %84 = arith.addf %79, %83 : vector<8x128xf32>
    %85 = vector.extract_strided_slice %68 {offsets = [24, 0], sizes = [8, 128], strides = [1, 1]} : vector<56x128xf32> to vector<8x128xf32>
    %c3_64 = arith.constant 3 : index
    %c0_65 = arith.constant 0 : index
    %c0_66 = arith.constant 0 : index
    %86 = vector.load %arg6[%c3_64, %c0_65, %c0_66] : memref<7x128x128xf32, #tpu.memory_space<vmem>>, vector<1x128x128xf32>
    %87 = vector.shape_cast %86 : vector<1x128x128xf32> to vector<128x128xf32>
    %cst_67 = arith.constant dense<0.000000e+00> : vector<8x128xf32>
    %88 = tpu.matmul %85, %87, %cst_67 {dimension_numbers = #tpu.dot_dimension_numbers<[1], [0], [0], [1], [0, 0, 1, 1], [], []>} : vector<8x128xf32>, vector<128x128xf32>, vector<8x128xf32> -> vector<8x128xf32>
    %89 = arith.addf %84, %88 : vector<8x128xf32>
    %90 = vector.extract_strided_slice %68 {offsets = [32, 0], sizes = [8, 128], strides = [1, 1]} : vector<56x128xf32> to vector<8x128xf32>
    %c4_68 = arith.constant 4 : index
    %c0_69 = arith.constant 0 : index
    %c0_70 = arith.constant 0 : index
    %91 = vector.load %arg6[%c4_68, %c0_69, %c0_70] : memref<7x128x128xf32, #tpu.memory_space<vmem>>, vector<1x128x128xf32>
    %92 = vector.shape_cast %91 : vector<1x128x128xf32> to vector<128x128xf32>
    %cst_71 = arith.constant dense<0.000000e+00> : vector<8x128xf32>
    %93 = tpu.matmul %90, %92, %cst_71 {dimension_numbers = #tpu.dot_dimension_numbers<[1], [0], [0], [1], [0, 0, 1, 1], [], []>} : vector<8x128xf32>, vector<128x128xf32>, vector<8x128xf32> -> vector<8x128xf32>
    %94 = arith.addf %89, %93 : vector<8x128xf32>
    %95 = vector.extract_strided_slice %68 {offsets = [40, 0], sizes = [8, 128], strides = [1, 1]} : vector<56x128xf32> to vector<8x128xf32>
    %c5_72 = arith.constant 5 : index
    %c0_73 = arith.constant 0 : index
    %c0_74 = arith.constant 0 : index
    %96 = vector.load %arg6[%c5_72, %c0_73, %c0_74] : memref<7x128x128xf32, #tpu.memory_space<vmem>>, vector<1x128x128xf32>
    %97 = vector.shape_cast %96 : vector<1x128x128xf32> to vector<128x128xf32>
    %cst_75 = arith.constant dense<0.000000e+00> : vector<8x128xf32>
    %98 = tpu.matmul %95, %97, %cst_75 {dimension_numbers = #tpu.dot_dimension_numbers<[1], [0], [0], [1], [0, 0, 1, 1], [], []>} : vector<8x128xf32>, vector<128x128xf32>, vector<8x128xf32> -> vector<8x128xf32>
    %99 = arith.addf %94, %98 : vector<8x128xf32>
    %100 = vector.extract_strided_slice %68 {offsets = [48, 0], sizes = [8, 128], strides = [1, 1]} : vector<56x128xf32> to vector<8x128xf32>
    %c6 = arith.constant 6 : index
    %c0_76 = arith.constant 0 : index
    %c0_77 = arith.constant 0 : index
    %101 = vector.load %arg6[%c6, %c0_76, %c0_77] : memref<7x128x128xf32, #tpu.memory_space<vmem>>, vector<1x128x128xf32>
    %102 = vector.shape_cast %101 : vector<1x128x128xf32> to vector<128x128xf32>
    %cst_78 = arith.constant dense<0.000000e+00> : vector<8x128xf32>
    %103 = tpu.matmul %100, %102, %cst_78 {dimension_numbers = #tpu.dot_dimension_numbers<[1], [0], [0], [1], [0, 0, 1, 1], [], []>} : vector<8x128xf32>, vector<128x128xf32>, vector<8x128xf32> -> vector<8x128xf32>
    %104 = arith.addf %99, %103 : vector<8x128xf32>
    %c0_79 = arith.constant 0 : index
    %c0_80 = arith.constant 0 : index
    %105 = vector.load %arg7[%c0_79, %c0_80] : memref<1x128xf32, #tpu.memory_space<vmem>>, vector<1x128xf32>
    %106 = vector.broadcast %105 : vector<1x128xf32> to vector<8x128xf32>
    %107 = arith.addf %104, %106 : vector<8x128xf32>
    %c0_81 = arith.constant 0 : index
    %c0_82 = arith.constant 0 : index
    %108 = vector.load %arg8[%c0_81, %c0_82] : memref<8x128xf32, #tpu.memory_space<vmem>>, vector<8x128xf32>
    tpu.vector_store %arg8[%c0_81, %c0_82], %107 {strides = array<i32>} : memref<8x128xf32, #tpu.memory_space<vmem>>, vector<8x128xf32>,
    return
  }
  func.func @transform_0(%arg0: i32) -> (i32, i32) {
    %c0_i32 = arith.constant 0 : i32
    %c0_i32_0 = arith.constant 0 : i32
    return %arg0, %c0_i32 : i32, i32
  }
  func.func @transform_1(%arg0: i32) -> (i32, i32) {
    %c0_i32 = arith.constant 0 : i32
    %c0_i32_0 = arith.constant 0 : i32
    %c0_i32_1 = arith.constant 0 : i32
    return %c0_i32, %c0_i32_0 : i32, i32
  }
  func.func @transform_2(%arg0: i32) -> (i32, i32) {
    %c0_i32 = arith.constant 0 : i32
    %c0_i32_0 = arith.constant 0 : i32
    %c0_i32_1 = arith.constant 0 : i32
    return %c0_i32, %c0_i32_0 : i32, i32
  }
  func.func @transform_3(%arg0: i32) -> (i32, i32, i32) {
    %c0_i32 = arith.constant 0 : i32
    %c0_i32_0 = arith.constant 0 : i32
    %c0_i32_1 = arith.constant 0 : i32
    %c0_i32_2 = arith.constant 0 : i32
    return %c0_i32, %c0_i32_0, %c0_i32_1 : i32, i32, i32
  }
  func.func @transform_4(%arg0: i32) -> (i32, i32) {
    %c0_i32 = arith.constant 0 : i32
    %c0_i32_0 = arith.constant 0 : i32
    %c0_i32_1 = arith.constant 0 : i32
    return %c0_i32, %c0_i32_0 : i32, i32
  }
  func.func @transform_5(%arg0: i32) -> (i32, i32, i32) {
    %c0_i32 = arith.constant 0 : i32
    %c0_i32_0 = arith.constant 0 : i32
    %c0_i32_1 = arith.constant 0 : i32
    %c0_i32_2 = arith.constant 0 : i32
    return %c0_i32, %c0_i32_0, %c0_i32_1 : i32, i32, i32
  }
  func.func @transform_6(%arg0: i32) -> (i32, i32) {
    %c0_i32 = arith.constant 0 : i32
    %c0_i32_0 = arith.constant 0 : i32
    %c0_i32_1 = arith.constant 0 : i32
    return %c0_i32, %c0_i32_0 : i32, i32
  }
  func.func @transform_7(%arg0: i32) -> (i32, i32) {
    %c0_i32 = arith.constant 0 : i32
    %c0_i32_0 = arith.constant 0 : i32
    return %arg0, %c0_i32 : i32, i32
  }
}

</mosaic_0001>

<llo_original>
// kernel: my_cnn_forward.1
$region0: #{my_cnn_forward.1}
  #allocation0 [shape = 'u32[]', space=smem, size = 0x4, offset = 0x4, fixed_abs, tag = 'smem constant byte address 0x4 - core index']
  #allocation1 [shape = 'u32[72,128]{1,0:T(1,128)}', space=vmem, size = 0x9000, scoped, tag = 'internal scratch']
  #allocation2 [shape = 'bf16[72,128]{1,0:T(8,128)(2,1)}', space=vmem, size = 0x4800, scoped, tag = 'scratch operand']
  #allocation3 [shape = 'bf16[72,128]{1,0:T(8,128)(2,1)}', space=vmem, size = 0x4800, scoped, tag = 'scratch operand']
  %s0 = inlined_call_operand.vmem [shape: bf16[224,192], index: 0, kind: input, shape index: {}]
  %s1 = inlined_call_operand.vmem [shape: bf16[192,512], index: 1, kind: input, shape index: {}]
  %s2 = inlined_call_operand.vmem [shape: f32[1,128], index: 2, kind: input, shape index: {}]
  %s3 = inlined_call_operand.vmem [shape: bf16[6,128,512], index: 3, kind: input, shape index: {}]
  %s4 = inlined_call_operand.vmem [shape: f32[1,128], index: 4, kind: input, shape index: {}]
  %s5 = inlined_call_operand.vmem [shape: f32[7,128,128], index: 5, kind: input, shape index: {}]
  %s6 = inlined_call_operand.vmem [shape: f32[1,128], index: 6, kind: input, shape index: {}]
  %s7 = inlined_call_operand.hbm [shape: f32[16,128], index: 7, kind: output, shape index: {}]
  %s8 = sld [smem:[#allocation0]]
  $region61: #{my_cnn_forward.1} parent=0
    _
  %s10 = ssub.s32 1, %s8
  %s11 = scalar_select 0, %s10, %s8
  $region1: #{my_cnn_forward.1} parent=0
    #allocation4 [shape = 'u8[8192]{0}', space=vmem, size = 0x2000, scoped, tag = 'output window, operand 0']
    #allocation5 [shape = 's32[2]{0}', space=sflag, size = 0x8, scoped, tag = 'scoped memory for my_cnn_forward.1']
    %12 = vsyncpa [#allocation5], 0
    %s13 = scalar_lea.sflag [#allocation5], 1
    %14 = vsyncpa %s13, 0
    loop: start=0, step=1, limit=4
    $region2: #{my_cnn_forward.1} parent=1 // loop_pre_header
      _
    $region3: #{my_cnn_forward.1} parent=1 // loop_header
      %s16 = sphi 0, %s20
      %p17 = scmp.ge.s32.totalorder %s16, 4
      %s26 = sphi 0, %s28
      %s29 = sphi 0, %s26
      %s30 = sphi 0, %s29
      %s46 = sphi 0, %s30
      %s50 = sphi 0, %s50
      %s52 = sphi 0, %s50
      %s53 = sphi 0, %s52
      %s67 = sphi 0, %s53
      %s71 = sphi 0, %s71
      %s73 = sphi 0, %s71
      %s74 = sphi 0, %s73
      %s88 = sphi 0, %s74
      %s92 = sphi 0, %s92
      %s94 = sphi 0, %s92
      %s95 = sphi 0, %s94
      %s109 = sphi 0, %s95
      %s113 = sphi 0, %s113
      %s115 = sphi 0, %s113
      %s116 = sphi 0, %s115
      %s130 = sphi 0, %s116
      %s134 = sphi 0, %s134
      %s136 = sphi 0, %s134
      %s137 = sphi 0, %s136
      %s151 = sphi 0, %s137
      %s155 = sphi 0, %s155
      %s157 = sphi 0, %s155
      %s158 = sphi 0, %s157
      %s172 = sphi 0, %s158
      %s178 = sphi 0, %s180
      %s181 = sphi 0, %s178
      %s182 = sphi 0, %s181
      %s198 = sphi 0, %s182
    $region4: #{my_cnn_forward.1} parent=1 // loop_header_branch
      %19 = sbr.rel (%p17) target = $region8
    $region5: #{my_cnn_forward.1} parent=1 // loop_body
      %s21 = ssub.s32 %s16, 1
      %s22 = ssub.s32 %s16, 2
      %s23 = sadd.s32 %s16, 1
      %s24 = ssub.s32 %s16, %s23
      %p25 = scmp.eq.s32.totalorder %s24, 0
      %s27 = sadd.s32 %s26, 1
      %s28 = scalar_select %p25, %s26, %s27
      %p31 = pneg %p25
      %p32 = scmp.eq.s32.totalorder %s16, 1
      %p33 = por %p31, %p32
      %p34 = scmp.ne.s32.totalorder %s26, %s29
      %p35 = scmp.eq.s32.totalorder %s16, 0
      %p36 = por %p34, %p35
      %p37 = scmp.ne.s32.totalorder %s26, %s29
      %p38 = scmp.eq.s32.totalorder %s21, 1
      %p39 = por %p37, %p38
      %p40 = scmp.ne.s32.totalorder %s29, %s30
      %p41 = scmp.eq.s32.totalorder %s21, 0
      %p42 = por %p40, %p41
      %p43 = scmp.ne.s32.totalorder %s29, %s30
      %p44 = scmp.eq.s32.totalorder %s22, 1
      %p45 = por %p43, %p44
      %p47 = scmp.ne.s32.totalorder %s30, %s46
      %p48 = scmp.eq.s32.totalorder %s22, 0
      %p49 = por %p47, %p48
      %s51 = sadd.s32 %s50, 1
      %p54 = scmp.eq.s32.totalorder %s16, 1
      %p55 = scmp.ne.s32.totalorder %s50, %s52
      %p56 = scmp.eq.s32.totalorder %s16, 0
      %p57 = por %p55, %p56
      %p58 = scmp.ne.s32.totalorder %s50, %s52
      %p59 = scmp.eq.s32.totalorder %s21, 1
      %p60 = por %p58, %p59
      %p61 = scmp.ne.s32.totalorder %s52, %s53
      %p62 = scmp.eq.s32.totalorder %s21, 0
      %p63 = por %p61, %p62
      %p64 = scmp.ne.s32.totalorder %s52, %s53
      %p65 = scmp.eq.s32.totalorder %s22, 1
      %p66 = por %p64, %p65
      %p68 = scmp.ne.s32.totalorder %s53, %s67
      %p69 = scmp.eq.s32.totalorder %s22, 0
      %p70 = por %p68, %p69
      %s72 = sadd.s32 %s71, 1
      %p75 = scmp.eq.s32.totalorder %s16, 1
      %p76 = scmp.ne.s32.totalorder %s71, %s73
      %p77 = scmp.eq.s32.totalorder %s16, 0
      %p78 = por %p76, %p77
      %p79 = scmp.ne.s32.totalorder %s71, %s73
      %p80 = scmp.eq.s32.totalorder %s21, 1
      %p81 = por %p79, %p80
      %p82 = scmp.ne.s32.totalorder %s73, %s74
      %p83 = scmp.eq.s32.totalorder %s21, 0
      %p84 = por %p82, %p83
      %p85 = scmp.ne.s32.totalorder %s73, %s74
      %p86 = scmp.eq.s32.totalorder %s22, 1
      %p87 = por %p85, %p86
      %p89 = scmp.ne.s32.totalorder %s74, %s88
      %p90 = scmp.eq.s32.totalorder %s22, 0
      %p91 = por %p89, %p90
      %s93 = sadd.s32 %s92, 1
      %p96 = scmp.eq.s32.totalorder %s16, 1
      %p97 = scmp.ne.s32.totalorder %s92, %s94
      %p98 = scmp.eq.s32.totalorder %s16, 0
      %p99 = por %p97, %p98
      %p100 = scmp.ne.s32.totalorder %s92, %s94
      %p101 = scmp.eq.s32.totalorder %s21, 1
      %p102 = por %p100, %p101
      %p103 = scmp.ne.s32.totalorder %s94, %s95
      %p104 = scmp.eq.s32.totalorder %s21, 0
      %p105 = por %p103, %p104
      %p106 = scmp.ne.s32.totalorder %s94, %s95
      %p107 = scmp.eq.s32.totalorder %s22, 1
      %p108 = por %p106, %p107
      %p110 = scmp.ne.s32.totalorder %s95, %s109
      %p111 = scmp.eq.s32.totalorder %s22, 0
      %p112 = por %p110, %p111
      %s114 = sadd.s32 %s113, 1
      %p117 = scmp.eq.s32.totalorder %s16, 1
      %p118 = scmp.ne.s32.totalorder %s113, %s115
      %p119 = scmp.eq.s32.totalorder %s16, 0
      %p120 = por %p118, %p119
      %p121 = scmp.ne.s32.totalorder %s113, %s115
      %p122 = scmp.eq.s32.totalorder %s21, 1
      %p123 = por %p121, %p122
      %p124 = scmp.ne.s32.totalorder %s115, %s116
      %p125 = scmp.eq.s32.totalorder %s21, 0
      %p126 = por %p124, %p125
      %p127 = scmp.ne.s32.totalorder %s115, %s116
      %p128 = scmp.eq.s32.totalorder %s22, 1
      %p129 = por %p127, %p128
      %p131 = scmp.ne.s32.totalorder %s116, %s130
      %p132 = scmp.eq.s32.totalorder %s22, 0
      %p133 = por %p131, %p132
      %s135 = sadd.s32 %s134, 1
      %p138 = scmp.eq.s32.totalorder %s16, 1
      %p139 = scmp.ne.s32.totalorder %s134, %s136
      %p140 = scmp.eq.s32.totalorder %s16, 0
      %p141 = por %p139, %p140
      %p142 = scmp.ne.s32.totalorder %s134, %s136
      %p143 = scmp.eq.s32.totalorder %s21, 1
      %p144 = por %p142, %p143
      %p145 = scmp.ne.s32.totalorder %s136, %s137
      %p146 = scmp.eq.s32.totalorder %s21, 0
      %p147 = por %p145, %p146
      %p148 = scmp.ne.s32.totalorder %s136, %s137
      %p149 = scmp.eq.s32.totalorder %s22, 1
      %p150 = por %p148, %p149
      %p152 = scmp.ne.s32.totalorder %s137, %s151
      %p153 = scmp.eq.s32.totalorder %s22, 0
      %p154 = por %p152, %p153
      %s156 = sadd.s32 %s155, 1
      %p159 = scmp.eq.s32.totalorder %s16, 1
      %p160 = scmp.ne.s32.totalorder %s155, %s157
      %p161 = scmp.eq.s32.totalorder %s16, 0
      %p162 = por %p160, %p161
      %p163 = scmp.ne.s32.totalorder %s155, %s157
      %p164 = scmp.eq.s32.totalorder %s21, 1
      %p165 = por %p163, %p164
      %p166 = scmp.ne.s32.totalorder %s157, %s158
      %p167 = scmp.eq.s32.totalorder %s21, 0
      %p168 = por %p166, %p167
      %p169 = scmp.ne.s32.totalorder %s157, %s158
      %p170 = scmp.eq.s32.totalorder %s22, 1
      %p171 = por %p169, %p170
      %p173 = scmp.ne.s32.totalorder %s158, %s172
      %p174 = scmp.eq.s32.totalorder %s22, 0
      %p175 = por %p173, %p174
      %s176 = ssub.s32 %s16, %s23
      %p177 = scmp.eq.s32.totalorder %s176, 0
      %s179 = sadd.s32 %s178, 1
      %s180 = scalar_select %p177, %s178, %s179
      %p183 = pneg %p177
      %p184 = scmp.eq.s32.totalorder %s16, 1
      %p185 = por %p183, %p184
      %p186 = scmp.ne.s32.totalorder %s178, %s181
      %p187 = scmp.eq.s32.totalorder %s16, 0
      %p188 = por %p186, %p187
      %p189 = scmp.ne.s32.totalorder %s178, %s181
      %p190 = scmp.eq.s32.totalorder %s21, 1
      %p191 = por %p189, %p190
      %p192 = scmp.ne.s32.totalorder %s181, %s182
      %p193 = scmp.eq.s32.totalorder %s21, 0
      %p194 = por %p192, %p193
      %p195 = scmp.ne.s32.totalorder %s181, %s182
      %p196 = scmp.eq.s32.totalorder %s22, 1
      %p197 = por %p195, %p196
      %p199 = scmp.ne.s32.totalorder %s182, %s198
      %p200 = scmp.eq.s32.totalorder %s22, 0
      %p201 = por %p199, %p200
      %p202 = scmp.le.s32.totalorder 1, %s16
      %p203 = scmp.lt.s32.totalorder %s16, 3
      %p204 = pnand %p202, %p203
      %p205 = pneg %p204
      // Predicated region
      $region9: #{my_cnn_forward.1} parent=5 // pred_check
        _
      $region10: #{my_cnn_forward.1} parent=5 // pred_check_branch
        %207 = sbr.rel (%p204) target = $region12
      $region11: #{my_cnn_forward.1} parent=5 // pred_region
        %s208 = ssub.s32 %s16, 1
        // Predicated region
        $region13: #{my_cnn_forward.1} parent=11 // pred_check
          %p209 = pneg %p63
        $region14: #{my_cnn_forward.1} parent=11 // pred_check_branch
          %211 = sbr.rel (%p209) target = $region16
        $region15: #{my_cnn_forward.1} parent=11 // pred_region
          _
        $region16: #{my_cnn_forward.1} parent=11 // pred_fallthru
          _
        // Predicated region
        $region17: #{my_cnn_forward.1} parent=11 // pred_check
          %p212 = pneg %p84
        $region18: #{my_cnn_forward.1} parent=11 // pred_check_branch
          %214 = sbr.rel (%p212) target = $region20
        $region19: #{my_cnn_forward.1} parent=11 // pred_region
          _
        $region20: #{my_cnn_forward.1} parent=11 // pred_fallthru
          _
        // Predicated region
        $region21: #{my_cnn_forward.1} parent=11 // pred_check
          %p215 = pneg %p105
        $region22: #{my_cnn_forward.1} parent=11 // pred_check_branch
          %217 = sbr.rel (%p215) target = $region24
        $region23: #{my_cnn_forward.1} parent=11 // pred_region
          _
        $region24: #{my_cnn_forward.1} parent=11 // pred_fallthru
          _
        // Predicated region
        $region25: #{my_cnn_forward.1} parent=11 // pred_check
          %p218 = pneg %p126
        $region26: #{my_cnn_forward.1} parent=11 // pred_check_branch
          %220 = sbr.rel (%p218) target = $region28
        $region27: #{my_cnn_forward.1} parent=11 // pred_region
          _
        $region28: #{my_cnn_forward.1} parent=11 // pred_fallthru
          _
        // Predicated region
        $region29: #{my_cnn_forward.1} parent=11 // pred_check
          %p221 = pneg %p147
        $region30: #{my_cnn_forward.1} parent=11 // pred_check_branch
          %223 = sbr.rel (%p221) target = $region32
        $region31: #{my_cnn_forward.1} parent=11 // pred_region
          _
        $region32: #{my_cnn_forward.1} parent=11 // pred_fallthru
          _
        // Predicated region
        $region33: #{my_cnn_forward.1} parent=11 // pred_check
          %p224 = pneg %p168
        $region34: #{my_cnn_forward.1} parent=11 // pred_check_branch
          %226 = sbr.rel (%p224) target = $region36
        $region35: #{my_cnn_forward.1} parent=11 // pred_region
          _
        $region36: #{my_cnn_forward.1} parent=11 // pred_fallthru
          _
      $region12: #{my_cnn_forward.1} parent=5 // pred_fallthru
        _
      %p227 = scmp.lt.s32.totalorder %s16, 2
      // Predicated region
      $region37: #{my_cnn_forward.1} parent=5 // pred_check
        %p228 = pneg %p227
      $region38: #{my_cnn_forward.1} parent=5 // pred_check_branch
        %230 = sbr.rel (%p228) target = $region40
      $region39: #{my_cnn_forward.1} parent=5 // pred_region
        // Predicated region
        $region41: #{my_cnn_forward.1} parent=39 // pred_check
          %p231 = pneg %p36
        $region42: #{my_cnn_forward.1} parent=39 // pred_check_branch
          %233 = sbr.rel (%p231) target = $region44
        $region43: #{my_cnn_forward.1} parent=39 // pred_region
          %s234 = smul.u32 14, %s16
          %p235 = scmp.lt.s32.totalorder %s234, 27
          %s236 = scalar_select %p235, %s234, 27
          %s237 = smul.addr %s236, 2
          %s238 = smul.addr %s237, 4
          %s239 = scalar_lea.vmem %s0, %s238
          %s240 = smul.u32 14, %s16
        $region44: #{my_cnn_forward.1} parent=39 // pred_fallthru
          _
      $region40: #{my_cnn_forward.1} parent=5 // pred_fallthru
        _
      %p241 = scmp.le.s32.totalorder 1, %s16
      %p242 = scmp.lt.s32.totalorder %s16, 3
      %p243 = pnand %p241, %p242
      %p244 = pneg %p243
      // Predicated region
      $region45: #{my_cnn_forward.1} parent=5 // pred_check
        _
      $region46: #{my_cnn_forward.1} parent=5 // pred_check_branch
        %246 = sbr.rel (%p243) target = $region48
      $region47: #{my_cnn_forward.1} parent=5 // pred_region
        %s247 = ssub.s32 %s16, 1
        %s248 = smul.u32 14, %s21
        %p249 = scmp.lt.s32.totalorder %s248, 27
        %s250 = scalar_select %p249, %s248, 27
        %s251 = smul.addr %s250, 2
        %s252 = smul.addr %s251, 4
        %s253 = scalar_lea.vmem %s0, %s252
        %p254 = pneg %p42
        %p255 = pneg %p39
        %p256 = pneg %p63
        %p257 = pneg %p60
        %p258 = pneg %p84
        %p259 = pneg %p81
        %p260 = pneg %p105
        %p261 = pneg %p102
        %p262 = pneg %p126
        %p263 = pneg %p123
        %p264 = pneg %p147
        %p265 = pneg %p144
        %p266 = pneg %p168
        %p267 = pneg %p165
        %p268 = pneg %p194
        %p269 = pneg %p191
        %s270 = sand.u32 %s181, 1
        %s271 = scalar_lea.sflag [#allocation5], %s270
        %s272 = sand.u32 %s181, 1
        %s273 = smul.addr %s272, 8
        %s274 = scalar_lea.vmem [#allocation4], %s273
        %s275 = smul.u32 14, %s21
        %p276 = scmp.lt.s32.totalorder %s275, 27
        %s277 = scalar_select %p276, %s275, 27
        %s278 = smul.addr %s277, 2
        %s279 = smul.addr %s278, 4
        %s280 = scalar_lea.vmem %s0, %s279
        %s281 = smul.u32 14, %s21
        %v283 = vld [vmem:[%s280] sm:$0xff]
        %v284 = vld [vmem:[%s280 + $0x8] sm:$0xff]
        %v285 = vld [vmem:[%s280 + $0x10] sm:$0xff]
        %v286 = vld [vmem:[%s280 + $0x18] sm:$0xff]
        %v287 = vld [vmem:[%s280 + $0x20] sm:$0xff]
        %v288 = vld [vmem:[%s280 + $0x28] sm:$0xff]
        %v289 = vld [vmem:[%s280 + $0x30] sm:$0xff]
        %v290 = vld [vmem:[%s280 + $0x38] sm:$0xff]
        %v291 = vld [vmem:[%s280 + $0x40] sm:$0xff]
        %v292 = vld [vmem:[%s280 + $0x48] sm:$0xff]
        %v293 = vld [vmem:[%s280 + $0x50] sm:$0xff]
        %v294 = vld [vmem:[%s280 + $0x58] sm:$0xff]
        %v295 = vld [vmem:[%s280 + $0x60] sm:$0xff]
        %v296 = vld [vmem:[%s280 + $0x68] sm:$0xff]
        %v297 = vld [vmem:[%s1] sm:$0xff]
        %v298 = vld [vmem:[%s1 + $0x8] sm:$0xff]
        %v299 = vld [vmem:[%s1 + $0x10] sm:$0xff]
        %v300 = vld [vmem:[%s1 + $0x18] sm:$0xff]
        %v301 = vld [vmem:[%s1 + $0x20] sm:$0xff]
        %v302 = vld [vmem:[%s1 + $0x28] sm:$0xff]
        %v303 = vld [vmem:[%s1 + $0x30] sm:$0xff]
        %v304 = vld [vmem:[%s1 + $0x38] sm:$0xff]
        %v305 = vld [vmem:[%s1 + $0x40] sm:$0xff]
        %v306 = vld [vmem:[%s1 + $0x48] sm:$0xff]
        %v307 = vld [vmem:[%s1 + $0x50] sm:$0xff]
        %v308 = vld [vmem:[%s1 + $0x58] sm:$0xff]
        %v309 = vld [vmem:[%s1 + $0x60] sm:$0xff]
        %v310 = vld [vmem:[%s1 + $0x68] sm:$0xff]
        %v311 = vld [vmem:[%s1 + $0x70] sm:$0xff]
        %v312 = vld [vmem:[%s1 + $0x78] sm:$0xff]
        %v313 = vld [vmem:[%s1 + $0x80] sm:$0xff]
        %v314 = vld [vmem:[%s1 + $0x88] sm:$0xff]
        %v315 = vld [vmem:[%s1 + $0x90] sm:$0xff]
        %v316 = vld [vmem:[%s1 + $0x98] sm:$0xff]
        %v317 = vld [vmem:[%s1 + $0xa0] sm:$0xff]
        %v318 = vld [vmem:[%s1 + $0xa8] sm:$0xff]
        %v319 = vld [vmem:[%s1 + $0xb0] sm:$0xff]
        %v320 = vld [vmem:[%s1 + $0xb8] sm:$0xff]
        %v321 = vld [vmem:[%s1 + $0xc0] sm:$0xff]
        %v322 = vld [vmem:[%s1 + $0xc8] sm:$0xff]
        %v323 = vld [vmem:[%s1 + $0xd0] sm:$0xff]
        %v324 = vld [vmem:[%s1 + $0xd8] sm:$0xff]
        %v325 = vld [vmem:[%s1 + $0xe0] sm:$0xff]
        %v326 = vld [vmem:[%s1 + $0xe8] sm:$0xff]
        %v327 = vld [vmem:[%s1 + $0xf0] sm:$0xff]
        %v328 = vld [vmem:[%s1 + $0xf8] sm:$0xff]
        %v329 = vld [vmem:[%s1 + $0x100] sm:$0xff]
        %v330 = vld [vmem:[%s1 + $0x108] sm:$0xff]
        %v331 = vld [vmem:[%s1 + $0x110] sm:$0xff]
        %v332 = vld [vmem:[%s1 + $0x118] sm:$0xff]
        %v333 = vld [vmem:[%s1 + $0x120] sm:$0xff]
        %v334 = vld [vmem:[%s1 + $0x128] sm:$0xff]
        %v335 = vld [vmem:[%s1 + $0x130] sm:$0xff]
        %v336 = vld [vmem:[%s1 + $0x138] sm:$0xff]
        %v337 = vld [vmem:[%s1 + $0x140] sm:$0xff]
        %v338 = vld [vmem:[%s1 + $0x148] sm:$0xff]
        %v339 = vld [vmem:[%s1 + $0x150] sm:$0xff]
        %v340 = vld [vmem:[%s1 + $0x158] sm:$0xff]
        %v341 = vld [vmem:[%s1 + $0x160] sm:$0xff]
        %v342 = vld [vmem:[%s1 + $0x168] sm:$0xff]
        %v343 = vld [vmem:[%s1 + $0x170] sm:$0xff]
        %v344 = vld [vmem:[%s1 + $0x178] sm:$0xff]
        %v359 = vunpack.c.l.b16 %v283
        %v360 = vunpack.c.h.b16 %v283
        %v361 = vunpack.c.l.b16 %v284
        %v362 = vunpack.c.h.b16 %v284
        %v363 = vunpack.c.l.b16 %v285
        %v364 = vunpack.c.h.b16 %v285
        %v365 = vunpack.c.l.b16 %v286
        %v366 = vunpack.c.h.b16 %v286
        %v367 = vunpack.c.l.b16 %v287
        %v368 = vunpack.c.h.b16 %v287
        %v369 = vunpack.c.l.b16 %v288
        %v370 = vunpack.c.h.b16 %v288
        %v371 = vunpack.c.l.b16 %v289
        %v372 = vunpack.c.h.b16 %v289
        %v373 = vunpack.c.l.b16 %v290
        %v374 = vunpack.c.h.b16 %v290
        %v375 = vunpack.c.l.b16 %v291
        %v376 = vunpack.c.h.b16 %v291
        %v377 = vunpack.c.l.b16 %v292
        %v378 = vunpack.c.h.b16 %v292
        %v379 = vunpack.c.l.b16 %v293
        %v380 = vunpack.c.h.b16 %v293
        %v381 = vunpack.c.l.b16 %v294
        %v382 = vunpack.c.h.b16 %v294
        %v383 = vunpack.c.l.b16 %v295
        %v384 = vunpack.c.h.b16 %v295
        %v385 = vunpack.c.l.b16 %v296
        %v386 = vunpack.c.h.b16 %v296
        %v387 = vpack.c.b16 %v361, %v359
        %v388 = vpack.c.b16 %v362, %v360
        %v389 = vpack.c.b16 %v365, %v363
        %v390 = vpack.c.b16 %v366, %v364
        %v391 = vpack.c.b16 %v369, %v367
        %v392 = vpack.c.b16 %v370, %v368
        %v393 = vpack.c.b16 %v373, %v371
        %v394 = vpack.c.b16 %v374, %v372
        %v395 = vpack.c.b16 %v377, %v375
        %v396 = vpack.c.b16 %v378, %v376
        %v397 = vpack.c.b16 %v381, %v379
        %v398 = vpack.c.b16 %v382, %v380
        %v399 = vpack.c.b16 %v385, %v383
        %v400 = vpack.c.b16 %v386, %v384
        %v456 = vunpack.c.l.b16 %v297
        %v457 = vunpack.c.h.b16 %v297
        %v458 = vunpack.c.l.b16 %v298
        %v459 = vunpack.c.h.b16 %v298
        %v460 = vunpack.c.l.b16 %v299
        %v461 = vunpack.c.h.b16 %v299
        %v462 = vunpack.c.l.b16 %v300
        %v463 = vunpack.c.h.b16 %v300
        %v464 = vunpack.c.l.b16 %v301
        %v465 = vunpack.c.h.b16 %v301
        %v466 = vunpack.c.l.b16 %v302
        %v467 = vunpack.c.h.b16 %v302
        %v468 = vunpack.c.l.b16 %v303
        %v469 = vunpack.c.h.b16 %v303
        %v470 = vunpack.c.l.b16 %v304
        %v471 = vunpack.c.h.b16 %v304
        %v472 = vunpack.c.l.b16 %v305
        %v473 = vunpack.c.h.b16 %v305
        %v474 = vunpack.c.l.b16 %v306
        %v475 = vunpack.c.h.b16 %v306
        %v476 = vunpack.c.l.b16 %v307
        %v477 = vunpack.c.h.b16 %v307
        %v478 = vunpack.c.l.b16 %v308
        %v479 = vunpack.c.h.b16 %v308
        %v480 = vunpack.c.l.b16 %v309
        %v481 = vunpack.c.h.b16 %v309
        %v482 = vunpack.c.l.b16 %v310
        %v483 = vunpack.c.h.b16 %v310
        %v484 = vunpack.c.l.b16 %v311
        %v485 = vunpack.c.h.b16 %v311
        %v486 = vunpack.c.l.b16 %v312
        %v487 = vunpack.c.h.b16 %v312
        %v488 = vunpack.c.l.b16 %v313
        %v489 = vunpack.c.h.b16 %v313
        %v490 = vunpack.c.l.b16 %v314
        %v491 = vunpack.c.h.b16 %v314
        %v492 = vunpack.c.l.b16 %v315
        %v493 = vunpack.c.h.b16 %v315
        %v494 = vunpack.c.l.b16 %v316
        %v495 = vunpack.c.h.b16 %v316
        %v496 = vunpack.c.l.b16 %v317
        %v497 = vunpack.c.h.b16 %v317
        %v498 = vunpack.c.l.b16 %v318
        %v499 = vunpack.c.h.b16 %v318
        %v500 = vunpack.c.l.b16 %v319
        %v501 = vunpack.c.h.b16 %v319
        %v502 = vunpack.c.l.b16 %v320
        %v503 = vunpack.c.h.b16 %v320
        %v504 = vunpack.c.l.b16 %v321
        %v505 = vunpack.c.h.b16 %v321
        %v506 = vunpack.c.l.b16 %v322
        %v507 = vunpack.c.h.b16 %v322
        %v508 = vunpack.c.l.b16 %v323
        %v509 = vunpack.c.h.b16 %v323
        %v510 = vunpack.c.l.b16 %v324
        %v511 = vunpack.c.h.b16 %v324
        %v512 = vunpack.c.l.b16 %v325
        %v513 = vunpack.c.h.b16 %v325
        %v514 = vunpack.c.l.b16 %v326
        %v515 = vunpack.c.h.b16 %v326
        %v516 = vunpack.c.l.b16 %v327
        %v517 = vunpack.c.h.b16 %v327
        %v518 = vunpack.c.l.b16 %v328
        %v519 = vunpack.c.h.b16 %v328
        %v520 = vunpack.c.l.b16 %v329
        %v521 = vunpack.c.h.b16 %v329
        %v522 = vunpack.c.l.b16 %v330
        %v523 = vunpack.c.h.b16 %v330
        %v524 = vunpack.c.l.b16 %v331
        %v525 = vunpack.c.h.b16 %v331
        %v526 = vunpack.c.l.b16 %v332
        %v527 = vunpack.c.h.b16 %v332
        %v528 = vunpack.c.l.b16 %v333
        %v529 = vunpack.c.h.b16 %v333
        %v530 = vunpack.c.l.b16 %v334
        %v531 = vunpack.c.h.b16 %v334
        %v532 = vunpack.c.l.b16 %v335
        %v533 = vunpack.c.h.b16 %v335
        %v534 = vunpack.c.l.b16 %v336
        %v535 = vunpack.c.h.b16 %v336
        %v536 = vunpack.c.l.b16 %v337
        %v537 = vunpack.c.h.b16 %v337
        %v538 = vunpack.c.l.b16 %v338
        %v539 = vunpack.c.h.b16 %v338
        %v540 = vunpack.c.l.b16 %v339
        %v541 = vunpack.c.h.b16 %v339
        %v542 = vunpack.c.l.b16 %v340
        %v543 = vunpack.c.h.b16 %v340
        %v544 = vunpack.c.l.b16 %v341
        %v545 = vunpack.c.h.b16 %v341
        %v546 = vunpack.c.l.b16 %v342
        %v547 = vunpack.c.h.b16 %v342
        %v548 = vunpack.c.l.b16 %v343
        %v549 = vunpack.c.h.b16 %v343
        %v550 = vunpack.c.l.b16 %v344
        %v551 = vunpack.c.h.b16 %v344
        %v552 = vpack.c.b16 %v460, %v456
        %v553 = vpack.c.b16 %v461, %v457
        %v554 = vpack.c.b16 %v462, %v458
        %v555 = vpack.c.b16 %v463, %v459
        %v556 = vpack.c.b16 %v468, %v464
        %v557 = vpack.c.b16 %v469, %v465
        %v558 = vpack.c.b16 %v470, %v466
        %v559 = vpack.c.b16 %v471, %v467
        %v560 = vpack.c.b16 %v476, %v472
        %v561 = vpack.c.b16 %v477, %v473
        %v562 = vpack.c.b16 %v478, %v474
        %v563 = vpack.c.b16 %v479, %v475
        %v564 = vpack.c.b16 %v484, %v480
        %v565 = vpack.c.b16 %v485, %v481
        %v566 = vpack.c.b16 %v486, %v482
        %v567 = vpack.c.b16 %v487, %v483
        %v568 = vpack.c.b16 %v492, %v488
        %v569 = vpack.c.b16 %v493, %v489
        %v570 = vpack.c.b16 %v494, %v490
        %v571 = vpack.c.b16 %v495, %v491
        %v572 = vpack.c.b16 %v500, %v496
        %v573 = vpack.c.b16 %v501, %v497
        %v574 = vpack.c.b16 %v502, %v498
        %v575 = vpack.c.b16 %v503, %v499
        %v576 = vpack.c.b16 %v508, %v504
        %v577 = vpack.c.b16 %v509, %v505
        %v578 = vpack.c.b16 %v510, %v506
        %v579 = vpack.c.b16 %v511, %v507
        %v580 = vpack.c.b16 %v516, %v512
        %v581 = vpack.c.b16 %v517, %v513
        %v582 = vpack.c.b16 %v518, %v514
        %v583 = vpack.c.b16 %v519, %v515
        %v584 = vpack.c.b16 %v524, %v520
        %v585 = vpack.c.b16 %v525, %v521
        %v586 = vpack.c.b16 %v526, %v522
        %v587 = vpack.c.b16 %v527, %v523
        %v588 = vpack.c.b16 %v532, %v528
        %v589 = vpack.c.b16 %v533, %v529
        %v590 = vpack.c.b16 %v534, %v530
        %v591 = vpack.c.b16 %v535, %v531
        %v592 = vpack.c.b16 %v540, %v536
        %v593 = vpack.c.b16 %v541, %v537
        %v594 = vpack.c.b16 %v542, %v538
        %v595 = vpack.c.b16 %v543, %v539
        %v596 = vpack.c.b16 %v548, %v544
        %v597 = vpack.c.b16 %v549, %v545
        %v598 = vpack.c.b16 %v550, %v546
        %v599 = vpack.c.b16 %v551, %v547
        %vm648 = vcmask 523264
        %v650 = vsel %vm648, %v388, 0
        %v653 = vsel %vm648, %v390, 0
        %v656 = vsel %vm648, %v392, 0
        %v659 = vsel %vm648, %v394, 0
        %v662 = vsel %vm648, %v396, 0
        %v665 = vsel %vm648, %v398, 0
        %v668 = vsel %vm648, %v400, 0
        %670 = vmatpush.bf16.msra.mxu0 %v580
        %671 = vmatpush.bf16.msra.mxu0 %v576
        %672 = vmatpush.bf16.msra.mxu0 %v572
        %673 = vmatpush.bf16.msra.mxu0 %v568
        %674 = vmatpush.bf16.msra.mxu0 %v564
        %675 = vmatpush.bf16.msra.mxu0 %v560
        %676 = vmatpush.bf16.msra.mxu0 %v556
        %677 = vmatpush.bf16.msra.mxu0 %v552
        %678 = vmatmul.bf16.gmra.mxu0 %v387
        %v679 = vpop.f32.mrf.mxu0
        %v680 = vadd.f32 0.0, %v679
        %v681 = vpop.f32.mrf.mxu0
        %v682 = vadd.f32 0.0, %v681
        %683 = vmatmul.bf16.gmra.mxu0 %v389
        %v684 = vpop.f32.mrf.mxu0
        %v685 = vadd.f32 0.0, %v684
        %v686 = vpop.f32.mrf.mxu0
        %v687 = vadd.f32 0.0, %v686
        %688 = vmatmul.bf16.gmra.mxu0 %v391
        %v689 = vpop.f32.mrf.mxu0
        %v690 = vadd.f32 0.0, %v689
        %v691 = vpop.f32.mrf.mxu0
        %v692 = vadd.f32 0.0, %v691
        %693 = vmatmul.bf16.gmra.mxu0 %v393
        %v694 = vpop.f32.mrf.mxu0
        %v695 = vadd.f32 0.0, %v694
        %v696 = vpop.f32.mrf.mxu0
        %v697 = vadd.f32 0.0, %v696
        %698 = vmatmul.bf16.gmra.mxu0 %v395
        %v699 = vpop.f32.mrf.mxu0
        %v700 = vadd.f32 0.0, %v699
        %v701 = vpop.f32.mrf.mxu0
        %v702 = vadd.f32 0.0, %v701
        %703 = vmatmul.bf16.gmra.mxu0 %v397
        %v704 = vpop.f32.mrf.mxu0
        %v705 = vadd.f32 0.0, %v704
        %v706 = vpop.f32.mrf.mxu0
        %v707 = vadd.f32 0.0, %v706
        %708 = vmatmul.bf16.gmra.mxu0 %v399
        %v709 = vpop.f32.mrf.mxu0
        %v710 = vadd.f32 0.0, %v709
        %v711 = vpop.f32.mrf.mxu0
        %v712 = vadd.f32 0.0, %v711
        %713 = vdwg.mxu0
        %714 = vmatpush.bf16.msra.mxu0 0
        %715 = vmatpush.bf16.msra.mxu0 0
        %716 = vmatpush.bf16.msra.mxu0 0
        %717 = vmatpush.bf16.msra.mxu0 0
        %718 = vmatpush.bf16.msra.mxu0 %v596
        %719 = vmatpush.bf16.msra.mxu0 %v592
        %720 = vmatpush.bf16.msra.mxu0 %v588
        %721 = vmatpush.bf16.msra.mxu0 %v584
        %722 = vmatmul.bf16.gmra.mxu0 %v650
        %v723 = vpop.f32.mrf.mxu0
        %v724 = vadd.f32 %v680, %v723
        %v725 = vpop.f32.mrf.mxu0
        %v726 = vadd.f32 %v682, %v725
        %727 = vmatmul.bf16.gmra.mxu0 %v653
        %v728 = vpop.f32.mrf.mxu0
        %v729 = vadd.f32 %v685, %v728
        %v730 = vpop.f32.mrf.mxu0
        %v731 = vadd.f32 %v687, %v730
        %732 = vmatmul.bf16.gmra.mxu0 %v656
        %v733 = vpop.f32.mrf.mxu0
        %v734 = vadd.f32 %v690, %v733
        %v735 = vpop.f32.mrf.mxu0
        %v736 = vadd.f32 %v692, %v735
        %737 = vmatmul.bf16.gmra.mxu0 %v659
        %v738 = vpop.f32.mrf.mxu0
        %v739 = vadd.f32 %v695, %v738
        %v740 = vpop.f32.mrf.mxu0
        %v741 = vadd.f32 %v697, %v740
        %742 = vmatmul.bf16.gmra.mxu0 %v662
        %v743 = vpop.f32.mrf.mxu0
        %v744 = vadd.f32 %v700, %v743
        %v745 = vpop.f32.mrf.mxu0
        %v746 = vadd.f32 %v702, %v745
        %747 = vmatmul.bf16.gmra.mxu0 %v665
        %v748 = vpop.f32.mrf.mxu0
        %v749 = vadd.f32 %v705, %v748
        %v750 = vpop.f32.mrf.mxu0
        %v751 = vadd.f32 %v707, %v750
        %752 = vmatmul.bf16.gmra.mxu0 %v668
        %v753 = vpop.f32.mrf.mxu0
        %v754 = vadd.f32 %v710, %v753
        %v755 = vpop.f32.mrf.mxu0
        %v756 = vadd.f32 %v712, %v755
        %757 = vdwg.mxu0
        %758 = vmatpush.bf16.msra.mxu0 %v581
        %759 = vmatpush.bf16.msra.mxu0 %v577
        %760 = vmatpush.bf16.msra.mxu0 %v573
        %761 = vmatpush.bf16.msra.mxu0 %v569
        %762 = vmatpush.bf16.msra.mxu0 %v565
        %763 = vmatpush.bf16.msra.mxu0 %v561
        %764 = vmatpush.bf16.msra.mxu0 %v557
        %765 = vmatpush.bf16.msra.mxu0 %v553
        %766 = vmatmul.bf16.gmra.mxu0 %v387
        %v767 = vpop.f32.mrf.mxu0
        %v768 = vadd.f32 0.0, %v767
        %v769 = vpop.f32.mrf.mxu0
        %v770 = vadd.f32 0.0, %v769
        %771 = vmatmul.bf16.gmra.mxu0 %v389
        %v772 = vpop.f32.mrf.mxu0
        %v773 = vadd.f32 0.0, %v772
        %v774 = vpop.f32.mrf.mxu0
        %v775 = vadd.f32 0.0, %v774
        %776 = vmatmul.bf16.gmra.mxu0 %v391
        %v777 = vpop.f32.mrf.mxu0
        %v778 = vadd.f32 0.0, %v777
        %v779 = vpop.f32.mrf.mxu0
        %v780 = vadd.f32 0.0, %v779
        %781 = vmatmul.bf16.gmra.mxu0 %v393
        %v782 = vpop.f32.mrf.mxu0
        %v783 = vadd.f32 0.0, %v782
        %v784 = vpop.f32.mrf.mxu0
        %v785 = vadd.f32 0.0, %v784
        %786 = vmatmul.bf16.gmra.mxu0 %v395
        %v787 = vpop.f32.mrf.mxu0
        %v788 = vadd.f32 0.0, %v787
        %v789 = vpop.f32.mrf.mxu0
        %v790 = vadd.f32 0.0, %v789
        %791 = vmatmul.bf16.gmra.mxu0 %v397
        %v792 = vpop.f32.mrf.mxu0
        %v793 = vadd.f32 0.0, %v792
        %v794 = vpop.f32.mrf.mxu0
        %v795 = vadd.f32 0.0, %v794
        %796 = vmatmul.bf16.gmra.mxu0 %v399
        %v797 = vpop.f32.mrf.mxu0
        %v798 = vadd.f32 0.0, %v797
        %v799 = vpop.f32.mrf.mxu0
        %v800 = vadd.f32 0.0, %v799
        %801 = vdwg.mxu0
        %802 = vmatpush.bf16.msra.mxu0 0
        %803 = vmatpush.bf16.msra.mxu0 0
        %804 = vmatpush.bf16.msra.mxu0 0
        %805 = vmatpush.bf16.msra.mxu0 0
        %806 = vmatpush.bf16.msra.mxu0 %v597
        %807 = vmatpush.bf16.msra.mxu0 %v593
        %808 = vmatpush.bf16.msra.mxu0 %v589
        %809 = vmatpush.bf16.msra.mxu0 %v585
        %810 = vmatmul.bf16.gmra.mxu0 %v650
        %v811 = vpop.f32.mrf.mxu0
        %v812 = vadd.f32 %v768, %v811
        %v813 = vpop.f32.mrf.mxu0
        %v814 = vadd.f32 %v770, %v813
        %815 = vmatmul.bf16.gmra.mxu0 %v653
        %v816 = vpop.f32.mrf.mxu0
        %v817 = vadd.f32 %v773, %v816
        %v818 = vpop.f32.mrf.mxu0
        %v819 = vadd.f32 %v775, %v818
        %820 = vmatmul.bf16.gmra.mxu0 %v656
        %v821 = vpop.f32.mrf.mxu0
        %v822 = vadd.f32 %v778, %v821
        %v823 = vpop.f32.mrf.mxu0
        %v824 = vadd.f32 %v780, %v823
        %825 = vmatmul.bf16.gmra.mxu0 %v659
        %v826 = vpop.f32.mrf.mxu0
        %v827 = vadd.f32 %v783, %v826
        %v828 = vpop.f32.mrf.mxu0
        %v829 = vadd.f32 %v785, %v828
        %830 = vmatmul.bf16.gmra.mxu0 %v662
        %v831 = vpop.f32.mrf.mxu0
        %v832 = vadd.f32 %v788, %v831
        %v833 = vpop.f32.mrf.mxu0
        %v834 = vadd.f32 %v790, %v833
        %835 = vmatmul.bf16.gmra.mxu0 %v665
        %v836 = vpop.f32.mrf.mxu0
        %v837 = vadd.f32 %v793, %v836
        %v838 = vpop.f32.mrf.mxu0
        %v839 = vadd.f32 %v795, %v838
        %840 = vmatmul.bf16.gmra.mxu0 %v668
        %v841 = vpop.f32.mrf.mxu0
        %v842 = vadd.f32 %v798, %v841
        %v843 = vpop.f32.mrf.mxu0
        %v844 = vadd.f32 %v800, %v843
        %845 = vdwg.mxu0
        %846 = vmatpush.bf16.msra.mxu0 %v582
        %847 = vmatpush.bf16.msra.mxu0 %v578
        %848 = vmatpush.bf16.msra.mxu0 %v574
        %849 = vmatpush.bf16.msra.mxu0 %v570
        %850 = vmatpush.bf16.msra.mxu0 %v566
        %851 = vmatpush.bf16.msra.mxu0 %v562
        %852 = vmatpush.bf16.msra.mxu0 %v558
        %853 = vmatpush.bf16.msra.mxu0 %v554
        %854 = vmatmul.bf16.gmra.mxu0 %v387
        %v855 = vpop.f32.mrf.mxu0
        %v856 = vadd.f32 0.0, %v855
        %v857 = vpop.f32.mrf.mxu0
        %v858 = vadd.f32 0.0, %v857
        %859 = vmatmul.bf16.gmra.mxu0 %v389
        %v860 = vpop.f32.mrf.mxu0
        %v861 = vadd.f32 0.0, %v860
        %v862 = vpop.f32.mrf.mxu0
        %v863 = vadd.f32 0.0, %v862
        %864 = vmatmul.bf16.gmra.mxu0 %v391
        %v865 = vpop.f32.mrf.mxu0
        %v866 = vadd.f32 0.0, %v865
        %v867 = vpop.f32.mrf.mxu0
        %v868 = vadd.f32 0.0, %v867
        %869 = vmatmul.bf16.gmra.mxu0 %v393
        %v870 = vpop.f32.mrf.mxu0
        %v871 = vadd.f32 0.0, %v870
        %v872 = vpop.f32.mrf.mxu0
        %v873 = vadd.f32 0.0, %v872
        %874 = vmatmul.bf16.gmra.mxu0 %v395
        %v875 = vpop.f32.mrf.mxu0
        %v876 = vadd.f32 0.0, %v875
        %v877 = vpop.f32.mrf.mxu0
        %v878 = vadd.f32 0.0, %v877
        %879 = vmatmul.bf16.gmra.mxu0 %v397
        %v880 = vpop.f32.mrf.mxu0
        %v881 = vadd.f32 0.0, %v880
        %v882 = vpop.f32.mrf.mxu0
        %v883 = vadd.f32 0.0, %v882
        %884 = vmatmul.bf16.gmra.mxu0 %v399
        %v885 = vpop.f32.mrf.mxu0
        %v886 = vadd.f32 0.0, %v885
        %v887 = vpop.f32.mrf.mxu0
        %v888 = vadd.f32 0.0, %v887
        %889 = vdwg.mxu0
        %890 = vmatpush.bf16.msra.mxu0 0
        %891 = vmatpush.bf16.msra.mxu0 0
        %892 = vmatpush.bf16.msra.mxu0 0
        %893 = vmatpush.bf16.msra.mxu0 0
        %894 = vmatpush.bf16.msra.mxu0 %v598
        %895 = vmatpush.bf16.msra.mxu0 %v594
        %896 = vmatpush.bf16.msra.mxu0 %v590
        %897 = vmatpush.bf16.msra.mxu0 %v586
        %898 = vmatmul.bf16.gmra.mxu0 %v650
        %v899 = vpop.f32.mrf.mxu0
        %v900 = vadd.f32 %v856, %v899
        %v901 = vpop.f32.mrf.mxu0
        %v902 = vadd.f32 %v858, %v901
        %903 = vmatmul.bf16.gmra.mxu0 %v653
        %v904 = vpop.f32.mrf.mxu0
        %v905 = vadd.f32 %v861, %v904
        %v906 = vpop.f32.mrf.mxu0
        %v907 = vadd.f32 %v863, %v906
        %908 = vmatmul.bf16.gmra.mxu0 %v656
        %v909 = vpop.f32.mrf.mxu0
        %v910 = vadd.f32 %v866, %v909
        %v911 = vpop.f32.mrf.mxu0
        %v912 = vadd.f32 %v868, %v911
        %913 = vmatmul.bf16.gmra.mxu0 %v659
        %v914 = vpop.f32.mrf.mxu0
        %v915 = vadd.f32 %v871, %v914
        %v916 = vpop.f32.mrf.mxu0
        %v917 = vadd.f32 %v873, %v916
        %918 = vmatmul.bf16.gmra.mxu0 %v662
        %v919 = vpop.f32.mrf.mxu0
        %v920 = vadd.f32 %v876, %v919
        %v921 = vpop.f32.mrf.mxu0
        %v922 = vadd.f32 %v878, %v921
        %923 = vmatmul.bf16.gmra.mxu0 %v665
        %v924 = vpop.f32.mrf.mxu0
        %v925 = vadd.f32 %v881, %v924
        %v926 = vpop.f32.mrf.mxu0
        %v927 = vadd.f32 %v883, %v926
        %928 = vmatmul.bf16.gmra.mxu0 %v668
        %v929 = vpop.f32.mrf.mxu0
        %v930 = vadd.f32 %v886, %v929
        %v931 = vpop.f32.mrf.mxu0
        %v932 = vadd.f32 %v888, %v931
        %933 = vdwg.mxu0
        %934 = vmatpush.bf16.msra.mxu0 %v583
        %935 = vmatpush.bf16.msra.mxu0 %v579
        %936 = vmatpush.bf16.msra.mxu0 %v575
        %937 = vmatpush.bf16.msra.mxu0 %v571
        %938 = vmatpush.bf16.msra.mxu0 %v567
        %939 = vmatpush.bf16.msra.mxu0 %v563
        %940 = vmatpush.bf16.msra.mxu0 %v559
        %941 = vmatpush.bf16.msra.mxu0 %v555
        %942 = vmatmul.bf16.gmra.mxu0 %v387
        %v943 = vpop.f32.mrf.mxu0
        %v944 = vadd.f32 0.0, %v943
        %v945 = vpop.f32.mrf.mxu0
        %v946 = vadd.f32 0.0, %v945
        %947 = vmatmul.bf16.gmra.mxu0 %v389
        %v948 = vpop.f32.mrf.mxu0
        %v949 = vadd.f32 0.0, %v948
        %v950 = vpop.f32.mrf.mxu0
        %v951 = vadd.f32 0.0, %v950
        %952 = vmatmul.bf16.gmra.mxu0 %v391
        %v953 = vpop.f32.mrf.mxu0
        %v954 = vadd.f32 0.0, %v953
        %v955 = vpop.f32.mrf.mxu0
        %v956 = vadd.f32 0.0, %v955
        %957 = vmatmul.bf16.gmra.mxu0 %v393
        %v958 = vpop.f32.mrf.mxu0
        %v959 = vadd.f32 0.0, %v958
        %v960 = vpop.f32.mrf.mxu0
        %v961 = vadd.f32 0.0, %v960
        %962 = vmatmul.bf16.gmra.mxu0 %v395
        %v963 = vpop.f32.mrf.mxu0
        %v964 = vadd.f32 0.0, %v963
        %v965 = vpop.f32.mrf.mxu0
        %v966 = vadd.f32 0.0, %v965
        %967 = vmatmul.bf16.gmra.mxu0 %v397
        %v968 = vpop.f32.mrf.mxu0
        %v969 = vadd.f32 0.0, %v968
        %v970 = vpop.f32.mrf.mxu0
        %v971 = vadd.f32 0.0, %v970
        %972 = vmatmul.bf16.gmra.mxu0 %v399
        %v973 = vpop.f32.mrf.mxu0
        %v974 = vadd.f32 0.0, %v973
        %v975 = vpop.f32.mrf.mxu0
        %v976 = vadd.f32 0.0, %v975
        %977 = vdwg.mxu0
        %978 = vmatpush.bf16.msra.mxu0 0
        %979 = vmatpush.bf16.msra.mxu0 0
        %980 = vmatpush.bf16.msra.mxu0 0
        %981 = vmatpush.bf16.msra.mxu0 0
        %982 = vmatpush.bf16.msra.mxu0 %v599
        %983 = vmatpush.bf16.msra.mxu0 %v595
        %984 = vmatpush.bf16.msra.mxu0 %v591
        %985 = vmatpush.bf16.msra.mxu0 %v587
        %986 = vmatmul.bf16.gmra.mxu0 %v650
        %v987 = vpop.f32.mrf.mxu0
        %v988 = vadd.f32 %v944, %v987
        %v989 = vpop.f32.mrf.mxu0
        %v990 = vadd.f32 %v946, %v989
        %991 = vmatmul.bf16.gmra.mxu0 %v653
        %v992 = vpop.f32.mrf.mxu0
        %v993 = vadd.f32 %v949, %v992
        %v994 = vpop.f32.mrf.mxu0
        %v995 = vadd.f32 %v951, %v994
        %996 = vmatmul.bf16.gmra.mxu0 %v656
        %v997 = vpop.f32.mrf.mxu0
        %v998 = vadd.f32 %v954, %v997
        %v999 = vpop.f32.mrf.mxu0
        %v1000 = vadd.f32 %v956, %v999
        %1001 = vmatmul.bf16.gmra.mxu0 %v659
        %v1002 = vpop.f32.mrf.mxu0
        %v1003 = vadd.f32 %v959, %v1002
        %v1004 = vpop.f32.mrf.mxu0
        %v1005 = vadd.f32 %v961, %v1004
        %1006 = vmatmul.bf16.gmra.mxu0 %v662
        %v1007 = vpop.f32.mrf.mxu0
        %v1008 = vadd.f32 %v964, %v1007
        %v1009 = vpop.f32.mrf.mxu0
        %v1010 = vadd.f32 %v966, %v1009
        %1011 = vmatmul.bf16.gmra.mxu0 %v665
        %v1012 = vpop.f32.mrf.mxu0
        %v1013 = vadd.f32 %v969, %v1012
        %v1014 = vpop.f32.mrf.mxu0
        %v1015 = vadd.f32 %v971, %v1014
        %1016 = vmatmul.bf16.gmra.mxu0 %v668
        %v1017 = vpop.f32.mrf.mxu0
        %v1018 = vadd.f32 %v974, %v1017
        %v1019 = vpop.f32.mrf.mxu0
        %v1020 = vadd.f32 %v976, %v1019
        %1021 = vdwg.mxu0
        %v1022 = vmax.f32 %v724, %v812
        %v1023 = vmax.f32 %v726, %v814
        %v1024 = vmax.f32 %v729, %v817
        %v1025 = vmax.f32 %v731, %v819
        %v1026 = vmax.f32 %v734, %v822
        %v1027 = vmax.f32 %v736, %v824
        %v1028 = vmax.f32 %v739, %v827
        %v1029 = vmax.f32 %v741, %v829
        %v1030 = vmax.f32 %v744, %v832
        %v1031 = vmax.f32 %v746, %v834
        %v1032 = vmax.f32 %v749, %v837
        %v1033 = vmax.f32 %v751, %v839
        %v1034 = vmax.f32 %v754, %v842
        %v1035 = vmax.f32 %v756, %v844
        %v1036 = vmax.f32 %v900, %v988
        %v1037 = vmax.f32 %v902, %v990
        %v1038 = vmax.f32 %v905, %v993
        %v1039 = vmax.f32 %v907, %v995
        %v1040 = vmax.f32 %v910, %v998
        %v1041 = vmax.f32 %v912, %v1000
        %v1042 = vmax.f32 %v915, %v1003
        %v1043 = vmax.f32 %v917, %v1005
        %v1044 = vmax.f32 %v920, %v1008
        %v1045 = vmax.f32 %v922, %v1010
        %v1046 = vmax.f32 %v925, %v1013
        %v1047 = vmax.f32 %v927, %v1015
        %v1048 = vmax.f32 %v930, %v1018
        %v1049 = vmax.f32 %v932, %v1020
        %v1050 = vmax.f32 %v1022, %v1036
        %v1051 = vmax.f32 %v1023, %v1037
        %v1052 = vmax.f32 %v1024, %v1038
        %v1053 = vmax.f32 %v1025, %v1039
        %v1054 = vmax.f32 %v1026, %v1040
        %v1055 = vmax.f32 %v1027, %v1041
        %v1056 = vmax.f32 %v1028, %v1042
        %v1057 = vmax.f32 %v1029, %v1043
        %v1058 = vmax.f32 %v1030, %v1044
        %v1059 = vmax.f32 %v1031, %v1045
        %v1060 = vmax.f32 %v1032, %v1046
        %v1061 = vmax.f32 %v1033, %v1047
        %v1062 = vmax.f32 %v1034, %v1048
        %v1063 = vmax.f32 %v1035, %v1049
        %v1064 = vld [vmem:[%s2] sm:$0x1]
        %v1066 = vperm.slane %v1064, 0
        %v1068 = vadd.f32 %v1050, %v1066
        %v1069 = vadd.f32 %v1051, %v1066
        %v1070 = vadd.f32 %v1052, %v1066
        %v1071 = vadd.f32 %v1053, %v1066
        %v1072 = vadd.f32 %v1054, %v1066
        %v1073 = vadd.f32 %v1055, %v1066
        %v1074 = vadd.f32 %v1056, %v1066
        %v1075 = vadd.f32 %v1057, %v1066
        %v1076 = vadd.f32 %v1058, %v1066
        %v1077 = vadd.f32 %v1059, %v1066
        %v1078 = vadd.f32 %v1060, %v1066
        %v1079 = vadd.f32 %v1061, %v1066
        %v1080 = vadd.f32 %v1062, %v1066
        %v1081 = vadd.f32 %v1063, %v1066
        %v1082 = vmax.f32 %v1068, 0.0
        %v1083 = vmax.f32 %v1069, 0.0
        %v1084 = vmax.f32 %v1070, 0.0
        %v1085 = vmax.f32 %v1071, 0.0
        %v1086 = vmax.f32 %v1072, 0.0
        %v1087 = vmax.f32 %v1073, 0.0
        %v1088 = vmax.f32 %v1074, 0.0
        %v1089 = vmax.f32 %v1075, 0.0
        %v1090 = vmax.f32 %v1076, 0.0
        %v1091 = vmax.f32 %v1077, 0.0
        %v1092 = vmax.f32 %v1078, 0.0
        %v1093 = vmax.f32 %v1079, 0.0
        %v1094 = vmax.f32 %v1080, 0.0
        %v1095 = vmax.f32 %v1081, 0.0
        %1096 = vst [vmem:[#allocation2] sm:$0xf] 0
        %1097 = vst [vmem:[#allocation2 + $0x20] sm:$0xf] 0
        %v1098 = vpack.c.bf16 %v1082, %v1082
        %v1099 = vpack.c.bf16 %v1083, %v1083
        %v1100 = vpack.c.bf16 %v1084, %v1084
        %v1101 = vpack.c.bf16 %v1085, %v1085
        %v1102 = vpack.c.bf16 %v1086, %v1086
        %v1103 = vpack.c.bf16 %v1087, %v1087
        %v1104 = vpack.c.bf16 %v1088, %v1088
        %1105 = vst [vmem:[#allocation2 + $0x4] sm:$0xf] %v1098
        %1106 = vst [vmem:[#allocation2 + $0x8] sm:$0xf] %v1099
        %1107 = vst [vmem:[#allocation2 + $0xc] sm:$0xf] %v1100
        %1108 = vst [vmem:[#allocation2 + $0x10] sm:$0xf] %v1101
        %1109 = vst [vmem:[#allocation2 + $0x14] sm:$0xf] %v1102
        %1110 = vst [vmem:[#allocation2 + $0x18] sm:$0xf] %v1103
        %1111 = vst [vmem:[#allocation2 + $0x1c] sm:$0xf] %v1104
        %1112 = vst [vmem:[#allocation3] sm:$0xf] 0
        %1113 = vst [vmem:[#allocation3 + $0x20] sm:$0xf] 0
        %v1114 = vpack.c.bf16 %v1089, %v1089
        %v1115 = vpack.c.bf16 %v1090, %v1090
        %v1116 = vpack.c.bf16 %v1091, %v1091
        %v1117 = vpack.c.bf16 %v1092, %v1092
        %v1118 = vpack.c.bf16 %v1093, %v1093
        %v1119 = vpack.c.bf16 %v1094, %v1094
        %v1120 = vpack.c.bf16 %v1095, %v1095
        %1121 = vst [vmem:[#allocation3 + $0x4] sm:$0xf] %v1114
        %1122 = vst [vmem:[#allocation3 + $0x8] sm:$0xf] %v1115
        %1123 = vst [vmem:[#allocation3 + $0xc] sm:$0xf] %v1116
        %1124 = vst [vmem:[#allocation3 + $0x10] sm:$0xf] %v1117
        %1125 = vst [vmem:[#allocation3 + $0x14] sm:$0xf] %v1118
        %1126 = vst [vmem:[#allocation3 + $0x18] sm:$0xf] %v1119
        %1127 = vst [vmem:[#allocation3 + $0x1c] sm:$0xf] %v1120
        %v1128 = vld [vmem:[#allocation2] sm:$0xf]
        %v1129 = vld [vmem:[#allocation2 + $0x4] sm:$0xf]
        %v1130 = vld [vmem:[#allocation2 + $0x8] sm:$0xf]
        %v1131 = vld [vmem:[#allocation2 + $0xc] sm:$0xf]
        %v1132 = vld [vmem:[#allocation2 + $0x10] sm:$0xf]
        %v1133 = vld [vmem:[#allocation2 + $0x14] sm:$0xf]
        %v1134 = vld [vmem:[#allocation2 + $0x18] sm:$0xf]
        %v1135 = vld [vmem:[%s3] sm:$0xff]
        %v1136 = vld [vmem:[%s3 + $0x8] sm:$0xff]
        %v1137 = vld [vmem:[%s3 + $0x10] sm:$0xff]
        %v1138 = vld [vmem:[%s3 + $0x18] sm:$0xff]
        %v1139 = vld [vmem:[%s3 + $0x20] sm:$0xff]
        %v1140 = vld [vmem:[%s3 + $0x28] sm:$0xff]
        %v1141 = vld [vmem:[%s3 + $0x30] sm:$0xff]
        %v1142 = vld [vmem:[%s3 + $0x38] sm:$0xff]
        %v1143 = vld [vmem:[%s3 + $0x40] sm:$0xff]
        %v1144 = vld [vmem:[%s3 + $0x48] sm:$0xff]
        %v1145 = vld [vmem:[%s3 + $0x50] sm:$0xff]
        %v1146 = vld [vmem:[%s3 + $0x58] sm:$0xff]
        %v1147 = vld [vmem:[%s3 + $0x60] sm:$0xff]
        %v1148 = vld [vmem:[%s3 + $0x68] sm:$0xff]
        %v1149 = vld [vmem:[%s3 + $0x70] sm:$0xff]
        %v1150 = vld [vmem:[%s3 + $0x78] sm:$0xff]
        %v1151 = vld [vmem:[%s3 + $0x80] sm:$0xff]
        %v1152 = vld [vmem:[%s3 + $0x88] sm:$0xff]
        %v1153 = vld [vmem:[%s3 + $0x90] sm:$0xff]
        %v1154 = vld [vmem:[%s3 + $0x98] sm:$0xff]
        %v1155 = vld [vmem:[%s3 + $0xa0] sm:$0xff]
        %v1156 = vld [vmem:[%s3 + $0xa8] sm:$0xff]
        %v1157 = vld [vmem:[%s3 + $0xb0] sm:$0xff]
        %v1158 = vld [vmem:[%s3 + $0xb8] sm:$0xff]
        %v1159 = vld [vmem:[%s3 + $0xc0] sm:$0xff]
        %v1160 = vld [vmem:[%s3 + $0xc8] sm:$0xff]
        %v1161 = vld [vmem:[%s3 + $0xd0] sm:$0xff]
        %v1162 = vld [vmem:[%s3 + $0xd8] sm:$0xff]
        %v1163 = vld [vmem:[%s3 + $0xe0] sm:$0xff]
        %v1164 = vld [vmem:[%s3 + $0xe8] sm:$0xff]
        %v1165 = vld [vmem:[%s3 + $0xf0] sm:$0xff]
        %v1166 = vld [vmem:[%s3 + $0xf8] sm:$0xff]
        %v1167 = vld [vmem:[#allocation3] sm:$0xf]
        %v1168 = vld [vmem:[#allocation3 + $0x4] sm:$0xf]
        %v1169 = vld [vmem:[#allocation3 + $0x8] sm:$0xf]
        %v1170 = vld [vmem:[#allocation3 + $0xc] sm:$0xf]
        %v1171 = vld [vmem:[#allocation3 + $0x10] sm:$0xf]
        %v1172 = vld [vmem:[#allocation3 + $0x14] sm:$0xf]
        %v1173 = vld [vmem:[#allocation3 + $0x18] sm:$0xf]
        %s1174 = scalar_lea.vmem %s3, 256
        %v1175 = vld [vmem:[%s1174] sm:$0xff]
        %v1176 = vld [vmem:[%s1174 + $0x8] sm:$0xff]
        %v1177 = vld [vmem:[%s1174 + $0x10] sm:$0xff]
        %v1178 = vld [vmem:[%s1174 + $0x18] sm:$0xff]
        %v1179 = vld [vmem:[%s1174 + $0x20] sm:$0xff]
        %v1180 = vld [vmem:[%s1174 + $0x28] sm:$0xff]
        %v1181 = vld [vmem:[%s1174 + $0x30] sm:$0xff]
        %v1182 = vld [vmem:[%s1174 + $0x38] sm:$0xff]
        %v1183 = vld [vmem:[%s1174 + $0x40] sm:$0xff]
        %v1184 = vld [vmem:[%s1174 + $0x48] sm:$0xff]
        %v1185 = vld [vmem:[%s1174 + $0x50] sm:$0xff]
        %v1186 = vld [vmem:[%s1174 + $0x58] sm:$0xff]
        %v1187 = vld [vmem:[%s1174 + $0x60] sm:$0xff]
        %v1188 = vld [vmem:[%s1174 + $0x68] sm:$0xff]
        %v1189 = vld [vmem:[%s1174 + $0x70] sm:$0xff]
        %v1190 = vld [vmem:[%s1174 + $0x78] sm:$0xff]
        %v1191 = vld [vmem:[%s1174 + $0x80] sm:$0xff]
        %v1192 = vld [vmem:[%s1174 + $0x88] sm:$0xff]
        %v1193 = vld [vmem:[%s1174 + $0x90] sm:$0xff]
        %v1194 = vld [vmem:[%s1174 + $0x98] sm:$0xff]
        %v1195 = vld [vmem:[%s1174 + $0xa0] sm:$0xff]
        %v1196 = vld [vmem:[%s1174 + $0xa8] sm:$0xff]
        %v1197 = vld [vmem:[%s1174 + $0xb0] sm:$0xff]
        %v1198 = vld [vmem:[%s1174 + $0xb8] sm:$0xff]
        %v1199 = vld [vmem:[%s1174 + $0xc0] sm:$0xff]
        %v1200 = vld [vmem:[%s1174 + $0xc8] sm:$0xff]
        %v1201 = vld [vmem:[%s1174 + $0xd0] sm:$0xff]
        %v1202 = vld [vmem:[%s1174 + $0xd8] sm:$0xff]
        %v1203 = vld [vmem:[%s1174 + $0xe0] sm:$0xff]
        %v1204 = vld [vmem:[%s1174 + $0xe8] sm:$0xff]
        %v1205 = vld [vmem:[%s1174 + $0xf0] sm:$0xff]
        %v1206 = vld [vmem:[%s1174 + $0xf8] sm:$0xff]
        %v1214 = vunpack.c.l.b16 %v1167
        %v1215 = vunpack.c.l.b16 %v1168
        %v1216 = vunpack.c.l.b16 %v1169
        %v1217 = vunpack.c.l.b16 %v1170
        %v1218 = vunpack.c.l.b16 %v1171
        %v1219 = vunpack.c.l.b16 %v1172
        %v1220 = vunpack.c.l.b16 %v1173
        %v1221 = vpack.c.b16 %v1215, %v1214
        %v1222 = vpack.c.b16 %v1217, %v1216
        %v1223 = vpack.c.b16 %v1219, %v1218
        %v1224 = vpack.c.b16 %v1220, %v1220
        %v1261 = vunpack.c.l.b16 %v1175
        %v1262 = vunpack.c.h.b16 %v1175
        %v1263 = vunpack.c.l.b16 %v1176
        %v1264 = vunpack.c.h.b16 %v1176
        %v1265 = vunpack.c.l.b16 %v1177
        %v1266 = vunpack.c.h.b16 %v1177
        %v1267 = vunpack.c.l.b16 %v1178
        %v1268 = vunpack.c.h.b16 %v1178
        %v1269 = vunpack.c.l.b16 %v1179
        %v1270 = vunpack.c.h.b16 %v1179
        %v1271 = vunpack.c.l.b16 %v1180
        %v1272 = vunpack.c.h.b16 %v1180
        %v1273 = vunpack.c.l.b16 %v1181
        %v1274 = vunpack.c.h.b16 %v1181
        %v1275 = vunpack.c.l.b16 %v1182
        %v1276 = vunpack.c.h.b16 %v1182
        %v1277 = vunpack.c.l.b16 %v1183
        %v1278 = vunpack.c.h.b16 %v1183
        %v1279 = vunpack.c.l.b16 %v1184
        %v1280 = vunpack.c.h.b16 %v1184
        %v1281 = vunpack.c.l.b16 %v1185
        %v1282 = vunpack.c.h.b16 %v1185
        %v1283 = vunpack.c.l.b16 %v1186
        %v1284 = vunpack.c.h.b16 %v1186
        %v1285 = vunpack.c.l.b16 %v1187
        %v1286 = vunpack.c.h.b16 %v1187
        %v1287 = vunpack.c.l.b16 %v1188
        %v1288 = vunpack.c.h.b16 %v1188
        %v1289 = vunpack.c.l.b16 %v1189
        %v1290 = vunpack.c.h.b16 %v1189
        %v1291 = vunpack.c.l.b16 %v1190
        %v1292 = vunpack.c.h.b16 %v1190
        %v1293 = vunpack.c.l.b16 %v1191
        %v1294 = vunpack.c.h.b16 %v1191
        %v1295 = vunpack.c.l.b16 %v1192
        %v1296 = vunpack.c.h.b16 %v1192
        %v1297 = vunpack.c.l.b16 %v1193
        %v1298 = vunpack.c.h.b16 %v1193
        %v1299 = vunpack.c.l.b16 %v1194
        %v1300 = vunpack.c.h.b16 %v1194
        %v1301 = vunpack.c.l.b16 %v1195
        %v1302 = vunpack.c.h.b16 %v1195
        %v1303 = vunpack.c.l.b16 %v1196
        %v1304 = vunpack.c.h.b16 %v1196
        %v1305 = vunpack.c.l.b16 %v1197
        %v1306 = vunpack.c.h.b16 %v1197
        %v1307 = vunpack.c.l.b16 %v1198
        %v1308 = vunpack.c.h.b16 %v1198
        %v1309 = vunpack.c.l.b16 %v1199
        %v1310 = vunpack.c.h.b16 %v1199
        %v1311 = vunpack.c.l.b16 %v1200
        %v1312 = vunpack.c.h.b16 %v1200
        %v1313 = vunpack.c.l.b16 %v1201
        %v1314 = vunpack.c.h.b16 %v1201
        %v1315 = vunpack.c.l.b16 %v1202
        %v1316 = vunpack.c.h.b16 %v1202
        %v1317 = vunpack.c.l.b16 %v1203
        %v1318 = vunpack.c.h.b16 %v1203
        %v1319 = vunpack.c.l.b16 %v1204
        %v1320 = vunpack.c.h.b16 %v1204
        %v1321 = vunpack.c.l.b16 %v1205
        %v1322 = vunpack.c.h.b16 %v1205
        %v1323 = vunpack.c.l.b16 %v1206
        %v1324 = vunpack.c.h.b16 %v1206
        %v1325 = vpack.c.b16 %v1265, %v1261
        %v1326 = vpack.c.b16 %v1266, %v1262
        %v1327 = vpack.c.b16 %v1267, %v1263
        %v1328 = vpack.c.b16 %v1268, %v1264
        %v1329 = vpack.c.b16 %v1273, %v1269
        %v1330 = vpack.c.b16 %v1274, %v1270
        %v1331 = vpack.c.b16 %v1275, %v1271
        %v1332 = vpack.c.b16 %v1276, %v1272
        %v1333 = vpack.c.b16 %v1281, %v1277
        %v1334 = vpack.c.b16 %v1282, %v1278
        %v1335 = vpack.c.b16 %v1283, %v1279
        %v1336 = vpack.c.b16 %v1284, %v1280
        %v1337 = vpack.c.b16 %v1289, %v1285
        %v1338 = vpack.c.b16 %v1290, %v1286
        %v1339 = vpack.c.b16 %v1291, %v1287
        %v1340 = vpack.c.b16 %v1292, %v1288
        %v1341 = vpack.c.b16 %v1297, %v1293
        %v1342 = vpack.c.b16 %v1298, %v1294
        %v1343 = vpack.c.b16 %v1299, %v1295
        %v1344 = vpack.c.b16 %v1300, %v1296
        %v1345 = vpack.c.b16 %v1305, %v1301
        %v1346 = vpack.c.b16 %v1306, %v1302
        %v1347 = vpack.c.b16 %v1307, %v1303
        %v1348 = vpack.c.b16 %v1308, %v1304
        %v1349 = vpack.c.b16 %v1313, %v1309
        %v1350 = vpack.c.b16 %v1314, %v1310
        %v1351 = vpack.c.b16 %v1315, %v1311
        %v1352 = vpack.c.b16 %v1316, %v1312
        %v1353 = vpack.c.b16 %v1321, %v1317
        %v1354 = vpack.c.b16 %v1322, %v1318
        %v1355 = vpack.c.b16 %v1323, %v1319
        %v1356 = vpack.c.b16 %v1324, %v1320
        %1389 = vmatpush.bf16.msra.mxu0 %v1353
        %1390 = vmatpush.bf16.msra.mxu0 %v1349
        %1391 = vmatpush.bf16.msra.mxu0 %v1345
        %1392 = vmatpush.bf16.msra.mxu0 %v1341
        %1393 = vmatpush.bf16.msra.mxu0 %v1337
        %1394 = vmatpush.bf16.msra.mxu0 %v1333
        %1395 = vmatpush.bf16.msra.mxu0 %v1329
        %1396 = vmatpush.bf16.msra.mxu0 %v1325
        %1397 = vmatmul.bf16.gmra.mxu0 %v1221
        %v1398 = vpop.f32.mrf.mxu0
        %v1399 = vadd.f32 0.0, %v1398
        %v1400 = vpop.f32.mrf.mxu0
        %v1401 = vadd.f32 0.0, %v1400
        %1402 = vmatmul.bf16.gmra.mxu0 %v1222
        %v1403 = vpop.f32.mrf.mxu0
        %v1404 = vadd.f32 0.0, %v1403
        %v1405 = vpop.f32.mrf.mxu0
        %v1406 = vadd.f32 0.0, %v1405
        %1407 = vmatmul.bf16.gmra.mxu0 %v1223
        %v1408 = vpop.f32.mrf.mxu0
        %v1409 = vadd.f32 0.0, %v1408
        %v1410 = vpop.f32.mrf.mxu0
        %v1411 = vadd.f32 0.0, %v1410
        %1412 = vmatmul.bf16.gmra.mxu0 %v1224
        %v1413 = vpop.f32.mrf.mxu0
        %v1414 = vadd.f32 0.0, %v1413
        %v1415 = vpop.f32.mrf.mxu0
        %1416 = vdwg.mxu0
        %1417 = vmatpush.bf16.msra.mxu0 %v1354
        %1418 = vmatpush.bf16.msra.mxu0 %v1350
        %1419 = vmatpush.bf16.msra.mxu0 %v1346
        %1420 = vmatpush.bf16.msra.mxu0 %v1342
        %1421 = vmatpush.bf16.msra.mxu0 %v1338
        %1422 = vmatpush.bf16.msra.mxu0 %v1334
        %1423 = vmatpush.bf16.msra.mxu0 %v1330
        %1424 = vmatpush.bf16.msra.mxu0 %v1326
        %1425 = vmatmul.bf16.gmra.mxu0 %v1221
        %v1426 = vpop.f32.mrf.mxu0
        %v1427 = vadd.f32 0.0, %v1426
        %v1428 = vpop.f32.mrf.mxu0
        %v1429 = vadd.f32 0.0, %v1428
        %1430 = vmatmul.bf16.gmra.mxu0 %v1222
        %v1431 = vpop.f32.mrf.mxu0
        %v1432 = vadd.f32 0.0, %v1431
        %v1433 = vpop.f32.mrf.mxu0
        %v1434 = vadd.f32 0.0, %v1433
        %1435 = vmatmul.bf16.gmra.mxu0 %v1223
        %v1436 = vpop.f32.mrf.mxu0
        %v1437 = vadd.f32 0.0, %v1436
        %v1438 = vpop.f32.mrf.mxu0
        %v1439 = vadd.f32 0.0, %v1438
        %1440 = vmatmul.bf16.gmra.mxu0 %v1224
        %v1441 = vpop.f32.mrf.mxu0
        %v1442 = vadd.f32 0.0, %v1441
        %v1443 = vpop.f32.mrf.mxu0
        %1444 = vdwg.mxu0
        %1445 = vmatpush.bf16.msra.mxu0 %v1355
        %1446 = vmatpush.bf16.msra.mxu0 %v1351
        %1447 = vmatpush.bf16.msra.mxu0 %v1347
        %1448 = vmatpush.bf16.msra.mxu0 %v1343
        %1449 = vmatpush.bf16.msra.mxu0 %v1339
        %1450 = vmatpush.bf16.msra.mxu0 %v1335
        %1451 = vmatpush.bf16.msra.mxu0 %v1331
        %1452 = vmatpush.bf16.msra.mxu0 %v1327
        %1453 = vmatmul.bf16.gmra.mxu0 %v1221
        %v1454 = vpop.f32.mrf.mxu0
        %v1455 = vadd.f32 0.0, %v1454
        %v1456 = vpop.f32.mrf.mxu0
        %v1457 = vadd.f32 0.0, %v1456
        %1458 = vmatmul.bf16.gmra.mxu0 %v1222
        %v1459 = vpop.f32.mrf.mxu0
        %v1460 = vadd.f32 0.0, %v1459
        %v1461 = vpop.f32.mrf.mxu0
        %v1462 = vadd.f32 0.0, %v1461
        %1463 = vmatmul.bf16.gmra.mxu0 %v1223
        %v1464 = vpop.f32.mrf.mxu0
        %v1465 = vadd.f32 0.0, %v1464
        %v1466 = vpop.f32.mrf.mxu0
        %v1467 = vadd.f32 0.0, %v1466
        %1468 = vmatmul.bf16.gmra.mxu0 %v1224
        %v1469 = vpop.f32.mrf.mxu0
        %v1470 = vadd.f32 0.0, %v1469
        %v1471 = vpop.f32.mrf.mxu0
        %1472 = vdwg.mxu0
        %1473 = vmatpush.bf16.msra.mxu0 %v1356
        %1474 = vmatpush.bf16.msra.mxu0 %v1352
        %1475 = vmatpush.bf16.msra.mxu0 %v1348
        %1476 = vmatpush.bf16.msra.mxu0 %v1344
        %1477 = vmatpush.bf16.msra.mxu0 %v1340
        %1478 = vmatpush.bf16.msra.mxu0 %v1336
        %1479 = vmatpush.bf16.msra.mxu0 %v1332
        %1480 = vmatpush.bf16.msra.mxu0 %v1328
        %1481 = vmatmul.bf16.gmra.mxu0 %v1221
        %v1482 = vpop.f32.mrf.mxu0
        %v1483 = vadd.f32 0.0, %v1482
        %v1484 = vpop.f32.mrf.mxu0
        %v1485 = vadd.f32 0.0, %v1484
        %1486 = vmatmul.bf16.gmra.mxu0 %v1222
        %v1487 = vpop.f32.mrf.mxu0
        %v1488 = vadd.f32 0.0, %v1487
        %v1489 = vpop.f32.mrf.mxu0
        %v1490 = vadd.f32 0.0, %v1489
        %1491 = vmatmul.bf16.gmra.mxu0 %v1223
        %v1492 = vpop.f32.mrf.mxu0
        %v1493 = vadd.f32 0.0, %v1492
        %v1494 = vpop.f32.mrf.mxu0
        %v1495 = vadd.f32 0.0, %v1494
        %1496 = vmatmul.bf16.gmra.mxu0 %v1224
        %v1497 = vpop.f32.mrf.mxu0
        %v1498 = vadd.f32 0.0, %v1497
        %v1499 = vpop.f32.mrf.mxu0
        %1500 = vdwg.mxu0
        %v1508 = vunpack.c.l.b16 %v1128
        %v1509 = vunpack.c.l.b16 %v1129
        %v1510 = vunpack.c.l.b16 %v1130
        %v1511 = vunpack.c.l.b16 %v1131
        %v1512 = vunpack.c.l.b16 %v1132
        %v1513 = vunpack.c.l.b16 %v1133
        %v1514 = vunpack.c.l.b16 %v1134
        %v1515 = vpack.c.b16 %v1509, %v1508
        %v1516 = vpack.c.b16 %v1511, %v1510
        %v1517 = vpack.c.b16 %v1513, %v1512
        %v1518 = vpack.c.b16 %v1514, %v1514
        %v1555 = vunpack.c.l.b16 %v1135
        %v1556 = vunpack.c.h.b16 %v1135
        %v1557 = vunpack.c.l.b16 %v1136
        %v1558 = vunpack.c.h.b16 %v1136
        %v1559 = vunpack.c.l.b16 %v1137
        %v1560 = vunpack.c.h.b16 %v1137
        %v1561 = vunpack.c.l.b16 %v1138
        %v1562 = vunpack.c.h.b16 %v1138
        %v1563 = vunpack.c.l.b16 %v1139
        %v1564 = vunpack.c.h.b16 %v1139
        %v1565 = vunpack.c.l.b16 %v1140
        %v1566 = vunpack.c.h.b16 %v1140
        %v1567 = vunpack.c.l.b16 %v1141
        %v1568 = vunpack.c.h.b16 %v1141
        %v1569 = vunpack.c.l.b16 %v1142
        %v1570 = vunpack.c.h.b16 %v1142
        %v1571 = vunpack.c.l.b16 %v1143
        %v1572 = vunpack.c.h.b16 %v1143
        %v1573 = vunpack.c.l.b16 %v1144
        %v1574 = vunpack.c.h.b16 %v1144
        %v1575 = vunpack.c.l.b16 %v1145
        %v1576 = vunpack.c.h.b16 %v1145
        %v1577 = vunpack.c.l.b16 %v1146
        %v1578 = vunpack.c.h.b16 %v1146
        %v1579 = vunpack.c.l.b16 %v1147
        %v1580 = vunpack.c.h.b16 %v1147
        %v1581 = vunpack.c.l.b16 %v1148
        %v1582 = vunpack.c.h.b16 %v1148
        %v1583 = vunpack.c.l.b16 %v1149
        %v1584 = vunpack.c.h.b16 %v1149
        %v1585 = vunpack.c.l.b16 %v1150
        %v1586 = vunpack.c.h.b16 %v1150
        %v1587 = vunpack.c.l.b16 %v1151
        %v1588 = vunpack.c.h.b16 %v1151
        %v1589 = vunpack.c.l.b16 %v1152
        %v1590 = vunpack.c.h.b16 %v1152
        %v1591 = vunpack.c.l.b16 %v1153
        %v1592 = vunpack.c.h.b16 %v1153
        %v1593 = vunpack.c.l.b16 %v1154
        %v1594 = vunpack.c.h.b16 %v1154
        %v1595 = vunpack.c.l.b16 %v1155
        %v1596 = vunpack.c.h.b16 %v1155
        %v1597 = vunpack.c.l.b16 %v1156
        %v1598 = vunpack.c.h.b16 %v1156
        %v1599 = vunpack.c.l.b16 %v1157
        %v1600 = vunpack.c.h.b16 %v1157
        %v1601 = vunpack.c.l.b16 %v1158
        %v1602 = vunpack.c.h.b16 %v1158
        %v1603 = vunpack.c.l.b16 %v1159
        %v1604 = vunpack.c.h.b16 %v1159
        %v1605 = vunpack.c.l.b16 %v1160
        %v1606 = vunpack.c.h.b16 %v1160
        %v1607 = vunpack.c.l.b16 %v1161
        %v1608 = vunpack.c.h.b16 %v1161
        %v1609 = vunpack.c.l.b16 %v1162
        %v1610 = vunpack.c.h.b16 %v1162
        %v1611 = vunpack.c.l.b16 %v1163
        %v1612 = vunpack.c.h.b16 %v1163
        %v1613 = vunpack.c.l.b16 %v1164
        %v1614 = vunpack.c.h.b16 %v1164
        %v1615 = vunpack.c.l.b16 %v1165
        %v1616 = vunpack.c.h.b16 %v1165
        %v1617 = vunpack.c.l.b16 %v1166
        %v1618 = vunpack.c.h.b16 %v1166
        %v1619 = vpack.c.b16 %v1559, %v1555
        %v1620 = vpack.c.b16 %v1560, %v1556
        %v1621 = vpack.c.b16 %v1561, %v1557
        %v1622 = vpack.c.b16 %v1562, %v1558
        %v1623 = vpack.c.b16 %v1567, %v1563
        %v1624 = vpack.c.b16 %v1568, %v1564
        %v1625 = vpack.c.b16 %v1569, %v1565
        %v1626 = vpack.c.b16 %v1570, %v1566
        %v1627 = vpack.c.b16 %v1575, %v1571
        %v1628 = vpack.c.b16 %v1576, %v1572
        %v1629 = vpack.c.b16 %v1577, %v1573
        %v1630 = vpack.c.b16 %v1578, %v1574
        %v1631 = vpack.c.b16 %v1583, %v1579
        %v1632 = vpack.c.b16 %v1584, %v1580
        %v1633 = vpack.c.b16 %v1585, %v1581
        %v1634 = vpack.c.b16 %v1586, %v1582
        %v1635 = vpack.c.b16 %v1591, %v1587
        %v1636 = vpack.c.b16 %v1592, %v1588
        %v1637 = vpack.c.b16 %v1593, %v1589
        %v1638 = vpack.c.b16 %v1594, %v1590
        %v1639 = vpack.c.b16 %v1599, %v1595
        %v1640 = vpack.c.b16 %v1600, %v1596
        %v1641 = vpack.c.b16 %v1601, %v1597
        %v1642 = vpack.c.b16 %v1602, %v1598
        %v1643 = vpack.c.b16 %v1607, %v1603
        %v1644 = vpack.c.b16 %v1608, %v1604
        %v1645 = vpack.c.b16 %v1609, %v1605
        %v1646 = vpack.c.b16 %v1610, %v1606
        %v1647 = vpack.c.b16 %v1615, %v1611
        %v1648 = vpack.c.b16 %v1616, %v1612
        %v1649 = vpack.c.b16 %v1617, %v1613
        %v1650 = vpack.c.b16 %v1618, %v1614
        %1683 = vmatpush.bf16.msra.mxu0 %v1647
        %1684 = vmatpush.bf16.msra.mxu0 %v1643
        %1685 = vmatpush.bf16.msra.mxu0 %v1639
        %1686 = vmatpush.bf16.msra.mxu0 %v1635
        %1687 = vmatpush.bf16.msra.mxu0 %v1631
        %1688 = vmatpush.bf16.msra.mxu0 %v1627
        %1689 = vmatpush.bf16.msra.mxu0 %v1623
        %1690 = vmatpush.bf16.msra.mxu0 %v1619
        %1691 = vmatmul.bf16.gmra.mxu0 %v1515
        %v1692 = vpop.f32.mrf.mxu0
        %v1693 = vadd.f32 %v1399, %v1692
        %v1694 = vpop.f32.mrf.mxu0
        %v1695 = vadd.f32 %v1401, %v1694
        %1696 = vmatmul.bf16.gmra.mxu0 %v1516
        %v1697 = vpop.f32.mrf.mxu0
        %v1698 = vadd.f32 %v1404, %v1697
        %v1699 = vpop.f32.mrf.mxu0
        %v1700 = vadd.f32 %v1406, %v1699
        %1701 = vmatmul.bf16.gmra.mxu0 %v1517
        %v1702 = vpop.f32.mrf.mxu0
        %v1703 = vadd.f32 %v1409, %v1702
        %v1704 = vpop.f32.mrf.mxu0
        %v1705 = vadd.f32 %v1411, %v1704
        %1706 = vmatmul.bf16.gmra.mxu0 %v1518
        %v1707 = vpop.f32.mrf.mxu0
        %v1708 = vadd.f32 %v1414, %v1707
        %v1709 = vpop.f32.mrf.mxu0
        %1710 = vdwg.mxu0
        %1711 = vmatpush.bf16.msra.mxu0 %v1648
        %1712 = vmatpush.bf16.msra.mxu0 %v1644
        %1713 = vmatpush.bf16.msra.mxu0 %v1640
        %1714 = vmatpush.bf16.msra.mxu0 %v1636
        %1715 = vmatpush.bf16.msra.mxu0 %v1632
        %1716 = vmatpush.bf16.msra.mxu0 %v1628
        %1717 = vmatpush.bf16.msra.mxu0 %v1624
        %1718 = vmatpush.bf16.msra.mxu0 %v1620
        %1719 = vmatmul.bf16.gmra.mxu0 %v1515
        %v1720 = vpop.f32.mrf.mxu0
        %v1721 = vadd.f32 %v1427, %v1720
        %v1722 = vpop.f32.mrf.mxu0
        %v1723 = vadd.f32 %v1429, %v1722
        %1724 = vmatmul.bf16.gmra.mxu0 %v1516
        %v1725 = vpop.f32.mrf.mxu0
        %v1726 = vadd.f32 %v1432, %v1725
        %v1727 = vpop.f32.mrf.mxu0
        %v1728 = vadd.f32 %v1434, %v1727
        %1729 = vmatmul.bf16.gmra.mxu0 %v1517
        %v1730 = vpop.f32.mrf.mxu0
        %v1731 = vadd.f32 %v1437, %v1730
        %v1732 = vpop.f32.mrf.mxu0
        %v1733 = vadd.f32 %v1439, %v1732
        %1734 = vmatmul.bf16.gmra.mxu0 %v1518
        %v1735 = vpop.f32.mrf.mxu0
        %v1736 = vadd.f32 %v1442, %v1735
        %v1737 = vpop.f32.mrf.mxu0
        %1738 = vdwg.mxu0
        %1739 = vmatpush.bf16.msra.mxu0 %v1649
        %1740 = vmatpush.bf16.msra.mxu0 %v1645
        %1741 = vmatpush.bf16.msra.mxu0 %v1641
        %1742 = vmatpush.bf16.msra.mxu0 %v1637
        %1743 = vmatpush.bf16.msra.mxu0 %v1633
        %1744 = vmatpush.bf16.msra.mxu0 %v1629
        %1745 = vmatpush.bf16.msra.mxu0 %v1625
        %1746 = vmatpush.bf16.msra.mxu0 %v1621
        %1747 = vmatmul.bf16.gmra.mxu0 %v1515
        %v1748 = vpop.f32.mrf.mxu0
        %v1749 = vadd.f32 %v1455, %v1748
        %v1750 = vpop.f32.mrf.mxu0
        %v1751 = vadd.f32 %v1457, %v1750
        %1752 = vmatmul.bf16.gmra.mxu0 %v1516
        %v1753 = vpop.f32.mrf.mxu0
        %v1754 = vadd.f32 %v1460, %v1753
        %v1755 = vpop.f32.mrf.mxu0
        %v1756 = vadd.f32 %v1462, %v1755
        %1757 = vmatmul.bf16.gmra.mxu0 %v1517
        %v1758 = vpop.f32.mrf.mxu0
        %v1759 = vadd.f32 %v1465, %v1758
        %v1760 = vpop.f32.mrf.mxu0
        %v1761 = vadd.f32 %v1467, %v1760
        %1762 = vmatmul.bf16.gmra.mxu0 %v1518
        %v1763 = vpop.f32.mrf.mxu0
        %v1764 = vadd.f32 %v1470, %v1763
        %v1765 = vpop.f32.mrf.mxu0
        %1766 = vdwg.mxu0
        %1767 = vmatpush.bf16.msra.mxu0 %v1650
        %1768 = vmatpush.bf16.msra.mxu0 %v1646
        %1769 = vmatpush.bf16.msra.mxu0 %v1642
        %1770 = vmatpush.bf16.msra.mxu0 %v1638
        %1771 = vmatpush.bf16.msra.mxu0 %v1634
        %1772 = vmatpush.bf16.msra.mxu0 %v1630
        %1773 = vmatpush.bf16.msra.mxu0 %v1626
        %1774 = vmatpush.bf16.msra.mxu0 %v1622
        %1775 = vmatmul.bf16.gmra.mxu0 %v1515
        %v1776 = vpop.f32.mrf.mxu0
        %v1777 = vadd.f32 %v1483, %v1776
        %v1778 = vpop.f32.mrf.mxu0
        %v1779 = vadd.f32 %v1485, %v1778
        %1780 = vmatmul.bf16.gmra.mxu0 %v1516
        %v1781 = vpop.f32.mrf.mxu0
        %v1782 = vadd.f32 %v1488, %v1781
        %v1783 = vpop.f32.mrf.mxu0
        %v1784 = vadd.f32 %v1490, %v1783
        %1785 = vmatmul.bf16.gmra.mxu0 %v1517
        %v1786 = vpop.f32.mrf.mxu0
        %v1787 = vadd.f32 %v1493, %v1786
        %v1788 = vpop.f32.mrf.mxu0
        %v1789 = vadd.f32 %v1495, %v1788
        %1790 = vmatmul.bf16.gmra.mxu0 %v1518
        %v1791 = vpop.f32.mrf.mxu0
        %v1792 = vadd.f32 %v1498, %v1791
        %v1793 = vpop.f32.mrf.mxu0
        %1794 = vdwg.mxu0
        %v1795 = vld [vmem:[#allocation2 + $0x4] sm:$0xf]
        %v1796 = vld [vmem:[#allocation2 + $0x8] sm:$0xf]
        %v1797 = vld [vmem:[#allocation2 + $0xc] sm:$0xf]
        %v1798 = vld [vmem:[#allocation2 + $0x10] sm:$0xf]
        %v1799 = vld [vmem:[#allocation2 + $0x14] sm:$0xf]
        %v1800 = vld [vmem:[#allocation2 + $0x18] sm:$0xf]
        %v1801 = vld [vmem:[#allocation2 + $0x1c] sm:$0xf]
        %s1802 = scalar_lea.vmem %s3, 512
        %v1803 = vld [vmem:[%s1802] sm:$0xff]
        %v1804 = vld [vmem:[%s1802 + $0x8] sm:$0xff]
        %v1805 = vld [vmem:[%s1802 + $0x10] sm:$0xff]
        %v1806 = vld [vmem:[%s1802 + $0x18] sm:$0xff]
        %v1807 = vld [vmem:[%s1802 + $0x20] sm:$0xff]
        %v1808 = vld [vmem:[%s1802 + $0x28] sm:$0xff]
        %v1809 = vld [vmem:[%s1802 + $0x30] sm:$0xff]
        %v1810 = vld [vmem:[%s1802 + $0x38] sm:$0xff]
        %v1811 = vld [vmem:[%s1802 + $0x40] sm:$0xff]
        %v1812 = vld [vmem:[%s1802 + $0x48] sm:$0xff]
        %v1813 = vld [vmem:[%s1802 + $0x50] sm:$0xff]
        %v1814 = vld [vmem:[%s1802 + $0x58] sm:$0xff]
        %v1815 = vld [vmem:[%s1802 + $0x60] sm:$0xff]
        %v1816 = vld [vmem:[%s1802 + $0x68] sm:$0xff]
        %v1817 = vld [vmem:[%s1802 + $0x70] sm:$0xff]
        %v1818 = vld [vmem:[%s1802 + $0x78] sm:$0xff]
        %v1819 = vld [vmem:[%s1802 + $0x80] sm:$0xff]
        %v1820 = vld [vmem:[%s1802 + $0x88] sm:$0xff]
        %v1821 = vld [vmem:[%s1802 + $0x90] sm:$0xff]
        %v1822 = vld [vmem:[%s1802 + $0x98] sm:$0xff]
        %v1823 = vld [vmem:[%s1802 + $0xa0] sm:$0xff]
        %v1824 = vld [vmem:[%s1802 + $0xa8] sm:$0xff]
        %v1825 = vld [vmem:[%s1802 + $0xb0] sm:$0xff]
        %v1826 = vld [vmem:[%s1802 + $0xb8] sm:$0xff]
        %v1827 = vld [vmem:[%s1802 + $0xc0] sm:$0xff]
        %v1828 = vld [vmem:[%s1802 + $0xc8] sm:$0xff]
        %v1829 = vld [vmem:[%s1802 + $0xd0] sm:$0xff]
        %v1830 = vld [vmem:[%s1802 + $0xd8] sm:$0xff]
        %v1831 = vld [vmem:[%s1802 + $0xe0] sm:$0xff]
        %v1832 = vld [vmem:[%s1802 + $0xe8] sm:$0xff]
        %v1833 = vld [vmem:[%s1802 + $0xf0] sm:$0xff]
        %v1834 = vld [vmem:[%s1802 + $0xf8] sm:$0xff]
        %v1842 = vunpack.c.l.b16 %v1795
        %v1843 = vunpack.c.l.b16 %v1796
        %v1844 = vunpack.c.l.b16 %v1797
        %v1845 = vunpack.c.l.b16 %v1798
        %v1846 = vunpack.c.l.b16 %v1799
        %v1847 = vunpack.c.l.b16 %v1800
        %v1848 = vunpack.c.l.b16 %v1801
        %v1849 = vpack.c.b16 %v1843, %v1842
        %v1850 = vpack.c.b16 %v1845, %v1844
        %v1851 = vpack.c.b16 %v1847, %v1846
        %v1852 = vpack.c.b16 %v1848, %v1848
        %v1889 = vunpack.c.l.b16 %v1803
        %v1890 = vunpack.c.h.b16 %v1803
        %v1891 = vunpack.c.l.b16 %v1804
        %v1892 = vunpack.c.h.b16 %v1804
        %v1893 = vunpack.c.l.b16 %v1805
        %v1894 = vunpack.c.h.b16 %v1805
        %v1895 = vunpack.c.l.b16 %v1806
        %v1896 = vunpack.c.h.b16 %v1806
        %v1897 = vunpack.c.l.b16 %v1807
        %v1898 = vunpack.c.h.b16 %v1807
        %v1899 = vunpack.c.l.b16 %v1808
        %v1900 = vunpack.c.h.b16 %v1808
        %v1901 = vunpack.c.l.b16 %v1809
        %v1902 = vunpack.c.h.b16 %v1809
        %v1903 = vunpack.c.l.b16 %v1810
        %v1904 = vunpack.c.h.b16 %v1810
        %v1905 = vunpack.c.l.b16 %v1811
        %v1906 = vunpack.c.h.b16 %v1811
        %v1907 = vunpack.c.l.b16 %v1812
        %v1908 = vunpack.c.h.b16 %v1812
        %v1909 = vunpack.c.l.b16 %v1813
        %v1910 = vunpack.c.h.b16 %v1813
        %v1911 = vunpack.c.l.b16 %v1814
        %v1912 = vunpack.c.h.b16 %v1814
        %v1913 = vunpack.c.l.b16 %v1815
        %v1914 = vunpack.c.h.b16 %v1815
        %v1915 = vunpack.c.l.b16 %v1816
        %v1916 = vunpack.c.h.b16 %v1816
        %v1917 = vunpack.c.l.b16 %v1817
        %v1918 = vunpack.c.h.b16 %v1817
        %v1919 = vunpack.c.l.b16 %v1818
        %v1920 = vunpack.c.h.b16 %v1818
        %v1921 = vunpack.c.l.b16 %v1819
        %v1922 = vunpack.c.h.b16 %v1819
        %v1923 = vunpack.c.l.b16 %v1820
        %v1924 = vunpack.c.h.b16 %v1820
        %v1925 = vunpack.c.l.b16 %v1821
        %v1926 = vunpack.c.h.b16 %v1821
        %v1927 = vunpack.c.l.b16 %v1822
        %v1928 = vunpack.c.h.b16 %v1822
        %v1929 = vunpack.c.l.b16 %v1823
        %v1930 = vunpack.c.h.b16 %v1823
        %v1931 = vunpack.c.l.b16 %v1824
        %v1932 = vunpack.c.h.b16 %v1824
        %v1933 = vunpack.c.l.b16 %v1825
        %v1934 = vunpack.c.h.b16 %v1825
        %v1935 = vunpack.c.l.b16 %v1826
        %v1936 = vunpack.c.h.b16 %v1826
        %v1937 = vunpack.c.l.b16 %v1827
        %v1938 = vunpack.c.h.b16 %v1827
        %v1939 = vunpack.c.l.b16 %v1828
        %v1940 = vunpack.c.h.b16 %v1828
        %v1941 = vunpack.c.l.b16 %v1829
        %v1942 = vunpack.c.h.b16 %v1829
        %v1943 = vunpack.c.l.b16 %v1830
        %v1944 = vunpack.c.h.b16 %v1830
        %v1945 = vunpack.c.l.b16 %v1831
        %v1946 = vunpack.c.h.b16 %v1831
        %v1947 = vunpack.c.l.b16 %v1832
        %v1948 = vunpack.c.h.b16 %v1832
        %v1949 = vunpack.c.l.b16 %v1833
        %v1950 = vunpack.c.h.b16 %v1833
        %v1951 = vunpack.c.l.b16 %v1834
        %v1952 = vunpack.c.h.b16 %v1834
        %v1953 = vpack.c.b16 %v1893, %v1889
        %v1954 = vpack.c.b16 %v1894, %v1890
        %v1955 = vpack.c.b16 %v1895, %v1891
        %v1956 = vpack.c.b16 %v1896, %v1892
        %v1957 = vpack.c.b16 %v1901, %v1897
        %v1958 = vpack.c.b16 %v1902, %v1898
        %v1959 = vpack.c.b16 %v1903, %v1899
        %v1960 = vpack.c.b16 %v1904, %v1900
        %v1961 = vpack.c.b16 %v1909, %v1905
        %v1962 = vpack.c.b16 %v1910, %v1906
        %v1963 = vpack.c.b16 %v1911, %v1907
        %v1964 = vpack.c.b16 %v1912, %v1908
        %v1965 = vpack.c.b16 %v1917, %v1913
        %v1966 = vpack.c.b16 %v1918, %v1914
        %v1967 = vpack.c.b16 %v1919, %v1915
        %v1968 = vpack.c.b16 %v1920, %v1916
        %v1969 = vpack.c.b16 %v1925, %v1921
        %v1970 = vpack.c.b16 %v1926, %v1922
        %v1971 = vpack.c.b16 %v1927, %v1923
        %v1972 = vpack.c.b16 %v1928, %v1924
        %v1973 = vpack.c.b16 %v1933, %v1929
        %v1974 = vpack.c.b16 %v1934, %v1930
        %v1975 = vpack.c.b16 %v1935, %v1931
        %v1976 = vpack.c.b16 %v1936, %v1932
        %v1977 = vpack.c.b16 %v1941, %v1937
        %v1978 = vpack.c.b16 %v1942, %v1938
        %v1979 = vpack.c.b16 %v1943, %v1939
        %v1980 = vpack.c.b16 %v1944, %v1940
        %v1981 = vpack.c.b16 %v1949, %v1945
        %v1982 = vpack.c.b16 %v1950, %v1946
        %v1983 = vpack.c.b16 %v1951, %v1947
        %v1984 = vpack.c.b16 %v1952, %v1948
        %2017 = vmatpush.bf16.msra.mxu0 %v1981
        %2018 = vmatpush.bf16.msra.mxu0 %v1977
        %2019 = vmatpush.bf16.msra.mxu0 %v1973
        %2020 = vmatpush.bf16.msra.mxu0 %v1969
        %2021 = vmatpush.bf16.msra.mxu0 %v1965
        %2022 = vmatpush.bf16.msra.mxu0 %v1961
        %2023 = vmatpush.bf16.msra.mxu0 %v1957
        %2024 = vmatpush.bf16.msra.mxu0 %v1953
        %2025 = vmatmul.bf16.gmra.mxu0 %v1849
        %v2026 = vpop.f32.mrf.mxu0
        %v2027 = vadd.f32 0.0, %v2026
        %v2028 = vpop.f32.mrf.mxu0
        %v2029 = vadd.f32 0.0, %v2028
        %2030 = vmatmul.bf16.gmra.mxu0 %v1850
        %v2031 = vpop.f32.mrf.mxu0
        %v2032 = vadd.f32 0.0, %v2031
        %v2033 = vpop.f32.mrf.mxu0
        %v2034 = vadd.f32 0.0, %v2033
        %2035 = vmatmul.bf16.gmra.mxu0 %v1851
        %v2036 = vpop.f32.mrf.mxu0
        %v2037 = vadd.f32 0.0, %v2036
        %v2038 = vpop.f32.mrf.mxu0
        %v2039 = vadd.f32 0.0, %v2038
        %2040 = vmatmul.bf16.gmra.mxu0 %v1852
        %v2041 = vpop.f32.mrf.mxu0
        %v2042 = vadd.f32 0.0, %v2041
        %v2043 = vpop.f32.mrf.mxu0
        %2044 = vdwg.mxu0
        %2045 = vmatpush.bf16.msra.mxu0 %v1982
        %2046 = vmatpush.bf16.msra.mxu0 %v1978
        %2047 = vmatpush.bf16.msra.mxu0 %v1974
        %2048 = vmatpush.bf16.msra.mxu0 %v1970
        %2049 = vmatpush.bf16.msra.mxu0 %v1966
        %2050 = vmatpush.bf16.msra.mxu0 %v1962
        %2051 = vmatpush.bf16.msra.mxu0 %v1958
        %2052 = vmatpush.bf16.msra.mxu0 %v1954
        %2053 = vmatmul.bf16.gmra.mxu0 %v1849
        %v2054 = vpop.f32.mrf.mxu0
        %v2055 = vadd.f32 0.0, %v2054
        %v2056 = vpop.f32.mrf.mxu0
        %v2057 = vadd.f32 0.0, %v2056
        %2058 = vmatmul.bf16.gmra.mxu0 %v1850
        %v2059 = vpop.f32.mrf.mxu0
        %v2060 = vadd.f32 0.0, %v2059
        %v2061 = vpop.f32.mrf.mxu0
        %v2062 = vadd.f32 0.0, %v2061
        %2063 = vmatmul.bf16.gmra.mxu0 %v1851
        %v2064 = vpop.f32.mrf.mxu0
        %v2065 = vadd.f32 0.0, %v2064
        %v2066 = vpop.f32.mrf.mxu0
        %v2067 = vadd.f32 0.0, %v2066
        %2068 = vmatmul.bf16.gmra.mxu0 %v1852
        %v2069 = vpop.f32.mrf.mxu0
        %v2070 = vadd.f32 0.0, %v2069
        %v2071 = vpop.f32.mrf.mxu0
        %2072 = vdwg.mxu0
        %2073 = vmatpush.bf16.msra.mxu0 %v1983
        %2074 = vmatpush.bf16.msra.mxu0 %v1979
        %2075 = vmatpush.bf16.msra.mxu0 %v1975
        %2076 = vmatpush.bf16.msra.mxu0 %v1971
        %2077 = vmatpush.bf16.msra.mxu0 %v1967
        %2078 = vmatpush.bf16.msra.mxu0 %v1963
        %2079 = vmatpush.bf16.msra.mxu0 %v1959
        %2080 = vmatpush.bf16.msra.mxu0 %v1955
        %2081 = vmatmul.bf16.gmra.mxu0 %v1849
        %v2082 = vpop.f32.mrf.mxu0
        %v2083 = vadd.f32 0.0, %v2082
        %v2084 = vpop.f32.mrf.mxu0
        %v2085 = vadd.f32 0.0, %v2084
        %2086 = vmatmul.bf16.gmra.mxu0 %v1850
        %v2087 = vpop.f32.mrf.mxu0
        %v2088 = vadd.f32 0.0, %v2087
        %v2089 = vpop.f32.mrf.mxu0
        %v2090 = vadd.f32 0.0, %v2089
        %2091 = vmatmul.bf16.gmra.mxu0 %v1851
        %v2092 = vpop.f32.mrf.mxu0
        %v2093 = vadd.f32 0.0, %v2092
        %v2094 = vpop.f32.mrf.mxu0
        %v2095 = vadd.f32 0.0, %v2094
        %2096 = vmatmul.bf16.gmra.mxu0 %v1852
        %v2097 = vpop.f32.mrf.mxu0
        %v2098 = vadd.f32 0.0, %v2097
        %v2099 = vpop.f32.mrf.mxu0
        %2100 = vdwg.mxu0
        %2101 = vmatpush.bf16.msra.mxu0 %v1984
        %2102 = vmatpush.bf16.msra.mxu0 %v1980
        %2103 = vmatpush.bf16.msra.mxu0 %v1976
        %2104 = vmatpush.bf16.msra.mxu0 %v1972
        %2105 = vmatpush.bf16.msra.mxu0 %v1968
        %2106 = vmatpush.bf16.msra.mxu0 %v1964
        %2107 = vmatpush.bf16.msra.mxu0 %v1960
        %2108 = vmatpush.bf16.msra.mxu0 %v1956
        %2109 = vmatmul.bf16.gmra.mxu0 %v1849
        %v2110 = vpop.f32.mrf.mxu0
        %v2111 = vadd.f32 0.0, %v2110
        %v2112 = vpop.f32.mrf.mxu0
        %v2113 = vadd.f32 0.0, %v2112
        %2114 = vmatmul.bf16.gmra.mxu0 %v1850
        %v2115 = vpop.f32.mrf.mxu0
        %v2116 = vadd.f32 0.0, %v2115
        %v2117 = vpop.f32.mrf.mxu0
        %v2118 = vadd.f32 0.0, %v2117
        %2119 = vmatmul.bf16.gmra.mxu0 %v1851
        %v2120 = vpop.f32.mrf.mxu0
        %v2121 = vadd.f32 0.0, %v2120
        %v2122 = vpop.f32.mrf.mxu0
        %v2123 = vadd.f32 0.0, %v2122
        %2124 = vmatmul.bf16.gmra.mxu0 %v1852
        %v2125 = vpop.f32.mrf.mxu0
        %v2126 = vadd.f32 0.0, %v2125
        %v2127 = vpop.f32.mrf.mxu0
        %2128 = vdwg.mxu0
        %v2129 = vadd.f32 %v1693, %v2027
        %v2130 = vadd.f32 %v1721, %v2055
        %v2131 = vadd.f32 %v1749, %v2083
        %v2132 = vadd.f32 %v1777, %v2111
        %v2133 = vadd.f32 %v1695, %v2029
        %v2134 = vadd.f32 %v1723, %v2057
        %v2135 = vadd.f32 %v1751, %v2085
        %v2136 = vadd.f32 %v1779, %v2113
        %v2137 = vadd.f32 %v1698, %v2032
        %v2138 = vadd.f32 %v1726, %v2060
        %v2139 = vadd.f32 %v1754, %v2088
        %v2140 = vadd.f32 %v1782, %v2116
        %v2141 = vadd.f32 %v1700, %v2034
        %v2142 = vadd.f32 %v1728, %v2062
        %v2143 = vadd.f32 %v1756, %v2090
        %v2144 = vadd.f32 %v1784, %v2118
        %v2145 = vadd.f32 %v1703, %v2037
        %v2146 = vadd.f32 %v1731, %v2065
        %v2147 = vadd.f32 %v1759, %v2093
        %v2148 = vadd.f32 %v1787, %v2121
        %v2149 = vadd.f32 %v1705, %v2039
        %v2150 = vadd.f32 %v1733, %v2067
        %v2151 = vadd.f32 %v1761, %v2095
        %v2152 = vadd.f32 %v1789, %v2123
        %v2153 = vadd.f32 %v1708, %v2042
        %v2154 = vadd.f32 %v1736, %v2070
        %v2155 = vadd.f32 %v1764, %v2098
        %v2156 = vadd.f32 %v1792, %v2126
        %v2157 = vld [vmem:[#allocation3 + $0x4] sm:$0xf]
        %v2158 = vld [vmem:[#allocation3 + $0x8] sm:$0xf]
        %v2159 = vld [vmem:[#allocation3 + $0xc] sm:$0xf]
        %v2160 = vld [vmem:[#allocation3 + $0x10] sm:$0xf]
        %v2161 = vld [vmem:[#allocation3 + $0x14] sm:$0xf]
        %v2162 = vld [vmem:[#allocation3 + $0x18] sm:$0xf]
        %v2163 = vld [vmem:[#allocation3 + $0x1c] sm:$0xf]
        %s2164 = scalar_lea.vmem %s3, 768
        %v2165 = vld [vmem:[%s2164] sm:$0xff]
        %v2166 = vld [vmem:[%s2164 + $0x8] sm:$0xff]
        %v2167 = vld [vmem:[%s2164 + $0x10] sm:$0xff]
        %v2168 = vld [vmem:[%s2164 + $0x18] sm:$0xff]
        %v2169 = vld [vmem:[%s2164 + $0x20] sm:$0xff]
        %v2170 = vld [vmem:[%s2164 + $0x28] sm:$0xff]
        %v2171 = vld [vmem:[%s2164 + $0x30] sm:$0xff]
        %v2172 = vld [vmem:[%s2164 + $0x38] sm:$0xff]
        %v2173 = vld [vmem:[%s2164 + $0x40] sm:$0xff]
        %v2174 = vld [vmem:[%s2164 + $0x48] sm:$0xff]
        %v2175 = vld [vmem:[%s2164 + $0x50] sm:$0xff]
        %v2176 = vld [vmem:[%s2164 + $0x58] sm:$0xff]
        %v2177 = vld [vmem:[%s2164 + $0x60] sm:$0xff]
        %v2178 = vld [vmem:[%s2164 + $0x68] sm:$0xff]
        %v2179 = vld [vmem:[%s2164 + $0x70] sm:$0xff]
        %v2180 = vld [vmem:[%s2164 + $0x78] sm:$0xff]
        %v2181 = vld [vmem:[%s2164 + $0x80] sm:$0xff]
        %v2182 = vld [vmem:[%s2164 + $0x88] sm:$0xff]
        %v2183 = vld [vmem:[%s2164 + $0x90] sm:$0xff]
        %v2184 = vld [vmem:[%s2164 + $0x98] sm:$0xff]
        %v2185 = vld [vmem:[%s2164 + $0xa0] sm:$0xff]
        %v2186 = vld [vmem:[%s2164 + $0xa8] sm:$0xff]
        %v2187 = vld [vmem:[%s2164 + $0xb0] sm:$0xff]
        %v2188 = vld [vmem:[%s2164 + $0xb8] sm:$0xff]
        %v2189 = vld [vmem:[%s2164 + $0xc0] sm:$0xff]
        %v2190 = vld [vmem:[%s2164 + $0xc8] sm:$0xff]
        %v2191 = vld [vmem:[%s2164 + $0xd0] sm:$0xff]
        %v2192 = vld [vmem:[%s2164 + $0xd8] sm:$0xff]
        %v2193 = vld [vmem:[%s2164 + $0xe0] sm:$0xff]
        %v2194 = vld [vmem:[%s2164 + $0xe8] sm:$0xff]
        %v2195 = vld [vmem:[%s2164 + $0xf0] sm:$0xff]
        %v2196 = vld [vmem:[%s2164 + $0xf8] sm:$0xff]
        %v2204 = vunpack.c.l.b16 %v2157
        %v2205 = vunpack.c.l.b16 %v2158
        %v2206 = vunpack.c.l.b16 %v2159
        %v2207 = vunpack.c.l.b16 %v2160
        %v2208 = vunpack.c.l.b16 %v2161
        %v2209 = vunpack.c.l.b16 %v2162
        %v2210 = vunpack.c.l.b16 %v2163
        %v2211 = vpack.c.b16 %v2205, %v2204
        %v2212 = vpack.c.b16 %v2207, %v2206
        %v2213 = vpack.c.b16 %v2209, %v2208
        %v2214 = vpack.c.b16 %v2210, %v2210
        %v2251 = vunpack.c.l.b16 %v2165
        %v2252 = vunpack.c.h.b16 %v2165
        %v2253 = vunpack.c.l.b16 %v2166
        %v2254 = vunpack.c.h.b16 %v2166
        %v2255 = vunpack.c.l.b16 %v2167
        %v2256 = vunpack.c.h.b16 %v2167
        %v2257 = vunpack.c.l.b16 %v2168
        %v2258 = vunpack.c.h.b16 %v2168
        %v2259 = vunpack.c.l.b16 %v2169
        %v2260 = vunpack.c.h.b16 %v2169
        %v2261 = vunpack.c.l.b16 %v2170
        %v2262 = vunpack.c.h.b16 %v2170
        %v2263 = vunpack.c.l.b16 %v2171
        %v2264 = vunpack.c.h.b16 %v2171
        %v2265 = vunpack.c.l.b16 %v2172
        %v2266 = vunpack.c.h.b16 %v2172
        %v2267 = vunpack.c.l.b16 %v2173
        %v2268 = vunpack.c.h.b16 %v2173
        %v2269 = vunpack.c.l.b16 %v2174
        %v2270 = vunpack.c.h.b16 %v2174
        %v2271 = vunpack.c.l.b16 %v2175
        %v2272 = vunpack.c.h.b16 %v2175
        %v2273 = vunpack.c.l.b16 %v2176
        %v2274 = vunpack.c.h.b16 %v2176
        %v2275 = vunpack.c.l.b16 %v2177
        %v2276 = vunpack.c.h.b16 %v2177
        %v2277 = vunpack.c.l.b16 %v2178
        %v2278 = vunpack.c.h.b16 %v2178
        %v2279 = vunpack.c.l.b16 %v2179
        %v2280 = vunpack.c.h.b16 %v2179
        %v2281 = vunpack.c.l.b16 %v2180
        %v2282 = vunpack.c.h.b16 %v2180
        %v2283 = vunpack.c.l.b16 %v2181
        %v2284 = vunpack.c.h.b16 %v2181
        %v2285 = vunpack.c.l.b16 %v2182
        %v2286 = vunpack.c.h.b16 %v2182
        %v2287 = vunpack.c.l.b16 %v2183
        %v2288 = vunpack.c.h.b16 %v2183
        %v2289 = vunpack.c.l.b16 %v2184
        %v2290 = vunpack.c.h.b16 %v2184
        %v2291 = vunpack.c.l.b16 %v2185
        %v2292 = vunpack.c.h.b16 %v2185
        %v2293 = vunpack.c.l.b16 %v2186
        %v2294 = vunpack.c.h.b16 %v2186
        %v2295 = vunpack.c.l.b16 %v2187
        %v2296 = vunpack.c.h.b16 %v2187
        %v2297 = vunpack.c.l.b16 %v2188
        %v2298 = vunpack.c.h.b16 %v2188
        %v2299 = vunpack.c.l.b16 %v2189
        %v2300 = vunpack.c.h.b16 %v2189
        %v2301 = vunpack.c.l.b16 %v2190
        %v2302 = vunpack.c.h.b16 %v2190
        %v2303 = vunpack.c.l.b16 %v2191
        %v2304 = vunpack.c.h.b16 %v2191
        %v2305 = vunpack.c.l.b16 %v2192
        %v2306 = vunpack.c.h.b16 %v2192
        %v2307 = vunpack.c.l.b16 %v2193
        %v2308 = vunpack.c.h.b16 %v2193
        %v2309 = vunpack.c.l.b16 %v2194
        %v2310 = vunpack.c.h.b16 %v2194
        %v2311 = vunpack.c.l.b16 %v2195
        %v2312 = vunpack.c.h.b16 %v2195
        %v2313 = vunpack.c.l.b16 %v2196
        %v2314 = vunpack.c.h.b16 %v2196
        %v2315 = vpack.c.b16 %v2255, %v2251
        %v2316 = vpack.c.b16 %v2256, %v2252
        %v2317 = vpack.c.b16 %v2257, %v2253
        %v2318 = vpack.c.b16 %v2258, %v2254
        %v2319 = vpack.c.b16 %v2263, %v2259
        %v2320 = vpack.c.b16 %v2264, %v2260
        %v2321 = vpack.c.b16 %v2265, %v2261
        %v2322 = vpack.c.b16 %v2266, %v2262
        %v2323 = vpack.c.b16 %v2271, %v2267
        %v2324 = vpack.c.b16 %v2272, %v2268
        %v2325 = vpack.c.b16 %v2273, %v2269
        %v2326 = vpack.c.b16 %v2274, %v2270
        %v2327 = vpack.c.b16 %v2279, %v2275
        %v2328 = vpack.c.b16 %v2280, %v2276
        %v2329 = vpack.c.b16 %v2281, %v2277
        %v2330 = vpack.c.b16 %v2282, %v2278
        %v2331 = vpack.c.b16 %v2287, %v2283
        %v2332 = vpack.c.b16 %v2288, %v2284
        %v2333 = vpack.c.b16 %v2289, %v2285
        %v2334 = vpack.c.b16 %v2290, %v2286
        %v2335 = vpack.c.b16 %v2295, %v2291
        %v2336 = vpack.c.b16 %v2296, %v2292
        %v2337 = vpack.c.b16 %v2297, %v2293
        %v2338 = vpack.c.b16 %v2298, %v2294
        %v2339 = vpack.c.b16 %v2303, %v2299
        %v2340 = vpack.c.b16 %v2304, %v2300
        %v2341 = vpack.c.b16 %v2305, %v2301
        %v2342 = vpack.c.b16 %v2306, %v2302
        %v2343 = vpack.c.b16 %v2311, %v2307
        %v2344 = vpack.c.b16 %v2312, %v2308
        %v2345 = vpack.c.b16 %v2313, %v2309
        %v2346 = vpack.c.b16 %v2314, %v2310
        %2379 = vmatpush.bf16.msra.mxu0 %v2343
        %2380 = vmatpush.bf16.msra.mxu0 %v2339
        %2381 = vmatpush.bf16.msra.mxu0 %v2335
        %2382 = vmatpush.bf16.msra.mxu0 %v2331
        %2383 = vmatpush.bf16.msra.mxu0 %v2327
        %2384 = vmatpush.bf16.msra.mxu0 %v2323
        %2385 = vmatpush.bf16.msra.mxu0 %v2319
        %2386 = vmatpush.bf16.msra.mxu0 %v2315
        %2387 = vmatmul.bf16.gmra.mxu0 %v2211
        %v2388 = vpop.f32.mrf.mxu0
        %v2389 = vadd.f32 0.0, %v2388
        %v2390 = vpop.f32.mrf.mxu0
        %v2391 = vadd.f32 0.0, %v2390
        %2392 = vmatmul.bf16.gmra.mxu0 %v2212
        %v2393 = vpop.f32.mrf.mxu0
        %v2394 = vadd.f32 0.0, %v2393
        %v2395 = vpop.f32.mrf.mxu0
        %v2396 = vadd.f32 0.0, %v2395
        %2397 = vmatmul.bf16.gmra.mxu0 %v2213
        %v2398 = vpop.f32.mrf.mxu0
        %v2399 = vadd.f32 0.0, %v2398
        %v2400 = vpop.f32.mrf.mxu0
        %v2401 = vadd.f32 0.0, %v2400
        %2402 = vmatmul.bf16.gmra.mxu0 %v2214
        %v2403 = vpop.f32.mrf.mxu0
        %v2404 = vadd.f32 0.0, %v2403
        %v2405 = vpop.f32.mrf.mxu0
        %2406 = vdwg.mxu0
        %2407 = vmatpush.bf16.msra.mxu0 %v2344
        %2408 = vmatpush.bf16.msra.mxu0 %v2340
        %2409 = vmatpush.bf16.msra.mxu0 %v2336
        %2410 = vmatpush.bf16.msra.mxu0 %v2332
        %2411 = vmatpush.bf16.msra.mxu0 %v2328
        %2412 = vmatpush.bf16.msra.mxu0 %v2324
        %2413 = vmatpush.bf16.msra.mxu0 %v2320
        %2414 = vmatpush.bf16.msra.mxu0 %v2316
        %2415 = vmatmul.bf16.gmra.mxu0 %v2211
        %v2416 = vpop.f32.mrf.mxu0
        %v2417 = vadd.f32 0.0, %v2416
        %v2418 = vpop.f32.mrf.mxu0
        %v2419 = vadd.f32 0.0, %v2418
        %2420 = vmatmul.bf16.gmra.mxu0 %v2212
        %v2421 = vpop.f32.mrf.mxu0
        %v2422 = vadd.f32 0.0, %v2421
        %v2423 = vpop.f32.mrf.mxu0
        %v2424 = vadd.f32 0.0, %v2423
        %2425 = vmatmul.bf16.gmra.mxu0 %v2213
        %v2426 = vpop.f32.mrf.mxu0
        %v2427 = vadd.f32 0.0, %v2426
        %v2428 = vpop.f32.mrf.mxu0
        %v2429 = vadd.f32 0.0, %v2428
        %2430 = vmatmul.bf16.gmra.mxu0 %v2214
        %v2431 = vpop.f32.mrf.mxu0
        %v2432 = vadd.f32 0.0, %v2431
        %v2433 = vpop.f32.mrf.mxu0
        %2434 = vdwg.mxu0
        %2435 = vmatpush.bf16.msra.mxu0 %v2345
        %2436 = vmatpush.bf16.msra.mxu0 %v2341
        %2437 = vmatpush.bf16.msra.mxu0 %v2337
        %2438 = vmatpush.bf16.msra.mxu0 %v2333
        %2439 = vmatpush.bf16.msra.mxu0 %v2329
        %2440 = vmatpush.bf16.msra.mxu0 %v2325
        %2441 = vmatpush.bf16.msra.mxu0 %v2321
        %2442 = vmatpush.bf16.msra.mxu0 %v2317
        %2443 = vmatmul.bf16.gmra.mxu0 %v2211
        %v2444 = vpop.f32.mrf.mxu0
        %v2445 = vadd.f32 0.0, %v2444
        %v2446 = vpop.f32.mrf.mxu0
        %v2447 = vadd.f32 0.0, %v2446
        %2448 = vmatmul.bf16.gmra.mxu0 %v2212
        %v2449 = vpop.f32.mrf.mxu0
        %v2450 = vadd.f32 0.0, %v2449
        %v2451 = vpop.f32.mrf.mxu0
        %v2452 = vadd.f32 0.0, %v2451
        %2453 = vmatmul.bf16.gmra.mxu0 %v2213
        %v2454 = vpop.f32.mrf.mxu0
        %v2455 = vadd.f32 0.0, %v2454
        %v2456 = vpop.f32.mrf.mxu0
        %v2457 = vadd.f32 0.0, %v2456
        %2458 = vmatmul.bf16.gmra.mxu0 %v2214
        %v2459 = vpop.f32.mrf.mxu0
        %v2460 = vadd.f32 0.0, %v2459
        %v2461 = vpop.f32.mrf.mxu0
        %2462 = vdwg.mxu0
        %2463 = vmatpush.bf16.msra.mxu0 %v2346
        %2464 = vmatpush.bf16.msra.mxu0 %v2342
        %2465 = vmatpush.bf16.msra.mxu0 %v2338
        %2466 = vmatpush.bf16.msra.mxu0 %v2334
        %2467 = vmatpush.bf16.msra.mxu0 %v2330
        %2468 = vmatpush.bf16.msra.mxu0 %v2326
        %2469 = vmatpush.bf16.msra.mxu0 %v2322
        %2470 = vmatpush.bf16.msra.mxu0 %v2318
        %2471 = vmatmul.bf16.gmra.mxu0 %v2211
        %v2472 = vpop.f32.mrf.mxu0
        %v2473 = vadd.f32 0.0, %v2472
        %v2474 = vpop.f32.mrf.mxu0
        %v2475 = vadd.f32 0.0, %v2474
        %2476 = vmatmul.bf16.gmra.mxu0 %v2212
        %v2477 = vpop.f32.mrf.mxu0
        %v2478 = vadd.f32 0.0, %v2477
        %v2479 = vpop.f32.mrf.mxu0
        %v2480 = vadd.f32 0.0, %v2479
        %2481 = vmatmul.bf16.gmra.mxu0 %v2213
        %v2482 = vpop.f32.mrf.mxu0
        %v2483 = vadd.f32 0.0, %v2482
        %v2484 = vpop.f32.mrf.mxu0
        %v2485 = vadd.f32 0.0, %v2484
        %2486 = vmatmul.bf16.gmra.mxu0 %v2214
        %v2487 = vpop.f32.mrf.mxu0
        %v2488 = vadd.f32 0.0, %v2487
        %v2489 = vpop.f32.mrf.mxu0
        %2490 = vdwg.mxu0
        %v2491 = vadd.f32 %v2129, %v2389
        %v2492 = vadd.f32 %v2130, %v2417
        %v2493 = vadd.f32 %v2131, %v2445
        %v2494 = vadd.f32 %v2132, %v2473
        %v2495 = vadd.f32 %v2133, %v2391
        %v2496 = vadd.f32 %v2134, %v2419
        %v2497 = vadd.f32 %v2135, %v2447
        %v2498 = vadd.f32 %v2136, %v2475
        %v2499 = vadd.f32 %v2137, %v2394
        %v2500 = vadd.f32 %v2138, %v2422
        %v2501 = vadd.f32 %v2139, %v2450
        %v2502 = vadd.f32 %v2140, %v2478
        %v2503 = vadd.f32 %v2141, %v2396
        %v2504 = vadd.f32 %v2142, %v2424
        %v2505 = vadd.f32 %v2143, %v2452
        %v2506 = vadd.f32 %v2144, %v2480
        %v2507 = vadd.f32 %v2145, %v2399
        %v2508 = vadd.f32 %v2146, %v2427
        %v2509 = vadd.f32 %v2147, %v2455
        %v2510 = vadd.f32 %v2148, %v2483
        %v2511 = vadd.f32 %v2149, %v2401
        %v2512 = vadd.f32 %v2150, %v2429
        %v2513 = vadd.f32 %v2151, %v2457
        %v2514 = vadd.f32 %v2152, %v2485
        %v2515 = vadd.f32 %v2153, %v2404
        %v2516 = vadd.f32 %v2154, %v2432
        %v2517 = vadd.f32 %v2155, %v2460
        %v2518 = vadd.f32 %v2156, %v2488
        %v2519 = vld [vmem:[#allocation2 + $0x8] sm:$0xf]
        %v2520 = vld [vmem:[#allocation2 + $0xc] sm:$0xf]
        %v2521 = vld [vmem:[#allocation2 + $0x10] sm:$0xf]
        %v2522 = vld [vmem:[#allocation2 + $0x14] sm:$0xf]
        %v2523 = vld [vmem:[#allocation2 + $0x18] sm:$0xf]
        %v2524 = vld [vmem:[#allocation2 + $0x1c] sm:$0xf]
        %v2525 = vld [vmem:[#allocation2 + $0x20] sm:$0xf]
        %s2526 = scalar_lea.vmem %s3, 1024
        %v2527 = vld [vmem:[%s2526] sm:$0xff]
        %v2528 = vld [vmem:[%s2526 + $0x8] sm:$0xff]
        %v2529 = vld [vmem:[%s2526 + $0x10] sm:$0xff]
        %v2530 = vld [vmem:[%s2526 + $0x18] sm:$0xff]
        %v2531 = vld [vmem:[%s2526 + $0x20] sm:$0xff]
        %v2532 = vld [vmem:[%s2526 + $0x28] sm:$0xff]
        %v2533 = vld [vmem:[%s2526 + $0x30] sm:$0xff]
        %v2534 = vld [vmem:[%s2526 + $0x38] sm:$0xff]
        %v2535 = vld [vmem:[%s2526 + $0x40] sm:$0xff]
        %v2536 = vld [vmem:[%s2526 + $0x48] sm:$0xff]
        %v2537 = vld [vmem:[%s2526 + $0x50] sm:$0xff]
        %v2538 = vld [vmem:[%s2526 + $0x58] sm:$0xff]
        %v2539 = vld [vmem:[%s2526 + $0x60] sm:$0xff]
        %v2540 = vld [vmem:[%s2526 + $0x68] sm:$0xff]
        %v2541 = vld [vmem:[%s2526 + $0x70] sm:$0xff]
        %v2542 = vld [vmem:[%s2526 + $0x78] sm:$0xff]
        %v2543 = vld [vmem:[%s2526 + $0x80] sm:$0xff]
        %v2544 = vld [vmem:[%s2526 + $0x88] sm:$0xff]
        %v2545 = vld [vmem:[%s2526 + $0x90] sm:$0xff]
        %v2546 = vld [vmem:[%s2526 + $0x98] sm:$0xff]
        %v2547 = vld [vmem:[%s2526 + $0xa0] sm:$0xff]
        %v2548 = vld [vmem:[%s2526 + $0xa8] sm:$0xff]
        %v2549 = vld [vmem:[%s2526 + $0xb0] sm:$0xff]
        %v2550 = vld [vmem:[%s2526 + $0xb8] sm:$0xff]
        %v2551 = vld [vmem:[%s2526 + $0xc0] sm:$0xff]
        %v2552 = vld [vmem:[%s2526 + $0xc8] sm:$0xff]
        %v2553 = vld [vmem:[%s2526 + $0xd0] sm:$0xff]
        %v2554 = vld [vmem:[%s2526 + $0xd8] sm:$0xff]
        %v2555 = vld [vmem:[%s2526 + $0xe0] sm:$0xff]
        %v2556 = vld [vmem:[%s2526 + $0xe8] sm:$0xff]
        %v2557 = vld [vmem:[%s2526 + $0xf0] sm:$0xff]
        %v2558 = vld [vmem:[%s2526 + $0xf8] sm:$0xff]
        %v2566 = vunpack.c.l.b16 %v2519
        %v2567 = vunpack.c.l.b16 %v2520
        %v2568 = vunpack.c.l.b16 %v2521
        %v2569 = vunpack.c.l.b16 %v2522
        %v2570 = vunpack.c.l.b16 %v2523
        %v2571 = vunpack.c.l.b16 %v2524
        %v2572 = vunpack.c.l.b16 %v2525
        %v2573 = vpack.c.b16 %v2567, %v2566
        %v2574 = vpack.c.b16 %v2569, %v2568
        %v2575 = vpack.c.b16 %v2571, %v2570
        %v2576 = vpack.c.b16 %v2572, %v2572
        %v2613 = vunpack.c.l.b16 %v2527
        %v2614 = vunpack.c.h.b16 %v2527
        %v2615 = vunpack.c.l.b16 %v2528
        %v2616 = vunpack.c.h.b16 %v2528
        %v2617 = vunpack.c.l.b16 %v2529
        %v2618 = vunpack.c.h.b16 %v2529
        %v2619 = vunpack.c.l.b16 %v2530
        %v2620 = vunpack.c.h.b16 %v2530
        %v2621 = vunpack.c.l.b16 %v2531
        %v2622 = vunpack.c.h.b16 %v2531
        %v2623 = vunpack.c.l.b16 %v2532
        %v2624 = vunpack.c.h.b16 %v2532
        %v2625 = vunpack.c.l.b16 %v2533
        %v2626 = vunpack.c.h.b16 %v2533
        %v2627 = vunpack.c.l.b16 %v2534
        %v2628 = vunpack.c.h.b16 %v2534
        %v2629 = vunpack.c.l.b16 %v2535
        %v2630 = vunpack.c.h.b16 %v2535
        %v2631 = vunpack.c.l.b16 %v2536
        %v2632 = vunpack.c.h.b16 %v2536
        %v2633 = vunpack.c.l.b16 %v2537
        %v2634 = vunpack.c.h.b16 %v2537
        %v2635 = vunpack.c.l.b16 %v2538
        %v2636 = vunpack.c.h.b16 %v2538
        %v2637 = vunpack.c.l.b16 %v2539
        %v2638 = vunpack.c.h.b16 %v2539
        %v2639 = vunpack.c.l.b16 %v2540
        %v2640 = vunpack.c.h.b16 %v2540
        %v2641 = vunpack.c.l.b16 %v2541
        %v2642 = vunpack.c.h.b16 %v2541
        %v2643 = vunpack.c.l.b16 %v2542
        %v2644 = vunpack.c.h.b16 %v2542
        %v2645 = vunpack.c.l.b16 %v2543
        %v2646 = vunpack.c.h.b16 %v2543
        %v2647 = vunpack.c.l.b16 %v2544
        %v2648 = vunpack.c.h.b16 %v2544
        %v2649 = vunpack.c.l.b16 %v2545
        %v2650 = vunpack.c.h.b16 %v2545
        %v2651 = vunpack.c.l.b16 %v2546
        %v2652 = vunpack.c.h.b16 %v2546
        %v2653 = vunpack.c.l.b16 %v2547
        %v2654 = vunpack.c.h.b16 %v2547
        %v2655 = vunpack.c.l.b16 %v2548
        %v2656 = vunpack.c.h.b16 %v2548
        %v2657 = vunpack.c.l.b16 %v2549
        %v2658 = vunpack.c.h.b16 %v2549
        %v2659 = vunpack.c.l.b16 %v2550
        %v2660 = vunpack.c.h.b16 %v2550
        %v2661 = vunpack.c.l.b16 %v2551
        %v2662 = vunpack.c.h.b16 %v2551
        %v2663 = vunpack.c.l.b16 %v2552
        %v2664 = vunpack.c.h.b16 %v2552
        %v2665 = vunpack.c.l.b16 %v2553
        %v2666 = vunpack.c.h.b16 %v2553
        %v2667 = vunpack.c.l.b16 %v2554
        %v2668 = vunpack.c.h.b16 %v2554
        %v2669 = vunpack.c.l.b16 %v2555
        %v2670 = vunpack.c.h.b16 %v2555
        %v2671 = vunpack.c.l.b16 %v2556
        %v2672 = vunpack.c.h.b16 %v2556
        %v2673 = vunpack.c.l.b16 %v2557
        %v2674 = vunpack.c.h.b16 %v2557
        %v2675 = vunpack.c.l.b16 %v2558
        %v2676 = vunpack.c.h.b16 %v2558
        %v2677 = vpack.c.b16 %v2617, %v2613
        %v2678 = vpack.c.b16 %v2618, %v2614
        %v2679 = vpack.c.b16 %v2619, %v2615
        %v2680 = vpack.c.b16 %v2620, %v2616
        %v2681 = vpack.c.b16 %v2625, %v2621
        %v2682 = vpack.c.b16 %v2626, %v2622
        %v2683 = vpack.c.b16 %v2627, %v2623
        %v2684 = vpack.c.b16 %v2628, %v2624
        %v2685 = vpack.c.b16 %v2633, %v2629
        %v2686 = vpack.c.b16 %v2634, %v2630
        %v2687 = vpack.c.b16 %v2635, %v2631
        %v2688 = vpack.c.b16 %v2636, %v2632
        %v2689 = vpack.c.b16 %v2641, %v2637
        %v2690 = vpack.c.b16 %v2642, %v2638
        %v2691 = vpack.c.b16 %v2643, %v2639
        %v2692 = vpack.c.b16 %v2644, %v2640
        %v2693 = vpack.c.b16 %v2649, %v2645
        %v2694 = vpack.c.b16 %v2650, %v2646
        %v2695 = vpack.c.b16 %v2651, %v2647
        %v2696 = vpack.c.b16 %v2652, %v2648
        %v2697 = vpack.c.b16 %v2657, %v2653
        %v2698 = vpack.c.b16 %v2658, %v2654
        %v2699 = vpack.c.b16 %v2659, %v2655
        %v2700 = vpack.c.b16 %v2660, %v2656
        %v2701 = vpack.c.b16 %v2665, %v2661
        %v2702 = vpack.c.b16 %v2666, %v2662
        %v2703 = vpack.c.b16 %v2667, %v2663
        %v2704 = vpack.c.b16 %v2668, %v2664
        %v2705 = vpack.c.b16 %v2673, %v2669
        %v2706 = vpack.c.b16 %v2674, %v2670
        %v2707 = vpack.c.b16 %v2675, %v2671
        %v2708 = vpack.c.b16 %v2676, %v2672
        %2741 = vmatpush.bf16.msra.mxu0 %v2705
        %2742 = vmatpush.bf16.msra.mxu0 %v2701
        %2743 = vmatpush.bf16.msra.mxu0 %v2697
        %2744 = vmatpush.bf16.msra.mxu0 %v2693
        %2745 = vmatpush.bf16.msra.mxu0 %v2689
        %2746 = vmatpush.bf16.msra.mxu0 %v2685
        %2747 = vmatpush.bf16.msra.mxu0 %v2681
        %2748 = vmatpush.bf16.msra.mxu0 %v2677
        %2749 = vmatmul.bf16.gmra.mxu0 %v2573
        %v2750 = vpop.f32.mrf.mxu0
        %v2751 = vadd.f32 0.0, %v2750
        %v2752 = vpop.f32.mrf.mxu0
        %v2753 = vadd.f32 0.0, %v2752
        %2754 = vmatmul.bf16.gmra.mxu0 %v2574
        %v2755 = vpop.f32.mrf.mxu0
        %v2756 = vadd.f32 0.0, %v2755
        %v2757 = vpop.f32.mrf.mxu0
        %v2758 = vadd.f32 0.0, %v2757
        %2759 = vmatmul.bf16.gmra.mxu0 %v2575
        %v2760 = vpop.f32.mrf.mxu0
        %v2761 = vadd.f32 0.0, %v2760
        %v2762 = vpop.f32.mrf.mxu0
        %v2763 = vadd.f32 0.0, %v2762
        %2764 = vmatmul.bf16.gmra.mxu0 %v2576
        %v2765 = vpop.f32.mrf.mxu0
        %v2766 = vadd.f32 0.0, %v2765
        %v2767 = vpop.f32.mrf.mxu0
        %2768 = vdwg.mxu0
        %2769 = vmatpush.bf16.msra.mxu0 %v2706
        %2770 = vmatpush.bf16.msra.mxu0 %v2702
        %2771 = vmatpush.bf16.msra.mxu0 %v2698
        %2772 = vmatpush.bf16.msra.mxu0 %v2694
        %2773 = vmatpush.bf16.msra.mxu0 %v2690
        %2774 = vmatpush.bf16.msra.mxu0 %v2686
        %2775 = vmatpush.bf16.msra.mxu0 %v2682
        %2776 = vmatpush.bf16.msra.mxu0 %v2678
        %2777 = vmatmul.bf16.gmra.mxu0 %v2573
        %v2778 = vpop.f32.mrf.mxu0
        %v2779 = vadd.f32 0.0, %v2778
        %v2780 = vpop.f32.mrf.mxu0
        %v2781 = vadd.f32 0.0, %v2780
        %2782 = vmatmul.bf16.gmra.mxu0 %v2574
        %v2783 = vpop.f32.mrf.mxu0
        %v2784 = vadd.f32 0.0, %v2783
        %v2785 = vpop.f32.mrf.mxu0
        %v2786 = vadd.f32 0.0, %v2785
        %2787 = vmatmul.bf16.gmra.mxu0 %v2575
        %v2788 = vpop.f32.mrf.mxu0
        %v2789 = vadd.f32 0.0, %v2788
        %v2790 = vpop.f32.mrf.mxu0
        %v2791 = vadd.f32 0.0, %v2790
        %2792 = vmatmul.bf16.gmra.mxu0 %v2576
        %v2793 = vpop.f32.mrf.mxu0
        %v2794 = vadd.f32 0.0, %v2793
        %v2795 = vpop.f32.mrf.mxu0
        %2796 = vdwg.mxu0
        %2797 = vmatpush.bf16.msra.mxu0 %v2707
        %2798 = vmatpush.bf16.msra.mxu0 %v2703
        %2799 = vmatpush.bf16.msra.mxu0 %v2699
        %2800 = vmatpush.bf16.msra.mxu0 %v2695
        %2801 = vmatpush.bf16.msra.mxu0 %v2691
        %2802 = vmatpush.bf16.msra.mxu0 %v2687
        %2803 = vmatpush.bf16.msra.mxu0 %v2683
        %2804 = vmatpush.bf16.msra.mxu0 %v2679
        %2805 = vmatmul.bf16.gmra.mxu0 %v2573
        %v2806 = vpop.f32.mrf.mxu0
        %v2807 = vadd.f32 0.0, %v2806
        %v2808 = vpop.f32.mrf.mxu0
        %v2809 = vadd.f32 0.0, %v2808
        %2810 = vmatmul.bf16.gmra.mxu0 %v2574
        %v2811 = vpop.f32.mrf.mxu0
        %v2812 = vadd.f32 0.0, %v2811
        %v2813 = vpop.f32.mrf.mxu0
        %v2814 = vadd.f32 0.0, %v2813
        %2815 = vmatmul.bf16.gmra.mxu0 %v2575
        %v2816 = vpop.f32.mrf.mxu0
        %v2817 = vadd.f32 0.0, %v2816
        %v2818 = vpop.f32.mrf.mxu0
        %v2819 = vadd.f32 0.0, %v2818
        %2820 = vmatmul.bf16.gmra.mxu0 %v2576
        %v2821 = vpop.f32.mrf.mxu0
        %v2822 = vadd.f32 0.0, %v2821
        %v2823 = vpop.f32.mrf.mxu0
        %2824 = vdwg.mxu0
        %2825 = vmatpush.bf16.msra.mxu0 %v2708
        %2826 = vmatpush.bf16.msra.mxu0 %v2704
        %2827 = vmatpush.bf16.msra.mxu0 %v2700
        %2828 = vmatpush.bf16.msra.mxu0 %v2696
        %2829 = vmatpush.bf16.msra.mxu0 %v2692
        %2830 = vmatpush.bf16.msra.mxu0 %v2688
        %2831 = vmatpush.bf16.msra.mxu0 %v2684
        %2832 = vmatpush.bf16.msra.mxu0 %v2680
        %2833 = vmatmul.bf16.gmra.mxu0 %v2573
        %v2834 = vpop.f32.mrf.mxu0
        %v2835 = vadd.f32 0.0, %v2834
        %v2836 = vpop.f32.mrf.mxu0
        %v2837 = vadd.f32 0.0, %v2836
        %2838 = vmatmul.bf16.gmra.mxu0 %v2574
        %v2839 = vpop.f32.mrf.mxu0
        %v2840 = vadd.f32 0.0, %v2839
        %v2841 = vpop.f32.mrf.mxu0
        %v2842 = vadd.f32 0.0, %v2841
        %2843 = vmatmul.bf16.gmra.mxu0 %v2575
        %v2844 = vpop.f32.mrf.mxu0
        %v2845 = vadd.f32 0.0, %v2844
        %v2846 = vpop.f32.mrf.mxu0
        %v2847 = vadd.f32 0.0, %v2846
        %2848 = vmatmul.bf16.gmra.mxu0 %v2576
        %v2849 = vpop.f32.mrf.mxu0
        %v2850 = vadd.f32 0.0, %v2849
        %v2851 = vpop.f32.mrf.mxu0
        %2852 = vdwg.mxu0
        %v2853 = vadd.f32 %v2491, %v2751
        %v2854 = vadd.f32 %v2492, %v2779
        %v2855 = vadd.f32 %v2493, %v2807
        %v2856 = vadd.f32 %v2494, %v2835
        %v2857 = vadd.f32 %v2495, %v2753
        %v2858 = vadd.f32 %v2496, %v2781
        %v2859 = vadd.f32 %v2497, %v2809
        %v2860 = vadd.f32 %v2498, %v2837
        %v2861 = vadd.f32 %v2499, %v2756
        %v2862 = vadd.f32 %v2500, %v2784
        %v2863 = vadd.f32 %v2501, %v2812
        %v2864 = vadd.f32 %v2502, %v2840
        %v2865 = vadd.f32 %v2503, %v2758
        %v2866 = vadd.f32 %v2504, %v2786
        %v2867 = vadd.f32 %v2505, %v2814
        %v2868 = vadd.f32 %v2506, %v2842
        %v2869 = vadd.f32 %v2507, %v2761
        %v2870 = vadd.f32 %v2508, %v2789
        %v2871 = vadd.f32 %v2509, %v2817
        %v2872 = vadd.f32 %v2510, %v2845
        %v2873 = vadd.f32 %v2511, %v2763
        %v2874 = vadd.f32 %v2512, %v2791
        %v2875 = vadd.f32 %v2513, %v2819
        %v2876 = vadd.f32 %v2514, %v2847
        %v2877 = vadd.f32 %v2515, %v2766
        %v2878 = vadd.f32 %v2516, %v2794
        %v2879 = vadd.f32 %v2517, %v2822
        %v2880 = vadd.f32 %v2518, %v2850
        %v2881 = vld [vmem:[#allocation3 + $0x8] sm:$0xf]
        %v2882 = vld [vmem:[#allocation3 + $0xc] sm:$0xf]
        %v2883 = vld [vmem:[#allocation3 + $0x10] sm:$0xf]
        %v2884 = vld [vmem:[#allocation3 + $0x14] sm:$0xf]
        %v2885 = vld [vmem:[#allocation3 + $0x18] sm:$0xf]
        %v2886 = vld [vmem:[#allocation3 + $0x1c] sm:$0xf]
        %v2887 = vld [vmem:[#allocation3 + $0x20] sm:$0xf]
        %s2888 = scalar_lea.vmem %s3, 1280
        %v2889 = vld [vmem:[%s2888] sm:$0xff]
        %v2890 = vld [vmem:[%s2888 + $0x8] sm:$0xff]
        %v2891 = vld [vmem:[%s2888 + $0x10] sm:$0xff]
        %v2892 = vld [vmem:[%s2888 + $0x18] sm:$0xff]
        %v2893 = vld [vmem:[%s2888 + $0x20] sm:$0xff]
        %v2894 = vld [vmem:[%s2888 + $0x28] sm:$0xff]
        %v2895 = vld [vmem:[%s2888 + $0x30] sm:$0xff]
        %v2896 = vld [vmem:[%s2888 + $0x38] sm:$0xff]
        %v2897 = vld [vmem:[%s2888 + $0x40] sm:$0xff]
        %v2898 = vld [vmem:[%s2888 + $0x48] sm:$0xff]
        %v2899 = vld [vmem:[%s2888 + $0x50] sm:$0xff]
        %v2900 = vld [vmem:[%s2888 + $0x58] sm:$0xff]
        %v2901 = vld [vmem:[%s2888 + $0x60] sm:$0xff]
        %v2902 = vld [vmem:[%s2888 + $0x68] sm:$0xff]
        %v2903 = vld [vmem:[%s2888 + $0x70] sm:$0xff]
        %v2904 = vld [vmem:[%s2888 + $0x78] sm:$0xff]
        %v2905 = vld [vmem:[%s2888 + $0x80] sm:$0xff]
        %v2906 = vld [vmem:[%s2888 + $0x88] sm:$0xff]
        %v2907 = vld [vmem:[%s2888 + $0x90] sm:$0xff]
        %v2908 = vld [vmem:[%s2888 + $0x98] sm:$0xff]
        %v2909 = vld [vmem:[%s2888 + $0xa0] sm:$0xff]
        %v2910 = vld [vmem:[%s2888 + $0xa8] sm:$0xff]
        %v2911 = vld [vmem:[%s2888 + $0xb0] sm:$0xff]
        %v2912 = vld [vmem:[%s2888 + $0xb8] sm:$0xff]
        %v2913 = vld [vmem:[%s2888 + $0xc0] sm:$0xff]
        %v2914 = vld [vmem:[%s2888 + $0xc8] sm:$0xff]
        %v2915 = vld [vmem:[%s2888 + $0xd0] sm:$0xff]
        %v2916 = vld [vmem:[%s2888 + $0xd8] sm:$0xff]
        %v2917 = vld [vmem:[%s2888 + $0xe0] sm:$0xff]
        %v2918 = vld [vmem:[%s2888 + $0xe8] sm:$0xff]
        %v2919 = vld [vmem:[%s2888 + $0xf0] sm:$0xff]
        %v2920 = vld [vmem:[%s2888 + $0xf8] sm:$0xff]
        %v2928 = vunpack.c.l.b16 %v2881
        %v2929 = vunpack.c.l.b16 %v2882
        %v2930 = vunpack.c.l.b16 %v2883
        %v2931 = vunpack.c.l.b16 %v2884
        %v2932 = vunpack.c.l.b16 %v2885
        %v2933 = vunpack.c.l.b16 %v2886
        %v2934 = vunpack.c.l.b16 %v2887
        %v2935 = vpack.c.b16 %v2929, %v2928
        %v2936 = vpack.c.b16 %v2931, %v2930
        %v2937 = vpack.c.b16 %v2933, %v2932
        %v2938 = vpack.c.b16 %v2934, %v2934
        %v2975 = vunpack.c.l.b16 %v2889
        %v2976 = vunpack.c.h.b16 %v2889
        %v2977 = vunpack.c.l.b16 %v2890
        %v2978 = vunpack.c.h.b16 %v2890
        %v2979 = vunpack.c.l.b16 %v2891
        %v2980 = vunpack.c.h.b16 %v2891
        %v2981 = vunpack.c.l.b16 %v2892
        %v2982 = vunpack.c.h.b16 %v2892
        %v2983 = vunpack.c.l.b16 %v2893
        %v2984 = vunpack.c.h.b16 %v2893
        %v2985 = vunpack.c.l.b16 %v2894
        %v2986 = vunpack.c.h.b16 %v2894
        %v2987 = vunpack.c.l.b16 %v2895
        %v2988 = vunpack.c.h.b16 %v2895
        %v2989 = vunpack.c.l.b16 %v2896
        %v2990 = vunpack.c.h.b16 %v2896
        %v2991 = vunpack.c.l.b16 %v2897
        %v2992 = vunpack.c.h.b16 %v2897
        %v2993 = vunpack.c.l.b16 %v2898
        %v2994 = vunpack.c.h.b16 %v2898
        %v2995 = vunpack.c.l.b16 %v2899
        %v2996 = vunpack.c.h.b16 %v2899
        %v2997 = vunpack.c.l.b16 %v2900
        %v2998 = vunpack.c.h.b16 %v2900
        %v2999 = vunpack.c.l.b16 %v2901
        %v3000 = vunpack.c.h.b16 %v2901
        %v3001 = vunpack.c.l.b16 %v2902
        %v3002 = vunpack.c.h.b16 %v2902
        %v3003 = vunpack.c.l.b16 %v2903
        %v3004 = vunpack.c.h.b16 %v2903
        %v3005 = vunpack.c.l.b16 %v2904
        %v3006 = vunpack.c.h.b16 %v2904
        %v3007 = vunpack.c.l.b16 %v2905
        %v3008 = vunpack.c.h.b16 %v2905
        %v3009 = vunpack.c.l.b16 %v2906
        %v3010 = vunpack.c.h.b16 %v2906
        %v3011 = vunpack.c.l.b16 %v2907
        %v3012 = vunpack.c.h.b16 %v2907
        %v3013 = vunpack.c.l.b16 %v2908
        %v3014 = vunpack.c.h.b16 %v2908
        %v3015 = vunpack.c.l.b16 %v2909
        %v3016 = vunpack.c.h.b16 %v2909
        %v3017 = vunpack.c.l.b16 %v2910
        %v3018 = vunpack.c.h.b16 %v2910
        %v3019 = vunpack.c.l.b16 %v2911
        %v3020 = vunpack.c.h.b16 %v2911
        %v3021 = vunpack.c.l.b16 %v2912
        %v3022 = vunpack.c.h.b16 %v2912
        %v3023 = vunpack.c.l.b16 %v2913
        %v3024 = vunpack.c.h.b16 %v2913
        %v3025 = vunpack.c.l.b16 %v2914
        %v3026 = vunpack.c.h.b16 %v2914
        %v3027 = vunpack.c.l.b16 %v2915
        %v3028 = vunpack.c.h.b16 %v2915
        %v3029 = vunpack.c.l.b16 %v2916
        %v3030 = vunpack.c.h.b16 %v2916
        %v3031 = vunpack.c.l.b16 %v2917
        %v3032 = vunpack.c.h.b16 %v2917
        %v3033 = vunpack.c.l.b16 %v2918
        %v3034 = vunpack.c.h.b16 %v2918
        %v3035 = vunpack.c.l.b16 %v2919
        %v3036 = vunpack.c.h.b16 %v2919
        %v3037 = vunpack.c.l.b16 %v2920
        %v3038 = vunpack.c.h.b16 %v2920
        %v3039 = vpack.c.b16 %v2979, %v2975
        %v3040 = vpack.c.b16 %v2980, %v2976
        %v3041 = vpack.c.b16 %v2981, %v2977
        %v3042 = vpack.c.b16 %v2982, %v2978
        %v3043 = vpack.c.b16 %v2987, %v2983
        %v3044 = vpack.c.b16 %v2988, %v2984
        %v3045 = vpack.c.b16 %v2989, %v2985
        %v3046 = vpack.c.b16 %v2990, %v2986
        %v3047 = vpack.c.b16 %v2995, %v2991
        %v3048 = vpack.c.b16 %v2996, %v2992
        %v3049 = vpack.c.b16 %v2997, %v2993
        %v3050 = vpack.c.b16 %v2998, %v2994
        %v3051 = vpack.c.b16 %v3003, %v2999
        %v3052 = vpack.c.b16 %v3004, %v3000
        %v3053 = vpack.c.b16 %v3005, %v3001
        %v3054 = vpack.c.b16 %v3006, %v3002
        %v3055 = vpack.c.b16 %v3011, %v3007
        %v3056 = vpack.c.b16 %v3012, %v3008
        %v3057 = vpack.c.b16 %v3013, %v3009
        %v3058 = vpack.c.b16 %v3014, %v3010
        %v3059 = vpack.c.b16 %v3019, %v3015
        %v3060 = vpack.c.b16 %v3020, %v3016
        %v3061 = vpack.c.b16 %v3021, %v3017
        %v3062 = vpack.c.b16 %v3022, %v3018
        %v3063 = vpack.c.b16 %v3027, %v3023
        %v3064 = vpack.c.b16 %v3028, %v3024
        %v3065 = vpack.c.b16 %v3029, %v3025
        %v3066 = vpack.c.b16 %v3030, %v3026
        %v3067 = vpack.c.b16 %v3035, %v3031
        %v3068 = vpack.c.b16 %v3036, %v3032
        %v3069 = vpack.c.b16 %v3037, %v3033
        %v3070 = vpack.c.b16 %v3038, %v3034
        %3103 = vmatpush.bf16.msra.mxu0 %v3067
        %3104 = vmatpush.bf16.msra.mxu0 %v3063
        %3105 = vmatpush.bf16.msra.mxu0 %v3059
        %3106 = vmatpush.bf16.msra.mxu0 %v3055
        %3107 = vmatpush.bf16.msra.mxu0 %v3051
        %3108 = vmatpush.bf16.msra.mxu0 %v3047
        %3109 = vmatpush.bf16.msra.mxu0 %v3043
        %3110 = vmatpush.bf16.msra.mxu0 %v3039
        %3111 = vmatmul.bf16.gmra.mxu0 %v2935
        %v3112 = vpop.f32.mrf.mxu0
        %v3113 = vadd.f32 0.0, %v3112
        %v3114 = vpop.f32.mrf.mxu0
        %v3115 = vadd.f32 0.0, %v3114
        %3116 = vmatmul.bf16.gmra.mxu0 %v2936
        %v3117 = vpop.f32.mrf.mxu0
        %v3118 = vadd.f32 0.0, %v3117
        %v3119 = vpop.f32.mrf.mxu0
        %v3120 = vadd.f32 0.0, %v3119
        %3121 = vmatmul.bf16.gmra.mxu0 %v2937
        %v3122 = vpop.f32.mrf.mxu0
        %v3123 = vadd.f32 0.0, %v3122
        %v3124 = vpop.f32.mrf.mxu0
        %v3125 = vadd.f32 0.0, %v3124
        %3126 = vmatmul.bf16.gmra.mxu0 %v2938
        %v3127 = vpop.f32.mrf.mxu0
        %v3128 = vadd.f32 0.0, %v3127
        %v3129 = vpop.f32.mrf.mxu0
        %3130 = vdwg.mxu0
        %3131 = vmatpush.bf16.msra.mxu0 %v3068
        %3132 = vmatpush.bf16.msra.mxu0 %v3064
        %3133 = vmatpush.bf16.msra.mxu0 %v3060
        %3134 = vmatpush.bf16.msra.mxu0 %v3056
        %3135 = vmatpush.bf16.msra.mxu0 %v3052
        %3136 = vmatpush.bf16.msra.mxu0 %v3048
        %3137 = vmatpush.bf16.msra.mxu0 %v3044
        %3138 = vmatpush.bf16.msra.mxu0 %v3040
        %3139 = vmatmul.bf16.gmra.mxu0 %v2935
        %v3140 = vpop.f32.mrf.mxu0
        %v3141 = vadd.f32 0.0, %v3140
        %v3142 = vpop.f32.mrf.mxu0
        %v3143 = vadd.f32 0.0, %v3142
        %3144 = vmatmul.bf16.gmra.mxu0 %v2936
        %v3145 = vpop.f32.mrf.mxu0
        %v3146 = vadd.f32 0.0, %v3145
        %v3147 = vpop.f32.mrf.mxu0
        %v3148 = vadd.f32 0.0, %v3147
        %3149 = vmatmul.bf16.gmra.mxu0 %v2937
        %v3150 = vpop.f32.mrf.mxu0
        %v3151 = vadd.f32 0.0, %v3150
        %v3152 = vpop.f32.mrf.mxu0
        %v3153 = vadd.f32 0.0, %v3152
        %3154 = vmatmul.bf16.gmra.mxu0 %v2938
        %v3155 = vpop.f32.mrf.mxu0
        %v3156 = vadd.f32 0.0, %v3155
        %v3157 = vpop.f32.mrf.mxu0
        %3158 = vdwg.mxu0
        %3159 = vmatpush.bf16.msra.mxu0 %v3069
        %3160 = vmatpush.bf16.msra.mxu0 %v3065
        %3161 = vmatpush.bf16.msra.mxu0 %v3061
        %3162 = vmatpush.bf16.msra.mxu0 %v3057
        %3163 = vmatpush.bf16.msra.mxu0 %v3053
        %3164 = vmatpush.bf16.msra.mxu0 %v3049
        %3165 = vmatpush.bf16.msra.mxu0 %v3045
        %3166 = vmatpush.bf16.msra.mxu0 %v3041
        %3167 = vmatmul.bf16.gmra.mxu0 %v2935
        %v3168 = vpop.f32.mrf.mxu0
        %v3169 = vadd.f32 0.0, %v3168
        %v3170 = vpop.f32.mrf.mxu0
        %v3171 = vadd.f32 0.0, %v3170
        %3172 = vmatmul.bf16.gmra.mxu0 %v2936
        %v3173 = vpop.f32.mrf.mxu0
        %v3174 = vadd.f32 0.0, %v3173
        %v3175 = vpop.f32.mrf.mxu0
        %v3176 = vadd.f32 0.0, %v3175
        %3177 = vmatmul.bf16.gmra.mxu0 %v2937
        %v3178 = vpop.f32.mrf.mxu0
        %v3179 = vadd.f32 0.0, %v3178
        %v3180 = vpop.f32.mrf.mxu0
        %v3181 = vadd.f32 0.0, %v3180
        %3182 = vmatmul.bf16.gmra.mxu0 %v2938
        %v3183 = vpop.f32.mrf.mxu0
        %v3184 = vadd.f32 0.0, %v3183
        %v3185 = vpop.f32.mrf.mxu0
        %3186 = vdwg.mxu0
        %3187 = vmatpush.bf16.msra.mxu0 %v3070
        %3188 = vmatpush.bf16.msra.mxu0 %v3066
        %3189 = vmatpush.bf16.msra.mxu0 %v3062
        %3190 = vmatpush.bf16.msra.mxu0 %v3058
        %3191 = vmatpush.bf16.msra.mxu0 %v3054
        %3192 = vmatpush.bf16.msra.mxu0 %v3050
        %3193 = vmatpush.bf16.msra.mxu0 %v3046
        %3194 = vmatpush.bf16.msra.mxu0 %v3042
        %3195 = vmatmul.bf16.gmra.mxu0 %v2935
        %v3196 = vpop.f32.mrf.mxu0
        %v3197 = vadd.f32 0.0, %v3196
        %v3198 = vpop.f32.mrf.mxu0
        %v3199 = vadd.f32 0.0, %v3198
        %3200 = vmatmul.bf16.gmra.mxu0 %v2936
        %v3201 = vpop.f32.mrf.mxu0
        %v3202 = vadd.f32 0.0, %v3201
        %v3203 = vpop.f32.mrf.mxu0
        %v3204 = vadd.f32 0.0, %v3203
        %3205 = vmatmul.bf16.gmra.mxu0 %v2937
        %v3206 = vpop.f32.mrf.mxu0
        %v3207 = vadd.f32 0.0, %v3206
        %v3208 = vpop.f32.mrf.mxu0
        %v3209 = vadd.f32 0.0, %v3208
        %3210 = vmatmul.bf16.gmra.mxu0 %v2938
        %v3211 = vpop.f32.mrf.mxu0
        %v3212 = vadd.f32 0.0, %v3211
        %v3213 = vpop.f32.mrf.mxu0
        %3214 = vdwg.mxu0
        %v3215 = vadd.f32 %v2853, %v3113
        %v3216 = vadd.f32 %v2854, %v3141
        %v3217 = vadd.f32 %v2855, %v3169
        %v3218 = vadd.f32 %v2856, %v3197
        %v3219 = vadd.f32 %v2857, %v3115
        %v3220 = vadd.f32 %v2858, %v3143
        %v3221 = vadd.f32 %v2859, %v3171
        %v3222 = vadd.f32 %v2860, %v3199
        %v3223 = vadd.f32 %v2861, %v3118
        %v3224 = vadd.f32 %v2862, %v3146
        %v3225 = vadd.f32 %v2863, %v3174
        %v3226 = vadd.f32 %v2864, %v3202
        %v3227 = vadd.f32 %v2865, %v3120
        %v3228 = vadd.f32 %v2866, %v3148
        %v3229 = vadd.f32 %v2867, %v3176
        %v3230 = vadd.f32 %v2868, %v3204
        %v3231 = vadd.f32 %v2869, %v3123
        %v3232 = vadd.f32 %v2870, %v3151
        %v3233 = vadd.f32 %v2871, %v3179
        %v3234 = vadd.f32 %v2872, %v3207
        %v3235 = vadd.f32 %v2873, %v3125
        %v3236 = vadd.f32 %v2874, %v3153
        %v3237 = vadd.f32 %v2875, %v3181
        %v3238 = vadd.f32 %v2876, %v3209
        %v3239 = vadd.f32 %v2877, %v3128
        %v3240 = vadd.f32 %v2878, %v3156
        %v3241 = vadd.f32 %v2879, %v3184
        %v3242 = vadd.f32 %v2880, %v3212
        %v3243 = vmax.f32 %v3215, %v3216
        %v3244 = vmax.f32 %v3219, %v3220
        %v3245 = vmax.f32 %v3223, %v3224
        %v3246 = vmax.f32 %v3227, %v3228
        %v3247 = vmax.f32 %v3231, %v3232
        %v3248 = vmax.f32 %v3235, %v3236
        %v3249 = vmax.f32 %v3239, %v3240
        %v3250 = vmax.f32 %v3217, %v3218
        %v3251 = vmax.f32 %v3221, %v3222
        %v3252 = vmax.f32 %v3225, %v3226
        %v3253 = vmax.f32 %v3229, %v3230
        %v3254 = vmax.f32 %v3233, %v3234
        %v3255 = vmax.f32 %v3237, %v3238
        %v3256 = vmax.f32 %v3241, %v3242
        %v3257 = vmax.f32 %v3243, %v3250
        %v3258 = vmax.f32 %v3244, %v3251
        %v3259 = vmax.f32 %v3245, %v3252
        %v3260 = vmax.f32 %v3246, %v3253
        %v3261 = vmax.f32 %v3247, %v3254
        %v3262 = vmax.f32 %v3248, %v3255
        %v3263 = vmax.f32 %v3249, %v3256
        %v3264 = vld [vmem:[%s4] sm:$0x1]
        %v3266 = vperm.slane %v3264, 0
        %v3268 = vadd.f32 %v3257, %v3266
        %v3269 = vadd.f32 %v3258, %v3266
        %v3270 = vadd.f32 %v3259, %v3266
        %v3271 = vadd.f32 %v3260, %v3266
        %v3272 = vadd.f32 %v3261, %v3266
        %v3273 = vadd.f32 %v3262, %v3266
        %v3274 = vadd.f32 %v3263, %v3266
        %v3275 = vmax.f32 %v3268, 0.0
        %v3276 = vmax.f32 %v3269, 0.0
        %v3277 = vmax.f32 %v3270, 0.0
        %v3278 = vmax.f32 %v3271, 0.0
        %v3279 = vmax.f32 %v3272, 0.0
        %v3280 = vmax.f32 %v3273, 0.0
        %v3281 = vmax.f32 %v3274, 0.0
        %v3282 = vld [vmem:[%s5] sm:$0xff]
        %v3283 = vld [vmem:[%s5 + $0x8] sm:$0xff]
        %v3284 = vld [vmem:[%s5 + $0x10] sm:$0xff]
        %v3285 = vld [vmem:[%s5 + $0x18] sm:$0xff]
        %v3286 = vld [vmem:[%s5 + $0x20] sm:$0xff]
        %v3287 = vld [vmem:[%s5 + $0x28] sm:$0xff]
        %v3288 = vld [vmem:[%s5 + $0x30] sm:$0xff]
        %v3289 = vld [vmem:[%s5 + $0x38] sm:$0xff]
        %v3290 = vld [vmem:[%s5 + $0x40] sm:$0xff]
        %v3291 = vld [vmem:[%s5 + $0x48] sm:$0xff]
        %v3292 = vld [vmem:[%s5 + $0x50] sm:$0xff]
        %v3293 = vld [vmem:[%s5 + $0x58] sm:$0xff]
        %v3294 = vld [vmem:[%s5 + $0x60] sm:$0xff]
        %v3295 = vld [vmem:[%s5 + $0x68] sm:$0xff]
        %v3296 = vld [vmem:[%s5 + $0x70] sm:$0xff]
        %v3297 = vld [vmem:[%s5 + $0x78] sm:$0xff]
        %s3298 = scalar_lea.vmem %s5, 128
        %v3299 = vld [vmem:[%s3298] sm:$0xff]
        %v3300 = vld [vmem:[%s3298 + $0x8] sm:$0xff]
        %v3301 = vld [vmem:[%s3298 + $0x10] sm:$0xff]
        %v3302 = vld [vmem:[%s3298 + $0x18] sm:$0xff]
        %v3303 = vld [vmem:[%s3298 + $0x20] sm:$0xff]
        %v3304 = vld [vmem:[%s3298 + $0x28] sm:$0xff]
        %v3305 = vld [vmem:[%s3298 + $0x30] sm:$0xff]
        %v3306 = vld [vmem:[%s3298 + $0x38] sm:$0xff]
        %v3307 = vld [vmem:[%s3298 + $0x40] sm:$0xff]
        %v3308 = vld [vmem:[%s3298 + $0x48] sm:$0xff]
        %v3309 = vld [vmem:[%s3298 + $0x50] sm:$0xff]
        %v3310 = vld [vmem:[%s3298 + $0x58] sm:$0xff]
        %v3311 = vld [vmem:[%s3298 + $0x60] sm:$0xff]
        %v3312 = vld [vmem:[%s3298 + $0x68] sm:$0xff]
        %v3313 = vld [vmem:[%s3298 + $0x70] sm:$0xff]
        %v3314 = vld [vmem:[%s3298 + $0x78] sm:$0xff]
        %3315 = vmatpush.msra.mxu0 %v3314
        %3316 = vmatpush.msra.mxu0 %v3313
        %3317 = vmatpush.msra.mxu0 %v3312
        %3318 = vmatpush.msra.mxu0 %v3311
        %3319 = vmatpush.msra.mxu0 %v3310
        %3320 = vmatpush.msra.mxu0 %v3309
        %3321 = vmatpush.msra.mxu0 %v3308
        %3322 = vmatpush.msra.mxu0 %v3307
        %3323 = vmatpush.msra.mxu0 %v3306
        %3324 = vmatpush.msra.mxu0 %v3305
        %3325 = vmatpush.msra.mxu0 %v3304
        %3326 = vmatpush.msra.mxu0 %v3303
        %3327 = vmatpush.msra.mxu0 %v3302
        %3328 = vmatpush.msra.mxu0 %v3301
        %3329 = vmatpush.msra.mxu0 %v3300
        %3330 = vmatpush.msra.mxu0 %v3299
        %3331 = vmatmul.f32.gmra.mxu0 %v3276
        %v3332 = vpop.f32.mrf.mxu0
        %v3333 = vadd.f32 0.0, %v3332
        %3334 = vdwg.mxu0
        %3335 = vmatpush.msra.mxu0 %v3297
        %3336 = vmatpush.msra.mxu0 %v3296
        %3337 = vmatpush.msra.mxu0 %v3295
        %3338 = vmatpush.msra.mxu0 %v3294
        %3339 = vmatpush.msra.mxu0 %v3293
        %3340 = vmatpush.msra.mxu0 %v3292
        %3341 = vmatpush.msra.mxu0 %v3291
        %3342 = vmatpush.msra.mxu0 %v3290
        %3343 = vmatpush.msra.mxu0 %v3289
        %3344 = vmatpush.msra.mxu0 %v3288
        %3345 = vmatpush.msra.mxu0 %v3287
        %3346 = vmatpush.msra.mxu0 %v3286
        %3347 = vmatpush.msra.mxu0 %v3285
        %3348 = vmatpush.msra.mxu0 %v3284
        %3349 = vmatpush.msra.mxu0 %v3283
        %3350 = vmatpush.msra.mxu0 %v3282
        %3351 = vmatmul.f32.gmra.mxu0 %v3275
        %v3352 = vpop.f32.mrf.mxu0
        %v3353 = vadd.f32 %v3333, %v3352
        %3354 = vdwg.mxu0
        %s3355 = scalar_lea.vmem %s5, 256
        %v3356 = vld [vmem:[%s3355] sm:$0xff]
        %v3357 = vld [vmem:[%s3355 + $0x8] sm:$0xff]
        %v3358 = vld [vmem:[%s3355 + $0x10] sm:$0xff]
        %v3359 = vld [vmem:[%s3355 + $0x18] sm:$0xff]
        %v3360 = vld [vmem:[%s3355 + $0x20] sm:$0xff]
        %v3361 = vld [vmem:[%s3355 + $0x28] sm:$0xff]
        %v3362 = vld [vmem:[%s3355 + $0x30] sm:$0xff]
        %v3363 = vld [vmem:[%s3355 + $0x38] sm:$0xff]
        %v3364 = vld [vmem:[%s3355 + $0x40] sm:$0xff]
        %v3365 = vld [vmem:[%s3355 + $0x48] sm:$0xff]
        %v3366 = vld [vmem:[%s3355 + $0x50] sm:$0xff]
        %v3367 = vld [vmem:[%s3355 + $0x58] sm:$0xff]
        %v3368 = vld [vmem:[%s3355 + $0x60] sm:$0xff]
        %v3369 = vld [vmem:[%s3355 + $0x68] sm:$0xff]
        %v3370 = vld [vmem:[%s3355 + $0x70] sm:$0xff]
        %v3371 = vld [vmem:[%s3355 + $0x78] sm:$0xff]
        %3372 = vmatpush.msra.mxu0 %v3371
        %3373 = vmatpush.msra.mxu0 %v3370
        %3374 = vmatpush.msra.mxu0 %v3369
        %3375 = vmatpush.msra.mxu0 %v3368
        %3376 = vmatpush.msra.mxu0 %v3367
        %3377 = vmatpush.msra.mxu0 %v3366
        %3378 = vmatpush.msra.mxu0 %v3365
        %3379 = vmatpush.msra.mxu0 %v3364
        %3380 = vmatpush.msra.mxu0 %v3363
        %3381 = vmatpush.msra.mxu0 %v3362
        %3382 = vmatpush.msra.mxu0 %v3361
        %3383 = vmatpush.msra.mxu0 %v3360
        %3384 = vmatpush.msra.mxu0 %v3359
        %3385 = vmatpush.msra.mxu0 %v3358
        %3386 = vmatpush.msra.mxu0 %v3357
        %3387 = vmatpush.msra.mxu0 %v3356
        %3388 = vmatmul.f32.gmra.mxu0 %v3277
        %v3389 = vpop.f32.mrf.mxu0
        %v3390 = vadd.f32 0.0, %v3389
        %3391 = vdwg.mxu0
        %v3392 = vadd.f32 %v3353, %v3390
        %s3393 = scalar_lea.vmem %s5, 384
        %v3394 = vld [vmem:[%s3393] sm:$0xff]
        %v3395 = vld [vmem:[%s3393 + $0x8] sm:$0xff]
        %v3396 = vld [vmem:[%s3393 + $0x10] sm:$0xff]
        %v3397 = vld [vmem:[%s3393 + $0x18] sm:$0xff]
        %v3398 = vld [vmem:[%s3393 + $0x20] sm:$0xff]
        %v3399 = vld [vmem:[%s3393 + $0x28] sm:$0xff]
        %v3400 = vld [vmem:[%s3393 + $0x30] sm:$0xff]
        %v3401 = vld [vmem:[%s3393 + $0x38] sm:$0xff]
        %v3402 = vld [vmem:[%s3393 + $0x40] sm:$0xff]
        %v3403 = vld [vmem:[%s3393 + $0x48] sm:$0xff]
        %v3404 = vld [vmem:[%s3393 + $0x50] sm:$0xff]
        %v3405 = vld [vmem:[%s3393 + $0x58] sm:$0xff]
        %v3406 = vld [vmem:[%s3393 + $0x60] sm:$0xff]
        %v3407 = vld [vmem:[%s3393 + $0x68] sm:$0xff]
        %v3408 = vld [vmem:[%s3393 + $0x70] sm:$0xff]
        %v3409 = vld [vmem:[%s3393 + $0x78] sm:$0xff]
        %3410 = vmatpush.msra.mxu0 %v3409
        %3411 = vmatpush.msra.mxu0 %v3408
        %3412 = vmatpush.msra.mxu0 %v3407
        %3413 = vmatpush.msra.mxu0 %v3406
        %3414 = vmatpush.msra.mxu0 %v3405
        %3415 = vmatpush.msra.mxu0 %v3404
        %3416 = vmatpush.msra.mxu0 %v3403
        %3417 = vmatpush.msra.mxu0 %v3402
        %3418 = vmatpush.msra.mxu0 %v3401
        %3419 = vmatpush.msra.mxu0 %v3400
        %3420 = vmatpush.msra.mxu0 %v3399
        %3421 = vmatpush.msra.mxu0 %v3398
        %3422 = vmatpush.msra.mxu0 %v3397
        %3423 = vmatpush.msra.mxu0 %v3396
        %3424 = vmatpush.msra.mxu0 %v3395
        %3425 = vmatpush.msra.mxu0 %v3394
        %3426 = vmatmul.f32.gmra.mxu0 %v3278
        %v3427 = vpop.f32.mrf.mxu0
        %v3428 = vadd.f32 0.0, %v3427
        %3429 = vdwg.mxu0
        %v3430 = vadd.f32 %v3392, %v3428
        %s3431 = scalar_lea.vmem %s5, 512
        %v3432 = vld [vmem:[%s3431] sm:$0xff]
        %v3433 = vld [vmem:[%s3431 + $0x8] sm:$0xff]
        %v3434 = vld [vmem:[%s3431 + $0x10] sm:$0xff]
        %v3435 = vld [vmem:[%s3431 + $0x18] sm:$0xff]
        %v3436 = vld [vmem:[%s3431 + $0x20] sm:$0xff]
        %v3437 = vld [vmem:[%s3431 + $0x28] sm:$0xff]
        %v3438 = vld [vmem:[%s3431 + $0x30] sm:$0xff]
        %v3439 = vld [vmem:[%s3431 + $0x38] sm:$0xff]
        %v3440 = vld [vmem:[%s3431 + $0x40] sm:$0xff]
        %v3441 = vld [vmem:[%s3431 + $0x48] sm:$0xff]
        %v3442 = vld [vmem:[%s3431 + $0x50] sm:$0xff]
        %v3443 = vld [vmem:[%s3431 + $0x58] sm:$0xff]
        %v3444 = vld [vmem:[%s3431 + $0x60] sm:$0xff]
        %v3445 = vld [vmem:[%s3431 + $0x68] sm:$0xff]
        %v3446 = vld [vmem:[%s3431 + $0x70] sm:$0xff]
        %v3447 = vld [vmem:[%s3431 + $0x78] sm:$0xff]
        %3448 = vmatpush.msra.mxu0 %v3447
        %3449 = vmatpush.msra.mxu0 %v3446
        %3450 = vmatpush.msra.mxu0 %v3445
        %3451 = vmatpush.msra.mxu0 %v3444
        %3452 = vmatpush.msra.mxu0 %v3443
        %3453 = vmatpush.msra.mxu0 %v3442
        %3454 = vmatpush.msra.mxu0 %v3441
        %3455 = vmatpush.msra.mxu0 %v3440
        %3456 = vmatpush.msra.mxu0 %v3439
        %3457 = vmatpush.msra.mxu0 %v3438
        %3458 = vmatpush.msra.mxu0 %v3437
        %3459 = vmatpush.msra.mxu0 %v3436
        %3460 = vmatpush.msra.mxu0 %v3435
        %3461 = vmatpush.msra.mxu0 %v3434
        %3462 = vmatpush.msra.mxu0 %v3433
        %3463 = vmatpush.msra.mxu0 %v3432
        %3464 = vmatmul.f32.gmra.mxu0 %v3279
        %v3465 = vpop.f32.mrf.mxu0
        %v3466 = vadd.f32 0.0, %v3465
        %3467 = vdwg.mxu0
        %v3468 = vadd.f32 %v3430, %v3466
        %s3469 = scalar_lea.vmem %s5, 640
        %v3470 = vld [vmem:[%s3469] sm:$0xff]
        %v3471 = vld [vmem:[%s3469 + $0x8] sm:$0xff]
        %v3472 = vld [vmem:[%s3469 + $0x10] sm:$0xff]
        %v3473 = vld [vmem:[%s3469 + $0x18] sm:$0xff]
        %v3474 = vld [vmem:[%s3469 + $0x20] sm:$0xff]
        %v3475 = vld [vmem:[%s3469 + $0x28] sm:$0xff]
        %v3476 = vld [vmem:[%s3469 + $0x30] sm:$0xff]
        %v3477 = vld [vmem:[%s3469 + $0x38] sm:$0xff]
        %v3478 = vld [vmem:[%s3469 + $0x40] sm:$0xff]
        %v3479 = vld [vmem:[%s3469 + $0x48] sm:$0xff]
        %v3480 = vld [vmem:[%s3469 + $0x50] sm:$0xff]
        %v3481 = vld [vmem:[%s3469 + $0x58] sm:$0xff]
        %v3482 = vld [vmem:[%s3469 + $0x60] sm:$0xff]
        %v3483 = vld [vmem:[%s3469 + $0x68] sm:$0xff]
        %v3484 = vld [vmem:[%s3469 + $0x70] sm:$0xff]
        %v3485 = vld [vmem:[%s3469 + $0x78] sm:$0xff]
        %3486 = vmatpush.msra.mxu0 %v3485
        %3487 = vmatpush.msra.mxu0 %v3484
        %3488 = vmatpush.msra.mxu0 %v3483
        %3489 = vmatpush.msra.mxu0 %v3482
        %3490 = vmatpush.msra.mxu0 %v3481
        %3491 = vmatpush.msra.mxu0 %v3480
        %3492 = vmatpush.msra.mxu0 %v3479
        %3493 = vmatpush.msra.mxu0 %v3478
        %3494 = vmatpush.msra.mxu0 %v3477
        %3495 = vmatpush.msra.mxu0 %v3476
        %3496 = vmatpush.msra.mxu0 %v3475
        %3497 = vmatpush.msra.mxu0 %v3474
        %3498 = vmatpush.msra.mxu0 %v3473
        %3499 = vmatpush.msra.mxu0 %v3472
        %3500 = vmatpush.msra.mxu0 %v3471
        %3501 = vmatpush.msra.mxu0 %v3470
        %3502 = vmatmul.f32.gmra.mxu0 %v3280
        %v3503 = vpop.f32.mrf.mxu0
        %v3504 = vadd.f32 0.0, %v3503
        %3505 = vdwg.mxu0
        %v3506 = vadd.f32 %v3468, %v3504
        %s3507 = scalar_lea.vmem %s5, 768
        %v3508 = vld [vmem:[%s3507] sm:$0xff]
        %v3509 = vld [vmem:[%s3507 + $0x8] sm:$0xff]
        %v3510 = vld [vmem:[%s3507 + $0x10] sm:$0xff]
        %v3511 = vld [vmem:[%s3507 + $0x18] sm:$0xff]
        %v3512 = vld [vmem:[%s3507 + $0x20] sm:$0xff]
        %v3513 = vld [vmem:[%s3507 + $0x28] sm:$0xff]
        %v3514 = vld [vmem:[%s3507 + $0x30] sm:$0xff]
        %v3515 = vld [vmem:[%s3507 + $0x38] sm:$0xff]
        %v3516 = vld [vmem:[%s3507 + $0x40] sm:$0xff]
        %v3517 = vld [vmem:[%s3507 + $0x48] sm:$0xff]
        %v3518 = vld [vmem:[%s3507 + $0x50] sm:$0xff]
        %v3519 = vld [vmem:[%s3507 + $0x58] sm:$0xff]
        %v3520 = vld [vmem:[%s3507 + $0x60] sm:$0xff]
        %v3521 = vld [vmem:[%s3507 + $0x68] sm:$0xff]
        %v3522 = vld [vmem:[%s3507 + $0x70] sm:$0xff]
        %v3523 = vld [vmem:[%s3507 + $0x78] sm:$0xff]
        %3524 = vmatpush.msra.mxu0 %v3523
        %3525 = vmatpush.msra.mxu0 %v3522
        %3526 = vmatpush.msra.mxu0 %v3521
        %3527 = vmatpush.msra.mxu0 %v3520
        %3528 = vmatpush.msra.mxu0 %v3519
        %3529 = vmatpush.msra.mxu0 %v3518
        %3530 = vmatpush.msra.mxu0 %v3517
        %3531 = vmatpush.msra.mxu0 %v3516
        %3532 = vmatpush.msra.mxu0 %v3515
        %3533 = vmatpush.msra.mxu0 %v3514
        %3534 = vmatpush.msra.mxu0 %v3513
        %3535 = vmatpush.msra.mxu0 %v3512
        %3536 = vmatpush.msra.mxu0 %v3511
        %3537 = vmatpush.msra.mxu0 %v3510
        %3538 = vmatpush.msra.mxu0 %v3509
        %3539 = vmatpush.msra.mxu0 %v3508
        %3540 = vmatmul.f32.gmra.mxu0 %v3281
        %v3541 = vpop.f32.mrf.mxu0
        %v3542 = vadd.f32 0.0, %v3541
        %3543 = vdwg.mxu0
        %v3544 = vadd.f32 %v3506, %v3542
        %v3545 = vld [vmem:[%s6] sm:$0x1]
        %v3547 = vperm.slane %v3545, 0
        %v3549 = vadd.f32 %v3544, %v3547
        %3550 = vst [vmem:[%s274] sm:$0xff] %v3549
        %s3551 = sand.u32 %s181, 1
        %s3552 = scalar_lea.sflag [#allocation5], %s3551
        %s3553 = sand.u32 %s181, 1
        %s3554 = smul.addr %s3553, 8
        %s3555 = scalar_lea.vmem [#allocation4], %s3554
        // Predicated region
        $region49: #{my_cnn_forward.1} parent=47 // pred_check
          %p3556 = pneg %p191
        $region50: #{my_cnn_forward.1} parent=47 // pred_check_branch
          %3558 = sbr.rel (%p3556) target = $region52
        $region51: #{my_cnn_forward.1} parent=47 // pred_region
          %3560 = vsyncadd %s3552, 0
          %s3561 = smul.addr %s21, 8
          %s3562 = scalar_lea.hbm %s7, %s3561
          %s3564 = sshll.u32 %s3555, 4
          %s3565 = int_to_ptr.vmem [resolvable:$true] %s3564
          %s3566 = sshll.u32 %s3562, 4
          %s3567 = int_to_ptr.hbm [resolvable:$true] %s3566
          %3569 = dma.vmem_to_hbm [thread:$0]  %s3565, 128, %s3567, %s3552
        $region52: #{my_cnn_forward.1} parent=47 // pred_fallthru
          _
      $region48: #{my_cnn_forward.1} parent=5 // pred_fallthru
        _
      %p3570 = scmp.le.s32.totalorder 2, %s16
      // Predicated region
      $region53: #{my_cnn_forward.1} parent=5 // pred_check
        %p3571 = pneg %p3570
      $region54: #{my_cnn_forward.1} parent=5 // pred_check_branch
        %3573 = sbr.rel (%p3571) target = $region56
      $region55: #{my_cnn_forward.1} parent=5 // pred_region
        %s3574 = ssub.s32 %s16, 2
        // Predicated region
        $region57: #{my_cnn_forward.1} parent=55 // pred_check
          %p3575 = pneg %p197
        $region58: #{my_cnn_forward.1} parent=55 // pred_check_branch
          %3577 = sbr.rel (%p3575) target = $region60
        $region59: #{my_cnn_forward.1} parent=55 // pred_region
          %s3578 = sand.u32 %s182, 1
          %s3579 = scalar_lea.sflag [#allocation5], %s3578
          %s3580 = sand.u32 %s182, 1
          %s3581 = smul.addr %s3580, 8
          %s3582 = scalar_lea.vmem [#allocation4], %s3581
          %3584 = dma.done %s3579, 128
        $region60: #{my_cnn_forward.1} parent=55 // pred_fallthru
          _
      $region56: #{my_cnn_forward.1} parent=5 // pred_fallthru
        _
    $region6: #{my_cnn_forward.1} parent=1 // loop_footer
      %s20 = sadd.s32 1, %s16
    $region7: #{my_cnn_forward.1} parent=1 // loop_footer_branch
      %15 = sbr.rel target = $region3
    $region8: #{my_cnn_forward.1} parent=1 // loop_exit
      _
    %3585 = vsyncpa [#allocation5], 1
    %s3586 = scalar_lea.sflag [#allocation5], 1
    %3587 = vsyncpa %s3586, 1

</llo_original>
